<compile_context>
chip_gen: v6e
topology: v6e:2x2x1
jax: 0.10.0
libtpu: 0.0.40
codegen_flags: <defaults>
</compile_context>

<pallas_src>
import jax
import jax.numpy as jnp
import numpy as np
from jax.experimental import pallas as pl
from jax.experimental.pallas import tpu as pltpu


# ----------------------------------------------------------------------------
# Pallas kernel: the whole SamplerGNN forward for a batch of observations.
# ----------------------------------------------------------------------------
def _sampler_gnn_kernel(
        obs_ref, obs_col_ref, x_base_ref, a_kron_ref, sel_ref,
        wg0_ref, bg0_ref, wg1_ref, bg1_ref, wg2_ref, bg2_ref, wg3_ref, bg3_ref,
        wam_ref, waa_ref, bagg_ref,
        wh1f_ref, wh1o_ref, bh1_ref, wh2_ref, bh2_ref, wout_ref, bout_ref,
        probs_ref):
    """Fused forward: obs-embed -> 4x GCNConv -> pooling -> hybrid policy MLP.

    Node features stay batch-flattened as (N*B, F) rows (row = node*B + batch),
    so every op below is a plain 2-D MXU matmul or a VPU elementwise op.
    """
    f32 = jnp.float32
    n_nodes = a_kron_ref.shape[0] // sel_ref.shape[0]     # static
    f0 = x_base_ref.shape[1]

    obs_col = obs_col_ref[...]                            # (N*B, 1) agent indicator
    # obs -> node embedding: static per-node features + agent indicator written
    # into feature channel 0 of the node each env's agent occupies.
    chan0 = (jax.lax.broadcasted_iota(jnp.int32, (1, f0), 1) == 0).astype(f32)
    x = x_base_ref[...] + obs_col * chan0                 # (N*B, F0)

    # 4 GCNConv layers: x <- A_hat (x W_l) + b_l.  A_hat ⊗ I_B is precomputed so
    # the node-mixing propagation is a single 2-D matmul for the whole batch.
    a_kron = a_kron_ref[...]
    for w_ref, b_ref in ((wg0_ref, bg0_ref), (wg1_ref, bg1_ref),
                         (wg2_ref, bg2_ref), (wg3_ref, bg3_ref)):
        xw = jnp.dot(x, w_ref[...], preferred_element_type=f32)
        x = jnp.dot(a_kron, xw, preferred_element_type=f32) + b_ref[...]

    # GeneralGNNPooling stand-in: [mean over nodes ; features at the agent node]
    # -> Linear -> ReLU.  Both pools are MXU matmuls against a precomputed batch
    # selector (no cross-lane reductions).
    sel = sel_ref[...]                                    # (B, N*B)
    mean_feat = jnp.dot(sel, x, preferred_element_type=f32) * (1.0 / n_nodes)
    agent_feat = jnp.dot(sel, obs_col * x, preferred_element_type=f32)
    feat = (jnp.dot(mean_feat, wam_ref[...], preferred_element_type=f32)
            + jnp.dot(agent_feat, waa_ref[...], preferred_element_type=f32)
            + bagg_ref[...])
    feat = jnp.maximum(feat, 0.0)                         # (B, AGG_OUT)

    # Hybrid policy head: hiddens(cat([features, obs])) -> logits.  The concat
    # is folded into split weight matrices (two matmuls) to stay lane friendly.
    obs = obs_ref[...]                                    # (B, N)
    h = (jnp.dot(feat, wh1f_ref[...], preferred_element_type=f32)
         + jnp.dot(obs, wh1o_ref[...], preferred_element_type=f32)
         + bh1_ref[...])
    h = jnp.maximum(h, 0.0)
    h = jnp.dot(h, wh2_ref[...], preferred_element_type=f32) + bh2_ref[...]
    h = jnp.maximum(h, 0.0)
    probs_ref[...] = (jnp.dot(h, wout_ref[...], preferred_element_type=f32)
                      + bout_ref[...])


# ----------------------------------------------------------------------------
# Jitted wrapper: only layout plumbing (transpose / weight splits) lives here;
# all FLOPs run inside the single pallas_call.
# ----------------------------------------------------------------------------
@jax.jit
def _sampler_gnn_forward(obs, consts, params):
    obs = obs.astype(jnp.float32)
    B, N = obs.shape
    obs_col = obs.T.reshape(N * B, 1)                      # row = node*B + batch

    (wg0, bg0), (wg1, bg1), (wg2, bg2), (wg3, bg3) = params["gcn"]
    h = wg0.shape[1]                                       # GCN hidden dim
    agg_out = params["b_agg"].shape[0]
    w_agg, w_h1 = params["w_agg"], params["w_h1"]
    out_dim = params["w_out"].shape[1]

    args = (
        obs, obs_col, consts["x_base"], consts["a_kron"], consts["sel"],
        wg0, bg0.reshape(1, -1), wg1, bg1.reshape(1, -1),
        wg2, bg2.reshape(1, -1), wg3, bg3.reshape(1, -1),
        w_agg[:h], w_agg[h:], params["b_agg"].reshape(1, -1),
        w_h1[:agg_out], w_h1[agg_out:], params["b_h1"].reshape(1, -1),
        params["w_h2"], params["b_h2"].reshape(1, -1),
        params["w_out"], params["b_out"].reshape(1, -1),
    )
    return pl.pallas_call(
        _sampler_gnn_kernel,
        out_shape=jax.ShapeDtypeStruct((B, out_dim), jnp.float32),
        in_specs=[pl.BlockSpec(memory_space=pltpu.MemorySpace.VMEM)] * len(args),
        out_specs=pl.BlockSpec(memory_space=pltpu.MemorySpace.VMEM),
    )(*args)


# ----------------------------------------------------------------------------
# Module replica: parameter / graph setup in JAX, all compute in the kernel.
# ----------------------------------------------------------------------------
class SamplerGNNPallas:
    GAT_LAYERS = 4
    HIDDEN_DIM = 4
    N_HEADS = 1            # conv_type == 'gcn'
    AGG_OUT = 15           # GeneralGNNPooling output_dim in the reference

    def __init__(self, num_outputs, hidden_size, edges, node_xy,
                 node_embed_size, batch_size, key):
        self.num_outputs = num_outputs
        self.hidden_size = hidden_size
        self.batch_size = batch_size
        self.node_embed_size = node_embed_size
        n = node_xy.shape[0]
        self.n_nodes = n

        # GCNConv normalization:  A_hat = D^-1/2 (A + I) D^-1/2  (dense, built once)
        adj = jnp.zeros((n, n), jnp.float32)
        adj = adj.at[edges[:, 0], edges[:, 1]].set(1.0)
        adj = adj.at[edges[:, 1], edges[:, 0]].set(1.0)
        adj = adj + jnp.eye(n, dtype=jnp.float32)
        dinv = 1.0 / jnp.sqrt(jnp.sum(adj, axis=1))
        self.a_hat = adj * dinv[:, None] * dinv[None, :]

        # Static node embedding (stand-in for utils.efficient_embed_obs_in_map):
        # channel 0 is reserved for the agent indicator; 1,2 hold (x, y); 3 is 1.
        base = jnp.zeros((n, node_embed_size), jnp.float32)
        base = base.at[:, 1].set(node_xy[:, 0])
        base = base.at[:, 2].set(node_xy[:, 1])
        base = base.at[:, 3].set(1.0)
        self.node_base = base

        # Batch-flattened constants for the kernel (row index = node*B + batch).
        B = batch_size
        self.consts = {
            "a_kron": jnp.kron(self.a_hat, jnp.eye(B, dtype=jnp.float32)),  # (N*B, N*B)
            "x_base": jnp.repeat(base, B, axis=0),                          # (N*B, F0)
            "sel":    jnp.tile(jnp.eye(B, dtype=jnp.float32), (1, n)),      # (B, N*B)
        }

        kf, kb, kl = jax.random.split(key, 3)
        self.params = self._init_params(kf, num_outputs)             # forward head
        self.params_backward = self._init_params(kb, num_outputs)    # backward head
        self.params_flow = self._init_params(kl, 1)                  # flow head
        self.logZ = jnp.ones((1,), jnp.float32)

    def _init_params(self, key, num_out):
        E, H, Hd, N = (self.node_embed_size, self.HIDDEN_DIM * self.N_HEADS,
                       self.hidden_size, self.n_nodes)
        ks = jax.random.split(key, 16)
        lin = lambda k, i, o: jax.random.normal(k, (i, o), jnp.float32) * 0.3
        vec = lambda k, o: jax.random.normal(k, (o,), jnp.float32) * 0.3
        gcn = []
        for l in range(self.GAT_LAYERS):
            fi = E if l == 0 else H
            gcn.append((lin(ks[2 * l], fi, H), vec(ks[2 * l + 1], H)))
        return {
            "gcn": gcn,
            "w_agg": lin(ks[8], 2 * H, self.AGG_OUT), "b_agg": vec(ks[9], self.AGG_OUT),
            "w_h1": lin(ks[10], self.AGG_OUT + N, Hd), "b_h1": vec(ks[11], Hd),
            "w_h2": lin(ks[12], Hd, Hd), "b_h2": vec(ks[13], Hd),
            "w_out": lin(ks[14], Hd, num_out), "b_out": vec(ks[15], num_out),
        }

    def forward_batch(self, obs):
        return _sampler_gnn_forward(obs, self.consts, self.params)

    def forward(self, obs):            # parity with torch forward(): probs[0]
        return self.forward_batch(obs)[0]

    def backward(self, obs):           # same fused kernel, backward head weights
        return _sampler_gnn_forward(obs, self.consts, self.params_backward)[0]

    def flow(self, obs):               # same fused kernel, flow head (dim 1), .log()
        return jnp.log(_sampler_gnn_forward(obs, self.consts, self.params_flow))


# ----------------------------------------------------------------------------
# Pure-JAX reference (natural (B, N, F) layout) for the correctness check.
# ----------------------------------------------------------------------------
def _reference_forward(obs, a_hat, node_base, p):
    hi = jax.lax.Precision.HIGHEST
    obs = obs.astype(jnp.float32)
    B, N = obs.shape
    F0 = node_base.shape[1]
    x = jnp.broadcast_to(node_base[None], (B, N, F0))
    x = x + obs[:, :, None] * (jnp.arange(F0) == 0).astype(jnp.float32)
    for w, b in p["gcn"]:
        xw = jnp.einsum("bnf,fh->bnh", x, w, precision=hi)
        x = jnp.einsum("nm,bmh->bnh", a_hat, xw, precision=hi) + b
    mean_feat = jnp.mean(x, axis=1)
    agent_feat = jnp.einsum("bn,bnh->bh", obs, x, precision=hi)
    pooled = jnp.concatenate([mean_feat, agent_feat], axis=-1)
    feat = jnp.maximum(jnp.dot(pooled, p["w_agg"], precision=hi) + p["b_agg"], 0.0)
    h = jnp.concatenate([feat, obs], axis=-1)
    h = jnp.maximum(jnp.dot(h, p["w_h1"], precision=hi) + p["b_h1"], 0.0)
    h = jnp.maximum(jnp.dot(h, p["w_h2"], precision=hi) + p["b_h2"], 0.0)
    return jnp.dot(h, p["w_out"], precision=hi) + p["b_out"]


if __name__ == "__main__":
    key = jax.random.PRNGKey(0)

    num_nodes = 27          # graph size
    node_embed = 8          # NODE_EMBED_SIZE stand-in
    hidden_size = 32        # policy-MLP hidden width
    num_outputs = 15        # action logits
    batch = 8               # parallel observations (fills the sublane dim)

    # Deterministic graph (stand-in for map.g_acs adjacency): ring + skip-3 chords.
    idx = np.arange(num_nodes)
    edges = np.concatenate([np.stack([idx, (idx + 1) % num_nodes], 1),
                            np.stack([idx, (idx + 3) % num_nodes], 1)], 0)
    edges = jnp.asarray(edges, jnp.int32)
    node_xy = jnp.stack([jnp.asarray(idx % 5, jnp.float32) / 5.0,
                         jnp.asarray(idx // 5, jnp.float32) / 5.0], axis=-1)

    model = SamplerGNNPallas(num_outputs, hidden_size, edges, node_xy,
                             node_embed, batch, key)

    # Deterministic one-hot observations: agent location per environment.
    locs = jax.random.randint(jax.random.PRNGKey(1), (batch,), 0, num_nodes)
    obs = jax.nn.one_hot(locs, num_nodes, dtype=jnp.float32)

    # Fused Pallas forward vs pure-JAX reference.
    probs = jax.block_until_ready(model.forward_batch(obs))
    ref = _reference_forward(obs, model.a_hat, model.node_base, model.params)
    np.testing.assert_allclose(np.asarray(probs), np.asarray(ref),
                               rtol=1e-4, atol=1e-4)
    assert probs.shape == (batch, num_outputs)

    # torch-API parity: forward returns probs[0]; backward / flow reuse the kernel.
    p0 = jax.block_until_ready(model.forward(obs))
    np.testing.assert_allclose(np.asarray(p0), np.asarray(ref[0]),
                               rtol=1e-4, atol=1e-4)
    pb = jax.block_until_ready(model.backward(obs))
    assert pb.shape == (num_outputs,)
    fl = jax.block_until_ready(model.flow(obs))
    assert fl.shape == (batch, 1)

    print("KERNEL_OK")
</pallas_src>

<mosaic_0001>
module attributes {stable_mosaic.version = 11 : i64} {
  func.func @_sampler_gnn_kernel(%arg0: memref<8x27xf32, #tpu.memory_space<vmem>>, %arg1: memref<216x1xf32, #tpu.memory_space<vmem>>, %arg2: memref<216x8xf32, #tpu.memory_space<vmem>>, %arg3: memref<216x216xf32, #tpu.memory_space<vmem>>, %arg4: memref<8x216xf32, #tpu.memory_space<vmem>>, %arg5: memref<8x4xf32, #tpu.memory_space<vmem>>, %arg6: memref<1x4xf32, #tpu.memory_space<vmem>>, %arg7: memref<4x4xf32, #tpu.memory_space<vmem>>, %arg8: memref<1x4xf32, #tpu.memory_space<vmem>>, %arg9: memref<4x4xf32, #tpu.memory_space<vmem>>, %arg10: memref<1x4xf32, #tpu.memory_space<vmem>>, %arg11: memref<4x4xf32, #tpu.memory_space<vmem>>, %arg12: memref<1x4xf32, #tpu.memory_space<vmem>>, %arg13: memref<4x15xf32, #tpu.memory_space<vmem>>, %arg14: memref<4x15xf32, #tpu.memory_space<vmem>>, %arg15: memref<1x15xf32, #tpu.memory_space<vmem>>, %arg16: memref<15x32xf32, #tpu.memory_space<vmem>>, %arg17: memref<27x32xf32, #tpu.memory_space<vmem>>, %arg18: memref<1x32xf32, #tpu.memory_space<vmem>>, %arg19: memref<32x32xf32, #tpu.memory_space<vmem>>, %arg20: memref<1x32xf32, #tpu.memory_space<vmem>>, %arg21: memref<32x15xf32, #tpu.memory_space<vmem>>, %arg22: memref<1x15xf32, #tpu.memory_space<vmem>>, %arg23: memref<8x15xf32, #tpu.memory_space<vmem>>) attributes {dimension_semantics = [], scalar_prefetch = 0 : i64, scratch_operands = 0 : i64, tpu.core_type = #tpu.core_type<tc>} {
    %c0 = arith.constant 0 : index
    %c0_0 = arith.constant 0 : index
    %0 = vector.load %arg1[%c0, %c0_0] : memref<216x1xf32, #tpu.memory_space<vmem>>, vector<216x1xf32>
    %1 = tpu.iota {dimensions = array<i32: 1>} : vector<1x8xi32>
    %c0_i32 = arith.constant 0 : i32
    %2 = vector.broadcast %c0_i32 : i32 to vector<1x8xi32>
    %3 = arith.cmpi eq, %1, %2 : vector<1x8xi32>
    %4 = arith.extui %3 : vector<1x8xi1> to vector<1x8xi32>
    %5 = arith.sitofp %4 : vector<1x8xi32> to vector<1x8xf32>
    %c0_1 = arith.constant 0 : index
    %c0_2 = arith.constant 0 : index
    %6 = vector.load %arg2[%c0_1, %c0_2] : memref<216x8xf32, #tpu.memory_space<vmem>>, vector<216x8xf32>
    %7 = vector.broadcast %0 : vector<216x1xf32> to vector<216x8xf32>
    %8 = vector.broadcast %5 : vector<1x8xf32> to vector<216x8xf32>
    %9 = arith.mulf %7, %8 : vector<216x8xf32>
    %10 = arith.addf %6, %9 : vector<216x8xf32>
    %c0_3 = arith.constant 0 : index
    %c0_4 = arith.constant 0 : index
    %11 = vector.load %arg3[%c0_3, %c0_4] : memref<216x216xf32, #tpu.memory_space<vmem>>, vector<216x216xf32>
    %c0_5 = arith.constant 0 : index
    %c0_6 = arith.constant 0 : index
    %12 = vector.load %arg5[%c0_5, %c0_6] : memref<8x4xf32, #tpu.memory_space<vmem>>, vector<8x4xf32>
    %cst = arith.constant dense<0.000000e+00> : vector<216x4xf32>
    %13 = tpu.matmul %10, %12, %cst {dimension_numbers = #tpu.dot_dimension_numbers<[1], [0], [0], [1], [0, 0, 1, 1], [], []>} : vector<216x8xf32>, vector<8x4xf32>, vector<216x4xf32> -> vector<216x4xf32>
    %cst_7 = arith.constant dense<0.000000e+00> : vector<216x4xf32>
    %14 = tpu.matmul %11, %13, %cst_7 {dimension_numbers = #tpu.dot_dimension_numbers<[1], [0], [0], [1], [0, 0, 1, 1], [], []>} : vector<216x216xf32>, vector<216x4xf32>, vector<216x4xf32> -> vector<216x4xf32>
    %c0_8 = arith.constant 0 : index
    %c0_9 = arith.constant 0 : index
    %15 = vector.load %arg6[%c0_8, %c0_9] : memref<1x4xf32, #tpu.memory_space<vmem>>, vector<1x4xf32>
    %16 = vector.broadcast %15 : vector<1x4xf32> to vector<216x4xf32>
    %17 = arith.addf %14, %16 : vector<216x4xf32>
    %c0_10 = arith.constant 0 : index
    %c0_11 = arith.constant 0 : index
    %18 = vector.load %arg7[%c0_10, %c0_11] : memref<4x4xf32, #tpu.memory_space<vmem>>, vector<4x4xf32>
    %cst_12 = arith.constant dense<0.000000e+00> : vector<216x4xf32>
    %19 = tpu.matmul %17, %18, %cst_12 {dimension_numbers = #tpu.dot_dimension_numbers<[1], [0], [0], [1], [0, 0, 1, 1], [], []>} : vector<216x4xf32>, vector<4x4xf32>, vector<216x4xf32> -> vector<216x4xf32>
    %cst_13 = arith.constant dense<0.000000e+00> : vector<216x4xf32>
    %20 = tpu.matmul %11, %19, %cst_13 {dimension_numbers = #tpu.dot_dimension_numbers<[1], [0], [0], [1], [0, 0, 1, 1], [], []>} : vector<216x216xf32>, vector<216x4xf32>, vector<216x4xf32> -> vector<216x4xf32>
    %c0_14 = arith.constant 0 : index
    %c0_15 = arith.constant 0 : index
    %21 = vector.load %arg8[%c0_14, %c0_15] : memref<1x4xf32, #tpu.memory_space<vmem>>, vector<1x4xf32>
    %22 = vector.broadcast %21 : vector<1x4xf32> to vector<216x4xf32>
    %23 = arith.addf %20, %22 : vector<216x4xf32>
    %c0_16 = arith.constant 0 : index
    %c0_17 = arith.constant 0 : index
    %24 = vector.load %arg9[%c0_16, %c0_17] : memref<4x4xf32, #tpu.memory_space<vmem>>, vector<4x4xf32>
    %cst_18 = arith.constant dense<0.000000e+00> : vector<216x4xf32>
    %25 = tpu.matmul %23, %24, %cst_18 {dimension_numbers = #tpu.dot_dimension_numbers<[1], [0], [0], [1], [0, 0, 1, 1], [], []>} : vector<216x4xf32>, vector<4x4xf32>, vector<216x4xf32> -> vector<216x4xf32>
    %cst_19 = arith.constant dense<0.000000e+00> : vector<216x4xf32>
    %26 = tpu.matmul %11, %25, %cst_19 {dimension_numbers = #tpu.dot_dimension_numbers<[1], [0], [0], [1], [0, 0, 1, 1], [], []>} : vector<216x216xf32>, vector<216x4xf32>, vector<216x4xf32> -> vector<216x4xf32>
    %c0_20 = arith.constant 0 : index
    %c0_21 = arith.constant 0 : index
    %27 = vector.load %arg10[%c0_20, %c0_21] : memref<1x4xf32, #tpu.memory_space<vmem>>, vector<1x4xf32>
    %28 = vector.broadcast %27 : vector<1x4xf32> to vector<216x4xf32>
    %29 = arith.addf %26, %28 : vector<216x4xf32>
    %c0_22 = arith.constant 0 : index
    %c0_23 = arith.constant 0 : index
    %30 = vector.load %arg11[%c0_22, %c0_23] : memref<4x4xf32, #tpu.memory_space<vmem>>, vector<4x4xf32>
    %cst_24 = arith.constant dense<0.000000e+00> : vector<216x4xf32>
    %31 = tpu.matmul %29, %30, %cst_24 {dimension_numbers = #tpu.dot_dimension_numbers<[1], [0], [0], [1], [0, 0, 1, 1], [], []>} : vector<216x4xf32>, vector<4x4xf32>, vector<216x4xf32> -> vector<216x4xf32>
    %cst_25 = arith.constant dense<0.000000e+00> : vector<216x4xf32>
    %32 = tpu.matmul %11, %31, %cst_25 {dimension_numbers = #tpu.dot_dimension_numbers<[1], [0], [0], [1], [0, 0, 1, 1], [], []>} : vector<216x216xf32>, vector<216x4xf32>, vector<216x4xf32> -> vector<216x4xf32>
    %c0_26 = arith.constant 0 : index
    %c0_27 = arith.constant 0 : index
    %33 = vector.load %arg12[%c0_26, %c0_27] : memref<1x4xf32, #tpu.memory_space<vmem>>, vector<1x4xf32>
    %34 = vector.broadcast %33 : vector<1x4xf32> to vector<216x4xf32>
    %35 = arith.addf %32, %34 : vector<216x4xf32>
    %c0_28 = arith.constant 0 : index
    %c0_29 = arith.constant 0 : index
    %36 = vector.load %arg4[%c0_28, %c0_29] : memref<8x216xf32, #tpu.memory_space<vmem>>, vector<8x216xf32>
    %cst_30 = arith.constant dense<0.000000e+00> : vector<8x4xf32>
    %37 = tpu.matmul %36, %35, %cst_30 {dimension_numbers = #tpu.dot_dimension_numbers<[1], [0], [0], [1], [0, 0, 1, 1], [], []>} : vector<8x216xf32>, vector<216x4xf32>, vector<8x4xf32> -> vector<8x4xf32>
    %cst_31 = arith.constant 0.0370370373 : f32
    %38 = vector.broadcast %cst_31 : f32 to vector<8x4xf32>
    %39 = arith.mulf %37, %38 : vector<8x4xf32>
    %40 = vector.broadcast %0 : vector<216x1xf32> to vector<216x4xf32>
    %41 = arith.mulf %40, %35 : vector<216x4xf32>
    %cst_32 = arith.constant dense<0.000000e+00> : vector<8x4xf32>
    %42 = tpu.matmul %36, %41, %cst_32 {dimension_numbers = #tpu.dot_dimension_numbers<[1], [0], [0], [1], [0, 0, 1, 1], [], []>} : vector<8x216xf32>, vector<216x4xf32>, vector<8x4xf32> -> vector<8x4xf32>
    %c0_33 = arith.constant 0 : index
    %c0_34 = arith.constant 0 : index
    %43 = vector.load %arg13[%c0_33, %c0_34] : memref<4x15xf32, #tpu.memory_space<vmem>>, vector<4x15xf32>
    %cst_35 = arith.constant dense<0.000000e+00> : vector<8x15xf32>
    %44 = tpu.matmul %39, %43, %cst_35 {dimension_numbers = #tpu.dot_dimension_numbers<[1], [0], [0], [1], [0, 0, 1, 1], [], []>} : vector<8x4xf32>, vector<4x15xf32>, vector<8x15xf32> -> vector<8x15xf32>
    %c0_36 = arith.constant 0 : index
    %c0_37 = arith.constant 0 : index
    %45 = vector.load %arg14[%c0_36, %c0_37] : memref<4x15xf32, #tpu.memory_space<vmem>>, vector<4x15xf32>
    %cst_38 = arith.constant dense<0.000000e+00> : vector<8x15xf32>
    %46 = tpu.matmul %42, %45, %cst_38 {dimension_numbers = #tpu.dot_dimension_numbers<[1], [0], [0], [1], [0, 0, 1, 1], [], []>} : vector<8x4xf32>, vector<4x15xf32>, vector<8x15xf32> -> vector<8x15xf32>
    %47 = arith.addf %44, %46 : vector<8x15xf32>
    %c0_39 = arith.constant 0 : index
    %c0_40 = arith.constant 0 : index
    %48 = vector.load %arg15[%c0_39, %c0_40] : memref<1x15xf32, #tpu.memory_space<vmem>>, vector<1x15xf32>
    %49 = vector.broadcast %48 : vector<1x15xf32> to vector<8x15xf32>
    %50 = arith.addf %47, %49 : vector<8x15xf32>
    %cst_41 = arith.constant 0.000000e+00 : f32
    %51 = vector.broadcast %cst_41 : f32 to vector<8x15xf32>
    %52 = arith.maximumf %50, %51 : vector<8x15xf32>
    %c0_42 = arith.constant 0 : index
    %c0_43 = arith.constant 0 : index
    %53 = vector.load %arg0[%c0_42, %c0_43] : memref<8x27xf32, #tpu.memory_space<vmem>>, vector<8x27xf32>
    %c0_44 = arith.constant 0 : index
    %c0_45 = arith.constant 0 : index
    %54 = vector.load %arg16[%c0_44, %c0_45] : memref<15x32xf32, #tpu.memory_space<vmem>>, vector<15x32xf32>
    %cst_46 = arith.constant dense<0.000000e+00> : vector<8x32xf32>
    %55 = tpu.matmul %52, %54, %cst_46 {dimension_numbers = #tpu.dot_dimension_numbers<[1], [0], [0], [1], [0, 0, 1, 1], [], []>} : vector<8x15xf32>, vector<15x32xf32>, vector<8x32xf32> -> vector<8x32xf32>
    %c0_47 = arith.constant 0 : index
    %c0_48 = arith.constant 0 : index
    %56 = vector.load %arg17[%c0_47, %c0_48] : memref<27x32xf32, #tpu.memory_space<vmem>>, vector<27x32xf32>
    %cst_49 = arith.constant dense<0.000000e+00> : vector<8x32xf32>
    %57 = tpu.matmul %53, %56, %cst_49 {dimension_numbers = #tpu.dot_dimension_numbers<[1], [0], [0], [1], [0, 0, 1, 1], [], []>} : vector<8x27xf32>, vector<27x32xf32>, vector<8x32xf32> -> vector<8x32xf32>
    %58 = arith.addf %55, %57 : vector<8x32xf32>
    %c0_50 = arith.constant 0 : index
    %c0_51 = arith.constant 0 : index
    %59 = vector.load %arg18[%c0_50, %c0_51] : memref<1x32xf32, #tpu.memory_space<vmem>>, vector<1x32xf32>
    %60 = vector.broadcast %59 : vector<1x32xf32> to vector<8x32xf32>
    %61 = arith.addf %58, %60 : vector<8x32xf32>
    %cst_52 = arith.constant 0.000000e+00 : f32
    %62 = vector.broadcast %cst_52 : f32 to vector<8x32xf32>
    %63 = arith.maximumf %61, %62 : vector<8x32xf32>
    %c0_53 = arith.constant 0 : index
    %c0_54 = arith.constant 0 : index
    %64 = vector.load %arg19[%c0_53, %c0_54] : memref<32x32xf32, #tpu.memory_space<vmem>>, vector<32x32xf32>
    %cst_55 = arith.constant dense<0.000000e+00> : vector<8x32xf32>
    %65 = tpu.matmul %63, %64, %cst_55 {dimension_numbers = #tpu.dot_dimension_numbers<[1], [0], [0], [1], [0, 0, 1, 1], [], []>} : vector<8x32xf32>, vector<32x32xf32>, vector<8x32xf32> -> vector<8x32xf32>
    %c0_56 = arith.constant 0 : index
    %c0_57 = arith.constant 0 : index
    %66 = vector.load %arg20[%c0_56, %c0_57] : memref<1x32xf32, #tpu.memory_space<vmem>>, vector<1x32xf32>
    %67 = vector.broadcast %66 : vector<1x32xf32> to vector<8x32xf32>
    %68 = arith.addf %65, %67 : vector<8x32xf32>
    %cst_58 = arith.constant 0.000000e+00 : f32
    %69 = vector.broadcast %cst_58 : f32 to vector<8x32xf32>
    %70 = arith.maximumf %68, %69 : vector<8x32xf32>
    %c0_59 = arith.constant 0 : index
    %c0_60 = arith.constant 0 : index
    %71 = vector.load %arg21[%c0_59, %c0_60] : memref<32x15xf32, #tpu.memory_space<vmem>>, vector<32x15xf32>
    %cst_61 = arith.constant dense<0.000000e+00> : vector<8x15xf32>
    %72 = tpu.matmul %70, %71, %cst_61 {dimension_numbers = #tpu.dot_dimension_numbers<[1], [0], [0], [1], [0, 0, 1, 1], [], []>} : vector<8x32xf32>, vector<32x15xf32>, vector<8x15xf32> -> vector<8x15xf32>
    %c0_62 = arith.constant 0 : index
    %c0_63 = arith.constant 0 : index
    %73 = vector.load %arg22[%c0_62, %c0_63] : memref<1x15xf32, #tpu.memory_space<vmem>>, vector<1x15xf32>
    %74 = vector.broadcast %73 : vector<1x15xf32> to vector<8x15xf32>
    %75 = arith.addf %72, %74 : vector<8x15xf32>
    %c0_64 = arith.constant 0 : index
    %c0_65 = arith.constant 0 : index
    %76 = vector.load %arg23[%c0_64, %c0_65] : memref<8x15xf32, #tpu.memory_space<vmem>>, vector<8x15xf32>
    tpu.vector_store %arg23[%c0_64, %c0_65], %75 {strides = array<i32>} : memref<8x15xf32, #tpu.memory_space<vmem>>, vector<8x15xf32>,
    return
  }
}

</mosaic_0001>

<llo_original>
// kernel: _sampler_gnn_forward.1
$region0: #{_sampler_gnn_forward.1}
  #allocation0 [shape = 'u32[]', space=smem, size = 0x4, offset = 0x4, fixed_abs, tag = 'smem constant byte address 0x4 - core index']
  #allocation1 [shape = 'u32[144,128]{1,0:T(1,128)}', space=vmem, size = 0x12000, scoped, tag = 'internal scratch']
  %s0 = inlined_call_operand.vmem [shape: f32[8,27], index: 0, kind: input, shape index: {}]
  %s1 = inlined_call_operand.vmem [shape: f32[216,1], index: 1, kind: input, shape index: {}]
  %s2 = inlined_call_operand.vmem [shape: f32[216,8], index: 2, kind: input, shape index: {}]
  %s3 = inlined_call_operand.vmem [shape: f32[216,216], index: 3, kind: input, shape index: {}]
  %s4 = inlined_call_operand.vmem [shape: f32[8,216], index: 4, kind: input, shape index: {}]
  %s5 = inlined_call_operand.vmem [shape: f32[8,4], index: 5, kind: input, shape index: {}]
  %s6 = inlined_call_operand.vmem [shape: f32[1,4], index: 6, kind: input, shape index: {}]
  %s7 = inlined_call_operand.vmem [shape: f32[4,4], index: 7, kind: input, shape index: {}]
  %s8 = inlined_call_operand.vmem [shape: f32[1,4], index: 8, kind: input, shape index: {}]
  %s9 = inlined_call_operand.vmem [shape: f32[4,4], index: 9, kind: input, shape index: {}]
  %s10 = inlined_call_operand.vmem [shape: f32[1,4], index: 10, kind: input, shape index: {}]
  %s11 = inlined_call_operand.vmem [shape: f32[4,4], index: 11, kind: input, shape index: {}]
  %s12 = inlined_call_operand.vmem [shape: f32[1,4], index: 12, kind: input, shape index: {}]
  %s13 = inlined_call_operand.vmem [shape: f32[4,15], index: 13, kind: input, shape index: {}]
  %s14 = inlined_call_operand.vmem [shape: f32[4,15], index: 14, kind: input, shape index: {}]
  %s15 = inlined_call_operand.vmem [shape: f32[1,15], index: 15, kind: input, shape index: {}]
  %s16 = inlined_call_operand.vmem [shape: f32[15,32], index: 16, kind: input, shape index: {}]
  %s17 = inlined_call_operand.vmem [shape: f32[27,32], index: 17, kind: input, shape index: {}]
  %s18 = inlined_call_operand.vmem [shape: f32[1,32], index: 18, kind: input, shape index: {}]
  %s19 = inlined_call_operand.vmem [shape: f32[32,32], index: 19, kind: input, shape index: {}]
  %s20 = inlined_call_operand.vmem [shape: f32[1,32], index: 20, kind: input, shape index: {}]
  %s21 = inlined_call_operand.vmem [shape: f32[32,15], index: 21, kind: input, shape index: {}]
  %s22 = inlined_call_operand.vmem [shape: f32[1,15], index: 22, kind: input, shape index: {}]
  %s23 = inlined_call_operand.hbm [shape: f32[8,15], index: 23, kind: output, shape index: {}]
  %s24 = sld [smem:[#allocation0]]
  $region102: #{_sampler_gnn_forward.1} parent=0
    _
  %s26 = ssub.s32 1, %s24
  %s27 = scalar_select 0, %s26, %s24
  $region1: #{_sampler_gnn_forward.1} parent=0
    #allocation2 [shape = 'u8[4096]{0}', space=vmem, size = 0x1000, scoped, tag = 'output window, operand 0, single buffered']
    #allocation3 [shape = 's32[1]{0}', space=sflag, size = 0x4, scoped, tag = 'scoped memory for _sampler_gnn_forward.1']
    %28 = vsyncpa [#allocation3], 0
    // Predicated region
    $region2: #{_sampler_gnn_forward.1} parent=1 // pred_check
      _
    $region3: #{_sampler_gnn_forward.1} parent=1 // pred_check_branch
      %30 = sbr.rel (0) target = $region5
    $region4: #{_sampler_gnn_forward.1} parent=1 // pred_region
      _
    $region5: #{_sampler_gnn_forward.1} parent=1 // pred_fallthru
      _
    // Predicated region
    $region6: #{_sampler_gnn_forward.1} parent=1 // pred_check
      _
    $region7: #{_sampler_gnn_forward.1} parent=1 // pred_check_branch
      %32 = sbr.rel (0) target = $region9
    $region8: #{_sampler_gnn_forward.1} parent=1 // pred_region
      _
    $region9: #{_sampler_gnn_forward.1} parent=1 // pred_fallthru
      _
    // Predicated region
    $region10: #{_sampler_gnn_forward.1} parent=1 // pred_check
      _
    $region11: #{_sampler_gnn_forward.1} parent=1 // pred_check_branch
      %34 = sbr.rel (0) target = $region13
    $region12: #{_sampler_gnn_forward.1} parent=1 // pred_region
      _
    $region13: #{_sampler_gnn_forward.1} parent=1 // pred_fallthru
      _
    // Predicated region
    $region14: #{_sampler_gnn_forward.1} parent=1 // pred_check
      _
    $region15: #{_sampler_gnn_forward.1} parent=1 // pred_check_branch
      %36 = sbr.rel (0) target = $region17
    $region16: #{_sampler_gnn_forward.1} parent=1 // pred_region
      _
    $region17: #{_sampler_gnn_forward.1} parent=1 // pred_fallthru
      _
    // Predicated region
    $region18: #{_sampler_gnn_forward.1} parent=1 // pred_check
      _
    $region19: #{_sampler_gnn_forward.1} parent=1 // pred_check_branch
      %38 = sbr.rel (0) target = $region21
    $region20: #{_sampler_gnn_forward.1} parent=1 // pred_region
      _
    $region21: #{_sampler_gnn_forward.1} parent=1 // pred_fallthru
      _
    // Predicated region
    $region22: #{_sampler_gnn_forward.1} parent=1 // pred_check
      _
    $region23: #{_sampler_gnn_forward.1} parent=1 // pred_check_branch
      %40 = sbr.rel (0) target = $region25
    $region24: #{_sampler_gnn_forward.1} parent=1 // pred_region
      _
    $region25: #{_sampler_gnn_forward.1} parent=1 // pred_fallthru
      _
    // Predicated region
    $region26: #{_sampler_gnn_forward.1} parent=1 // pred_check
      _
    $region27: #{_sampler_gnn_forward.1} parent=1 // pred_check_branch
      %42 = sbr.rel (0) target = $region29
    $region28: #{_sampler_gnn_forward.1} parent=1 // pred_region
      _
    $region29: #{_sampler_gnn_forward.1} parent=1 // pred_fallthru
      _
    // Predicated region
    $region30: #{_sampler_gnn_forward.1} parent=1 // pred_check
      _
    $region31: #{_sampler_gnn_forward.1} parent=1 // pred_check_branch
      %44 = sbr.rel (0) target = $region33
    $region32: #{_sampler_gnn_forward.1} parent=1 // pred_region
      _
    $region33: #{_sampler_gnn_forward.1} parent=1 // pred_fallthru
      _
    // Predicated region
    $region34: #{_sampler_gnn_forward.1} parent=1 // pred_check
      _
    $region35: #{_sampler_gnn_forward.1} parent=1 // pred_check_branch
      %46 = sbr.rel (0) target = $region37
    $region36: #{_sampler_gnn_forward.1} parent=1 // pred_region
      _
    $region37: #{_sampler_gnn_forward.1} parent=1 // pred_fallthru
      _
    // Predicated region
    $region38: #{_sampler_gnn_forward.1} parent=1 // pred_check
      _
    $region39: #{_sampler_gnn_forward.1} parent=1 // pred_check_branch
      %48 = sbr.rel (0) target = $region41
    $region40: #{_sampler_gnn_forward.1} parent=1 // pred_region
      _
    $region41: #{_sampler_gnn_forward.1} parent=1 // pred_fallthru
      _
    // Predicated region
    $region42: #{_sampler_gnn_forward.1} parent=1 // pred_check
      _
    $region43: #{_sampler_gnn_forward.1} parent=1 // pred_check_branch
      %50 = sbr.rel (0) target = $region45
    $region44: #{_sampler_gnn_forward.1} parent=1 // pred_region
      _
    $region45: #{_sampler_gnn_forward.1} parent=1 // pred_fallthru
      _
    // Predicated region
    $region46: #{_sampler_gnn_forward.1} parent=1 // pred_check
      _
    $region47: #{_sampler_gnn_forward.1} parent=1 // pred_check_branch
      %52 = sbr.rel (0) target = $region49
    $region48: #{_sampler_gnn_forward.1} parent=1 // pred_region
      _
    $region49: #{_sampler_gnn_forward.1} parent=1 // pred_fallthru
      _
    // Predicated region
    $region50: #{_sampler_gnn_forward.1} parent=1 // pred_check
      _
    $region51: #{_sampler_gnn_forward.1} parent=1 // pred_check_branch
      %54 = sbr.rel (0) target = $region53
    $region52: #{_sampler_gnn_forward.1} parent=1 // pred_region
      _
    $region53: #{_sampler_gnn_forward.1} parent=1 // pred_fallthru
      _
    // Predicated region
    $region54: #{_sampler_gnn_forward.1} parent=1 // pred_check
      _
    $region55: #{_sampler_gnn_forward.1} parent=1 // pred_check_branch
      %56 = sbr.rel (0) target = $region57
    $region56: #{_sampler_gnn_forward.1} parent=1 // pred_region
      _
    $region57: #{_sampler_gnn_forward.1} parent=1 // pred_fallthru
      _
    // Predicated region
    $region58: #{_sampler_gnn_forward.1} parent=1 // pred_check
      _
    $region59: #{_sampler_gnn_forward.1} parent=1 // pred_check_branch
      %58 = sbr.rel (0) target = $region61
    $region60: #{_sampler_gnn_forward.1} parent=1 // pred_region
      _
    $region61: #{_sampler_gnn_forward.1} parent=1 // pred_fallthru
      _
    // Predicated region
    $region62: #{_sampler_gnn_forward.1} parent=1 // pred_check
      _
    $region63: #{_sampler_gnn_forward.1} parent=1 // pred_check_branch
      %60 = sbr.rel (0) target = $region65
    $region64: #{_sampler_gnn_forward.1} parent=1 // pred_region
      _
    $region65: #{_sampler_gnn_forward.1} parent=1 // pred_fallthru
      _
    // Predicated region
    $region66: #{_sampler_gnn_forward.1} parent=1 // pred_check
      _
    $region67: #{_sampler_gnn_forward.1} parent=1 // pred_check_branch
      %62 = sbr.rel (0) target = $region69
    $region68: #{_sampler_gnn_forward.1} parent=1 // pred_region
      _
    $region69: #{_sampler_gnn_forward.1} parent=1 // pred_fallthru
      _
    // Predicated region
    $region70: #{_sampler_gnn_forward.1} parent=1 // pred_check
      _
    $region71: #{_sampler_gnn_forward.1} parent=1 // pred_check_branch
      %64 = sbr.rel (0) target = $region73
    $region72: #{_sampler_gnn_forward.1} parent=1 // pred_region
      _
    $region73: #{_sampler_gnn_forward.1} parent=1 // pred_fallthru
      _
    // Predicated region
    $region74: #{_sampler_gnn_forward.1} parent=1 // pred_check
      _
    $region75: #{_sampler_gnn_forward.1} parent=1 // pred_check_branch
      %66 = sbr.rel (0) target = $region77
    $region76: #{_sampler_gnn_forward.1} parent=1 // pred_region
      _
    $region77: #{_sampler_gnn_forward.1} parent=1 // pred_fallthru
      _
    // Predicated region
    $region78: #{_sampler_gnn_forward.1} parent=1 // pred_check
      _
    $region79: #{_sampler_gnn_forward.1} parent=1 // pred_check_branch
      %68 = sbr.rel (0) target = $region81
    $region80: #{_sampler_gnn_forward.1} parent=1 // pred_region
      _
    $region81: #{_sampler_gnn_forward.1} parent=1 // pred_fallthru
      _
    // Predicated region
    $region82: #{_sampler_gnn_forward.1} parent=1 // pred_check
      _
    $region83: #{_sampler_gnn_forward.1} parent=1 // pred_check_branch
      %70 = sbr.rel (0) target = $region85
    $region84: #{_sampler_gnn_forward.1} parent=1 // pred_region
      _
    $region85: #{_sampler_gnn_forward.1} parent=1 // pred_fallthru
      _
    // Predicated region
    $region86: #{_sampler_gnn_forward.1} parent=1 // pred_check
      _
    $region87: #{_sampler_gnn_forward.1} parent=1 // pred_check_branch
      %72 = sbr.rel (0) target = $region89
    $region88: #{_sampler_gnn_forward.1} parent=1 // pred_region
      _
    $region89: #{_sampler_gnn_forward.1} parent=1 // pred_fallthru
      _
    // Predicated region
    $region90: #{_sampler_gnn_forward.1} parent=1 // pred_check
      _
    $region91: #{_sampler_gnn_forward.1} parent=1 // pred_check_branch
      %74 = sbr.rel (0) target = $region93
    $region92: #{_sampler_gnn_forward.1} parent=1 // pred_region
      _
    $region93: #{_sampler_gnn_forward.1} parent=1 // pred_fallthru
      _
    %v75 = vld [vmem:[%s1] sm:$0xff]
    %v76 = vld [vmem:[%s1 + $0x8] sm:$0xff]
    %v77 = vld [vmem:[%s1 + $0x10] sm:$0xff]
    %v78 = vld [vmem:[%s1 + $0x18] sm:$0xff]
    %v79 = vld [vmem:[%s1 + $0x20] sm:$0xff]
    %v80 = vld [vmem:[%s1 + $0x28] sm:$0xff]
    %v81 = vld [vmem:[%s1 + $0x30] sm:$0xff]
    %v82 = vld [vmem:[%s1 + $0x38] sm:$0xff]
    %v83 = vld [vmem:[%s1 + $0x40] sm:$0xff]
    %v84 = vld [vmem:[%s1 + $0x48] sm:$0xff]
    %v85 = vld [vmem:[%s1 + $0x50] sm:$0xff]
    %v86 = vld [vmem:[%s1 + $0x58] sm:$0xff]
    %v87 = vld [vmem:[%s1 + $0x60] sm:$0xff]
    %v88 = vld [vmem:[%s1 + $0x68] sm:$0xff]
    %v89 = vld [vmem:[%s1 + $0x70] sm:$0xff]
    %v90 = vld [vmem:[%s1 + $0x78] sm:$0xff]
    %v91 = vld [vmem:[%s1 + $0x80] sm:$0xff]
    %v92 = vld [vmem:[%s1 + $0x88] sm:$0xff]
    %v93 = vld [vmem:[%s1 + $0x90] sm:$0xff]
    %v94 = vld [vmem:[%s1 + $0x98] sm:$0xff]
    %v95 = vld [vmem:[%s1 + $0xa0] sm:$0xff]
    %v96 = vld [vmem:[%s1 + $0xa8] sm:$0xff]
    %v97 = vld [vmem:[%s1 + $0xb0] sm:$0xff]
    %v98 = vld [vmem:[%s1 + $0xb8] sm:$0xff]
    %v99 = vld [vmem:[%s1 + $0xc0] sm:$0xff]
    %v100 = vld [vmem:[%s1 + $0xc8] sm:$0xff]
    %v101 = vld [vmem:[%s1 + $0xd0] sm:$0xff]
    %v102 = vlaneseq
    %v103 = vand.u32 %v102, 127
    %vm104 = vcmp.eq.s32.totalorder %v103, 0
    %v105 = vsel %vm104, 1, 0
    %v106 = vcvt.s32.f32 %v105
    %v107 = vld [vmem:[%s2] sm:$0xff]
    %v108 = vld [vmem:[%s2 + $0x8] sm:$0xff]
    %v109 = vld [vmem:[%s2 + $0x10] sm:$0xff]
    %v110 = vld [vmem:[%s2 + $0x18] sm:$0xff]
    %v111 = vld [vmem:[%s2 + $0x20] sm:$0xff]
    %v112 = vld [vmem:[%s2 + $0x28] sm:$0xff]
    %v113 = vld [vmem:[%s2 + $0x30] sm:$0xff]
    %v114 = vld [vmem:[%s2 + $0x38] sm:$0xff]
    %v115 = vld [vmem:[%s2 + $0x40] sm:$0xff]
    %v116 = vld [vmem:[%s2 + $0x48] sm:$0xff]
    %v117 = vld [vmem:[%s2 + $0x50] sm:$0xff]
    %v118 = vld [vmem:[%s2 + $0x58] sm:$0xff]
    %v119 = vld [vmem:[%s2 + $0x60] sm:$0xff]
    %v120 = vld [vmem:[%s2 + $0x68] sm:$0xff]
    %v121 = vld [vmem:[%s2 + $0x70] sm:$0xff]
    %v122 = vld [vmem:[%s2 + $0x78] sm:$0xff]
    %v123 = vld [vmem:[%s2 + $0x80] sm:$0xff]
    %v124 = vld [vmem:[%s2 + $0x88] sm:$0xff]
    %v125 = vld [vmem:[%s2 + $0x90] sm:$0xff]
    %v126 = vld [vmem:[%s2 + $0x98] sm:$0xff]
    %v127 = vld [vmem:[%s2 + $0xa0] sm:$0xff]
    %v128 = vld [vmem:[%s2 + $0xa8] sm:$0xff]
    %v129 = vld [vmem:[%s2 + $0xb0] sm:$0xff]
    %v130 = vld [vmem:[%s2 + $0xb8] sm:$0xff]
    %v131 = vld [vmem:[%s2 + $0xc0] sm:$0xff]
    %v132 = vld [vmem:[%s2 + $0xc8] sm:$0xff]
    %v133 = vld [vmem:[%s2 + $0xd0] sm:$0xff]
    %135 = vset.pattern.permute.xlu0 0
    %136 = vperm.xlu0 %135, %v75
    %v137 = vpop.permute.xlu0 %136
    %140 = vset.pattern.permute.xlu0 0
    %141 = vperm.xlu0 %140, %v76
    %v142 = vpop.permute.xlu0 %141
    %145 = vset.pattern.permute.xlu0 0
    %146 = vperm.xlu0 %145, %v77
    %v147 = vpop.permute.xlu0 %146
    %150 = vset.pattern.permute.xlu0 0
    %151 = vperm.xlu0 %150, %v78
    %v152 = vpop.permute.xlu0 %151
    %155 = vset.pattern.permute.xlu0 0
    %156 = vperm.xlu0 %155, %v79
    %v157 = vpop.permute.xlu0 %156
    %160 = vset.pattern.permute.xlu0 0
    %161 = vperm.xlu0 %160, %v80
    %v162 = vpop.permute.xlu0 %161
    %165 = vset.pattern.permute.xlu0 0
    %166 = vperm.xlu0 %165, %v81
    %v167 = vpop.permute.xlu0 %166
    %170 = vset.pattern.permute.xlu0 0
    %171 = vperm.xlu0 %170, %v82
    %v172 = vpop.permute.xlu0 %171
    %175 = vset.pattern.permute.xlu0 0
    %176 = vperm.xlu0 %175, %v83
    %v177 = vpop.permute.xlu0 %176
    %180 = vset.pattern.permute.xlu0 0
    %181 = vperm.xlu0 %180, %v84
    %v182 = vpop.permute.xlu0 %181
    %185 = vset.pattern.permute.xlu0 0
    %186 = vperm.xlu0 %185, %v85
    %v187 = vpop.permute.xlu0 %186
    %190 = vset.pattern.permute.xlu0 0
    %191 = vperm.xlu0 %190, %v86
    %v192 = vpop.permute.xlu0 %191
    %195 = vset.pattern.permute.xlu0 0
    %196 = vperm.xlu0 %195, %v87
    %v197 = vpop.permute.xlu0 %196
    %200 = vset.pattern.permute.xlu0 0
    %201 = vperm.xlu0 %200, %v88
    %v202 = vpop.permute.xlu0 %201
    %205 = vset.pattern.permute.xlu0 0
    %206 = vperm.xlu0 %205, %v89
    %v207 = vpop.permute.xlu0 %206
    %210 = vset.pattern.permute.xlu0 0
    %211 = vperm.xlu0 %210, %v90
    %v212 = vpop.permute.xlu0 %211
    %215 = vset.pattern.permute.xlu0 0
    %216 = vperm.xlu0 %215, %v91
    %v217 = vpop.permute.xlu0 %216
    %220 = vset.pattern.permute.xlu0 0
    %221 = vperm.xlu0 %220, %v92
    %v222 = vpop.permute.xlu0 %221
    %225 = vset.pattern.permute.xlu0 0
    %226 = vperm.xlu0 %225, %v93
    %v227 = vpop.permute.xlu0 %226
    %230 = vset.pattern.permute.xlu0 0
    %231 = vperm.xlu0 %230, %v94
    %v232 = vpop.permute.xlu0 %231
    %235 = vset.pattern.permute.xlu0 0
    %236 = vperm.xlu0 %235, %v95
    %v237 = vpop.permute.xlu0 %236
    %240 = vset.pattern.permute.xlu0 0
    %241 = vperm.xlu0 %240, %v96
    %v242 = vpop.permute.xlu0 %241
    %245 = vset.pattern.permute.xlu0 0
    %246 = vperm.xlu0 %245, %v97
    %v247 = vpop.permute.xlu0 %246
    %250 = vset.pattern.permute.xlu0 0
    %251 = vperm.xlu0 %250, %v98
    %v252 = vpop.permute.xlu0 %251
    %255 = vset.pattern.permute.xlu0 0
    %256 = vperm.xlu0 %255, %v99
    %v257 = vpop.permute.xlu0 %256
    %260 = vset.pattern.permute.xlu0 0
    %261 = vperm.xlu0 %260, %v100
    %v262 = vpop.permute.xlu0 %261
    %265 = vset.pattern.permute.xlu0 0
    %266 = vperm.xlu0 %265, %v101
    %v267 = vpop.permute.xlu0 %266
    %v269 = vmul.f32 %v137, %v106
    %v270 = vmul.f32 %v142, %v106
    %v271 = vmul.f32 %v147, %v106
    %v272 = vmul.f32 %v152, %v106
    %v273 = vmul.f32 %v157, %v106
    %v274 = vmul.f32 %v162, %v106
    %v275 = vmul.f32 %v167, %v106
    %v276 = vmul.f32 %v172, %v106
    %v277 = vmul.f32 %v177, %v106
    %v278 = vmul.f32 %v182, %v106
    %v279 = vmul.f32 %v187, %v106
    %v280 = vmul.f32 %v192, %v106
    %v281 = vmul.f32 %v197, %v106
    %v282 = vmul.f32 %v202, %v106
    %v283 = vmul.f32 %v207, %v106
    %v284 = vmul.f32 %v212, %v106
    %v285 = vmul.f32 %v217, %v106
    %v286 = vmul.f32 %v222, %v106
    %v287 = vmul.f32 %v227, %v106
    %v288 = vmul.f32 %v232, %v106
    %v289 = vmul.f32 %v237, %v106
    %v290 = vmul.f32 %v242, %v106
    %v291 = vmul.f32 %v247, %v106
    %v292 = vmul.f32 %v252, %v106
    %v293 = vmul.f32 %v257, %v106
    %v294 = vmul.f32 %v262, %v106
    %v295 = vmul.f32 %v267, %v106
    %v296 = vadd.f32 %v107, %v269
    %v297 = vadd.f32 %v108, %v270
    %v298 = vadd.f32 %v109, %v271
    %v299 = vadd.f32 %v110, %v272
    %v300 = vadd.f32 %v111, %v273
    %v301 = vadd.f32 %v112, %v274
    %v302 = vadd.f32 %v113, %v275
    %v303 = vadd.f32 %v114, %v276
    %v304 = vadd.f32 %v115, %v277
    %v305 = vadd.f32 %v116, %v278
    %v306 = vadd.f32 %v117, %v279
    %v307 = vadd.f32 %v118, %v280
    %v308 = vadd.f32 %v119, %v281
    %v309 = vadd.f32 %v120, %v282
    %v310 = vadd.f32 %v121, %v283
    %v311 = vadd.f32 %v122, %v284
    %v312 = vadd.f32 %v123, %v285
    %v313 = vadd.f32 %v124, %v286
    %v314 = vadd.f32 %v125, %v287
    %v315 = vadd.f32 %v126, %v288
    %v316 = vadd.f32 %v127, %v289
    %v317 = vadd.f32 %v128, %v290
    %v318 = vadd.f32 %v129, %v291
    %v319 = vadd.f32 %v130, %v292
    %v320 = vadd.f32 %v131, %v293
    %v321 = vadd.f32 %v132, %v294
    %v322 = vadd.f32 %v133, %v295
    %v323 = vld [vmem:[%s3] sm:$0xff]
    %v324 = vld [vmem:[%s3 + $0x8] sm:$0xff]
    %v325 = vld [vmem:[%s3 + $0x10] sm:$0xff]
    %v326 = vld [vmem:[%s3 + $0x18] sm:$0xff]
    %v327 = vld [vmem:[%s3 + $0x20] sm:$0xff]
    %v328 = vld [vmem:[%s3 + $0x28] sm:$0xff]
    %v329 = vld [vmem:[%s3 + $0x30] sm:$0xff]
    %v330 = vld [vmem:[%s3 + $0x38] sm:$0xff]
    %v331 = vld [vmem:[%s3 + $0x40] sm:$0xff]
    %v332 = vld [vmem:[%s3 + $0x48] sm:$0xff]
    %v333 = vld [vmem:[%s3 + $0x50] sm:$0xff]
    %v334 = vld [vmem:[%s3 + $0x58] sm:$0xff]
    %v335 = vld [vmem:[%s3 + $0x60] sm:$0xff]
    %v336 = vld [vmem:[%s3 + $0x68] sm:$0xff]
    %v337 = vld [vmem:[%s3 + $0x70] sm:$0xff]
    %v338 = vld [vmem:[%s3 + $0x78] sm:$0xff]
    %v339 = vld [vmem:[%s3 + $0x80] sm:$0xff]
    %v340 = vld [vmem:[%s3 + $0x88] sm:$0xff]
    %v341 = vld [vmem:[%s3 + $0x90] sm:$0xff]
    %v342 = vld [vmem:[%s3 + $0x98] sm:$0xff]
    %v343 = vld [vmem:[%s3 + $0xa0] sm:$0xff]
    %v344 = vld [vmem:[%s3 + $0xa8] sm:$0xff]
    %v345 = vld [vmem:[%s3 + $0xb0] sm:$0xff]
    %v346 = vld [vmem:[%s3 + $0xb8] sm:$0xff]
    %v347 = vld [vmem:[%s3 + $0xc0] sm:$0xff]
    %v348 = vld [vmem:[%s3 + $0xc8] sm:$0xff]
    %v349 = vld [vmem:[%s3 + $0xd0] sm:$0xff]
    %v350 = vld [vmem:[%s3 + $0xd8] sm:$0xff]
    %v351 = vld [vmem:[%s3 + $0xe0] sm:$0xff]
    %v352 = vld [vmem:[%s3 + $0xe8] sm:$0xff]
    %v353 = vld [vmem:[%s3 + $0xf0] sm:$0xff]
    %v354 = vld [vmem:[%s3 + $0xf8] sm:$0xff]
    %v355 = vld [vmem:[%s3 + $0x100] sm:$0xff]
    %v356 = vld [vmem:[%s3 + $0x108] sm:$0xff]
    %v357 = vld [vmem:[%s3 + $0x110] sm:$0xff]
    %v358 = vld [vmem:[%s3 + $0x118] sm:$0xff]
    %v359 = vld [vmem:[%s3 + $0x120] sm:$0xff]
    %v360 = vld [vmem:[%s3 + $0x128] sm:$0xff]
    %v361 = vld [vmem:[%s3 + $0x130] sm:$0xff]
    %v362 = vld [vmem:[%s3 + $0x138] sm:$0xff]
    %v363 = vld [vmem:[%s3 + $0x140] sm:$0xff]
    %v364 = vld [vmem:[%s3 + $0x148] sm:$0xff]
    %v365 = vld [vmem:[%s3 + $0x150] sm:$0xff]
    %v366 = vld [vmem:[%s3 + $0x158] sm:$0xff]
    %v367 = vld [vmem:[%s3 + $0x160] sm:$0xff]
    %v368 = vld [vmem:[%s3 + $0x168] sm:$0xff]
    %v369 = vld [vmem:[%s3 + $0x170] sm:$0xff]
    %v370 = vld [vmem:[%s3 + $0x178] sm:$0xff]
    %v371 = vld [vmem:[%s3 + $0x180] sm:$0xff]
    %v372 = vld [vmem:[%s3 + $0x188] sm:$0xff]
    %v373 = vld [vmem:[%s3 + $0x190] sm:$0xff]
    %v374 = vld [vmem:[%s3 + $0x198] sm:$0xff]
    %v375 = vld [vmem:[%s3 + $0x1a0] sm:$0xff]
    %v376 = vld [vmem:[%s3 + $0x1a8] sm:$0xff]
    %v377 = vld [vmem:[%s5] sm:$0xff]
    %vm378 = vcmask 64512
    %v380 = vsel %vm378, %v296, 0
    %v383 = vsel %vm378, %v297, 0
    %v386 = vsel %vm378, %v298, 0
    %v389 = vsel %vm378, %v299, 0
    %v392 = vsel %vm378, %v300, 0
    %v395 = vsel %vm378, %v301, 0
    %v398 = vsel %vm378, %v302, 0
    %v401 = vsel %vm378, %v303, 0
    %v404 = vsel %vm378, %v304, 0
    %v407 = vsel %vm378, %v305, 0
    %v410 = vsel %vm378, %v306, 0
    %v413 = vsel %vm378, %v307, 0
    %v416 = vsel %vm378, %v308, 0
    %v419 = vsel %vm378, %v309, 0
    %v422 = vsel %vm378, %v310, 0
    %v425 = vsel %vm378, %v311, 0
    %v428 = vsel %vm378, %v312, 0
    %v431 = vsel %vm378, %v313, 0
    %v434 = vsel %vm378, %v314, 0
    %v437 = vsel %vm378, %v315, 0
    %v440 = vsel %vm378, %v316, 0
    %v443 = vsel %vm378, %v317, 0
    %v446 = vsel %vm378, %v318, 0
    %v449 = vsel %vm378, %v319, 0
    %v452 = vsel %vm378, %v320, 0
    %v455 = vsel %vm378, %v321, 0
    %v458 = vsel %vm378, %v322, 0
    %460 = vmatprep.subr.mxu0 0.0
    %461 = vmatpush1.msra.mxu0 0.0
    %462 = vmatprep.subr.mxu0 0.0
    %463 = vmatpush1.msra.mxu0 0.0
    %464 = vmatprep.subr.mxu0 0.0
    %465 = vmatpush1.msra.mxu0 0.0
    %466 = vmatprep.subr.mxu0 0.0
    %467 = vmatpush1.msra.mxu0 0.0
    %468 = vmatprep.subr.mxu0 0.0
    %469 = vmatpush1.msra.mxu0 0.0
    %470 = vmatprep.subr.mxu0 0.0
    %471 = vmatpush1.msra.mxu0 0.0
    %472 = vmatprep.subr.mxu0 0.0
    %473 = vmatpush1.msra.mxu0 0.0
    %474 = vmatprep.subr.mxu0 0.0
    %475 = vmatpush1.msra.mxu0 0.0
    %476 = vmatprep.subr.mxu0 0.0
    %477 = vmatpush1.msra.mxu0 0.0
    %478 = vmatprep.subr.mxu0 0.0
    %479 = vmatpush1.msra.mxu0 0.0
    %480 = vmatprep.subr.mxu0 0.0
    %481 = vmatpush1.msra.mxu0 0.0
    %482 = vmatprep.subr.mxu0 0.0
    %483 = vmatpush1.msra.mxu0 0.0
    %484 = vmatprep.subr.mxu0 0.0
    %485 = vmatpush1.msra.mxu0 0.0
    %486 = vmatprep.subr.mxu0 0.0
    %487 = vmatpush1.msra.mxu0 0.0
    %488 = vmatprep.subr.mxu0 0.0
    %489 = vmatpush1.msra.mxu0 0.0
    %490 = vmatprep.subr.mxu0 0.0
    %491 = vmatpush1.msra.mxu0 %v377
    %492 = vmatprep.subr.mxu0 0.0
    %493 = vmatpush2.msra.mxu0 0.0
    %494 = vmatprep.subr.mxu0 0.0
    %495 = vmatpush2.msra.mxu0 0.0
    %496 = vmatprep.subr.mxu0 0.0
    %497 = vmatpush2.msra.mxu0 0.0
    %498 = vmatprep.subr.mxu0 0.0
    %499 = vmatpush2.msra.mxu0 0.0
    %500 = vmatprep.subr.mxu0 0.0
    %501 = vmatpush2.msra.mxu0 0.0
    %502 = vmatprep.subr.mxu0 0.0
    %503 = vmatpush2.msra.mxu0 0.0
    %504 = vmatprep.subr.mxu0 0.0
    %505 = vmatpush2.msra.mxu0 0.0
    %506 = vmatprep.subr.mxu0 0.0
    %507 = vmatpush2.msra.mxu0 0.0
    %508 = vmatprep.subr.mxu0 0.0
    %509 = vmatpush2.msra.mxu0 0.0
    %510 = vmatprep.subr.mxu0 0.0
    %511 = vmatpush2.msra.mxu0 0.0
    %512 = vmatprep.subr.mxu0 0.0
    %513 = vmatpush2.msra.mxu0 0.0
    %514 = vmatprep.subr.mxu0 0.0
    %515 = vmatpush2.msra.mxu0 0.0
    %516 = vmatprep.subr.mxu0 0.0
    %517 = vmatpush2.msra.mxu0 0.0
    %518 = vmatprep.subr.mxu0 0.0
    %519 = vmatpush2.msra.mxu0 0.0
    %520 = vmatprep.subr.mxu0 0.0
    %521 = vmatpush2.msra.mxu0 0.0
    %522 = vmatprep.subr.mxu0 0.0
    %523 = vmatpush2.msra.mxu0 0.0
    %524 = vmatprep.mubr.f32.mxu0 0.0
    %525 = vmatmul.mubr.f32.gmra.mxu0 %v380
    %v526 = vpop.f32.mrf.mxu0
    %v527 = vadd.f32 0.0, %v526
    %v528 = vpop.f32.mrf.mxu0
    %529 = vmatprep.mubr.f32.mxu0 0.0
    %530 = vmatmul.mubr.f32.gmra.mxu0 %v383
    %v531 = vpop.f32.mrf.mxu0
    %v532 = vadd.f32 0.0, %v531
    %v533 = vpop.f32.mrf.mxu0
    %534 = vmatprep.mubr.f32.mxu0 0.0
    %535 = vmatmul.mubr.f32.gmra.mxu0 %v386
    %v536 = vpop.f32.mrf.mxu0
    %v537 = vadd.f32 0.0, %v536
    %v538 = vpop.f32.mrf.mxu0
    %539 = vmatprep.mubr.f32.mxu0 0.0
    %540 = vmatmul.mubr.f32.gmra.mxu0 %v389
    %v541 = vpop.f32.mrf.mxu0
    %v542 = vadd.f32 0.0, %v541
    %v543 = vpop.f32.mrf.mxu0
    %544 = vmatprep.mubr.f32.mxu0 0.0
    %545 = vmatmul.mubr.f32.gmra.mxu0 %v392
    %v546 = vpop.f32.mrf.mxu0
    %v547 = vadd.f32 0.0, %v546
    %v548 = vpop.f32.mrf.mxu0
    %549 = vmatprep.mubr.f32.mxu0 0.0
    %550 = vmatmul.mubr.f32.gmra.mxu0 %v395
    %v551 = vpop.f32.mrf.mxu0
    %v552 = vadd.f32 0.0, %v551
    %v553 = vpop.f32.mrf.mxu0
    %554 = vmatprep.mubr.f32.mxu0 0.0
    %555 = vmatmul.mubr.f32.gmra.mxu0 %v398
    %v556 = vpop.f32.mrf.mxu0
    %v557 = vadd.f32 0.0, %v556
    %v558 = vpop.f32.mrf.mxu0
    %559 = vmatprep.mubr.f32.mxu0 0.0
    %560 = vmatmul.mubr.f32.gmra.mxu0 %v401
    %v561 = vpop.f32.mrf.mxu0
    %v562 = vadd.f32 0.0, %v561
    %v563 = vpop.f32.mrf.mxu0
    %564 = vmatprep.mubr.f32.mxu0 0.0
    %565 = vmatmul.mubr.f32.gmra.mxu0 %v404
    %v566 = vpop.f32.mrf.mxu0
    %v567 = vadd.f32 0.0, %v566
    %v568 = vpop.f32.mrf.mxu0
    %569 = vmatprep.mubr.f32.mxu0 0.0
    %570 = vmatmul.mubr.f32.gmra.mxu0 %v407
    %v571 = vpop.f32.mrf.mxu0
    %v572 = vadd.f32 0.0, %v571
    %v573 = vpop.f32.mrf.mxu0
    %574 = vmatprep.mubr.f32.mxu0 0.0
    %575 = vmatmul.mubr.f32.gmra.mxu0 %v410
    %v576 = vpop.f32.mrf.mxu0
    %v577 = vadd.f32 0.0, %v576
    %v578 = vpop.f32.mrf.mxu0
    %579 = vmatprep.mubr.f32.mxu0 0.0
    %580 = vmatmul.mubr.f32.gmra.mxu0 %v413
    %v581 = vpop.f32.mrf.mxu0
    %v582 = vadd.f32 0.0, %v581
    %v583 = vpop.f32.mrf.mxu0
    %584 = vmatprep.mubr.f32.mxu0 0.0
    %585 = vmatmul.mubr.f32.gmra.mxu0 %v416
    %v586 = vpop.f32.mrf.mxu0
    %v587 = vadd.f32 0.0, %v586
    %v588 = vpop.f32.mrf.mxu0
    %589 = vmatprep.mubr.f32.mxu0 0.0
    %590 = vmatmul.mubr.f32.gmra.mxu0 %v419
    %v591 = vpop.f32.mrf.mxu0
    %v592 = vadd.f32 0.0, %v591
    %v593 = vpop.f32.mrf.mxu0
    %594 = vmatprep.mubr.f32.mxu0 0.0
    %595 = vmatmul.mubr.f32.gmra.mxu0 %v422
    %v596 = vpop.f32.mrf.mxu0
    %v597 = vadd.f32 0.0, %v596
    %v598 = vpop.f32.mrf.mxu0
    %599 = vmatprep.mubr.f32.mxu0 0.0
    %600 = vmatmul.mubr.f32.gmra.mxu0 %v425
    %v601 = vpop.f32.mrf.mxu0
    %v602 = vadd.f32 0.0, %v601
    %v603 = vpop.f32.mrf.mxu0
    %604 = vmatprep.mubr.f32.mxu0 0.0
    %605 = vmatmul.mubr.f32.gmra.mxu0 %v428
    %v606 = vpop.f32.mrf.mxu0
    %v607 = vadd.f32 0.0, %v606
    %v608 = vpop.f32.mrf.mxu0
    %609 = vmatprep.mubr.f32.mxu0 0.0
    %610 = vmatmul.mubr.f32.gmra.mxu0 %v431
    %v611 = vpop.f32.mrf.mxu0
    %v612 = vadd.f32 0.0, %v611
    %v613 = vpop.f32.mrf.mxu0
    %614 = vmatprep.mubr.f32.mxu0 0.0
    %615 = vmatmul.mubr.f32.gmra.mxu0 %v434
    %v616 = vpop.f32.mrf.mxu0
    %v617 = vadd.f32 0.0, %v616
    %v618 = vpop.f32.mrf.mxu0
    %619 = vmatprep.mubr.f32.mxu0 0.0
    %620 = vmatmul.mubr.f32.gmra.mxu0 %v437
    %v621 = vpop.f32.mrf.mxu0
    %v622 = vadd.f32 0.0, %v621
    %v623 = vpop.f32.mrf.mxu0
    %624 = vmatprep.mubr.f32.mxu0 0.0
    %625 = vmatmul.mubr.f32.gmra.mxu0 %v440
    %v626 = vpop.f32.mrf.mxu0
    %v627 = vadd.f32 0.0, %v626
    %v628 = vpop.f32.mrf.mxu0
    %629 = vmatprep.mubr.f32.mxu0 0.0
    %630 = vmatmul.mubr.f32.gmra.mxu0 %v443
    %v631 = vpop.f32.mrf.mxu0
    %v632 = vadd.f32 0.0, %v631
    %v633 = vpop.f32.mrf.mxu0
    %634 = vmatprep.mubr.f32.mxu0 0.0
    %635 = vmatmul.mubr.f32.gmra.mxu0 %v446
    %v636 = vpop.f32.mrf.mxu0
    %v637 = vadd.f32 0.0, %v636
    %v638 = vpop.f32.mrf.mxu0
    %639 = vmatprep.mubr.f32.mxu0 0.0
    %640 = vmatmul.mubr.f32.gmra.mxu0 %v449
    %v641 = vpop.f32.mrf.mxu0
    %v642 = vadd.f32 0.0, %v641
    %v643 = vpop.f32.mrf.mxu0
    %644 = vmatprep.mubr.f32.mxu0 0.0
    %645 = vmatmul.mubr.f32.gmra.mxu0 %v452
    %v646 = vpop.f32.mrf.mxu0
    %v647 = vadd.f32 0.0, %v646
    %v648 = vpop.f32.mrf.mxu0
    %649 = vmatprep.mubr.f32.mxu0 0.0
    %650 = vmatmul.mubr.f32.gmra.mxu0 %v455
    %v651 = vpop.f32.mrf.mxu0
    %v652 = vadd.f32 0.0, %v651
    %v653 = vpop.f32.mrf.mxu0
    %654 = vmatprep.mubr.f32.mxu0 0.0
    %655 = vmatmul.mubr.f32.gmra.mxu0 %v458
    %v656 = vpop.f32.mrf.mxu0
    %v657 = vadd.f32 0.0, %v656
    %v658 = vpop.f32.mrf.mxu0
    %659 = vdwg.mxu0
    %v660 = vld [vmem:[%s6] sm:$0x1]
    %v662 = vlaneseq
    %v663 = vshrl.u32 %v662, 7
    %v664 = vsub.s32 0, %v663
    %v665 = vrot.slane %v660, %v664
    %vm667 = vcmask 719872
    %v669 = vsel %vm667, %v324, 0
    %v672 = vsel %vm667, %v326, 0
    %v675 = vsel %vm667, %v328, 0
    %v678 = vsel %vm667, %v330, 0
    %v681 = vsel %vm667, %v332, 0
    %v684 = vsel %vm667, %v334, 0
    %v687 = vsel %vm667, %v336, 0
    %v690 = vsel %vm667, %v338, 0
    %v693 = vsel %vm667, %v340, 0
    %v696 = vsel %vm667, %v342, 0
    %v699 = vsel %vm667, %v344, 0
    %v702 = vsel %vm667, %v346, 0
    %v705 = vsel %vm667, %v348, 0
    %v708 = vsel %vm667, %v350, 0
    %v711 = vsel %vm667, %v352, 0
    %v714 = vsel %vm667, %v354, 0
    %v717 = vsel %vm667, %v356, 0
    %v720 = vsel %vm667, %v358, 0
    %v723 = vsel %vm667, %v360, 0
    %v726 = vsel %vm667, %v362, 0
    %v729 = vsel %vm667, %v364, 0
    %v732 = vsel %vm667, %v366, 0
    %v735 = vsel %vm667, %v368, 0
    %v738 = vsel %vm667, %v370, 0
    %v741 = vsel %vm667, %v372, 0
    %v744 = vsel %vm667, %v374, 0
    %v747 = vsel %vm667, %v376, 0
    %749 = vmatprep.subr.mxu0 0.0
    %750 = vmatpush1.msra.mxu0 %v602
    %751 = vmatprep.subr.mxu0 0.0
    %752 = vmatpush1.msra.mxu0 %v597
    %753 = vmatprep.subr.mxu0 0.0
    %754 = vmatpush1.msra.mxu0 %v592
    %755 = vmatprep.subr.mxu0 0.0
    %756 = vmatpush1.msra.mxu0 %v587
    %757 = vmatprep.subr.mxu0 0.0
    %758 = vmatpush1.msra.mxu0 %v582
    %759 = vmatprep.subr.mxu0 0.0
    %760 = vmatpush1.msra.mxu0 %v577
    %761 = vmatprep.subr.mxu0 0.0
    %762 = vmatpush1.msra.mxu0 %v572
    %763 = vmatprep.subr.mxu0 0.0
    %764 = vmatpush1.msra.mxu0 %v567
    %765 = vmatprep.subr.mxu0 0.0
    %766 = vmatpush1.msra.mxu0 %v562
    %767 = vmatprep.subr.mxu0 0.0
    %768 = vmatpush1.msra.mxu0 %v557
    %769 = vmatprep.subr.mxu0 0.0
    %770 = vmatpush1.msra.mxu0 %v552
    %771 = vmatprep.subr.mxu0 0.0
    %772 = vmatpush1.msra.mxu0 %v547
    %773 = vmatprep.subr.mxu0 0.0
    %774 = vmatpush1.msra.mxu0 %v542
    %775 = vmatprep.subr.mxu0 0.0
    %776 = vmatpush1.msra.mxu0 %v537
    %777 = vmatprep.subr.mxu0 0.0
    %778 = vmatpush1.msra.mxu0 %v532
    %779 = vmatprep.subr.mxu0 0.0
    %780 = vmatpush1.msra.mxu0 %v527
    %781 = vmatprep.subr.mxu0 0.0
    %782 = vmatpush2.msra.mxu0 0.0
    %783 = vmatprep.subr.mxu0 0.0
    %784 = vmatpush2.msra.mxu0 0.0
    %785 = vmatprep.subr.mxu0 0.0
    %786 = vmatpush2.msra.mxu0 0.0
    %787 = vmatprep.subr.mxu0 0.0
    %788 = vmatpush2.msra.mxu0 0.0
    %789 = vmatprep.subr.mxu0 0.0
    %790 = vmatpush2.msra.mxu0 0.0
    %791 = vmatprep.subr.mxu0 0.0
    %792 = vmatpush2.msra.mxu0 %v657
    %793 = vmatprep.subr.mxu0 0.0
    %794 = vmatpush2.msra.mxu0 %v652
    %795 = vmatprep.subr.mxu0 0.0
    %796 = vmatpush2.msra.mxu0 %v647
    %797 = vmatprep.subr.mxu0 0.0
    %798 = vmatpush2.msra.mxu0 %v642
    %799 = vmatprep.subr.mxu0 0.0
    %800 = vmatpush2.msra.mxu0 %v637
    %801 = vmatprep.subr.mxu0 0.0
    %802 = vmatpush2.msra.mxu0 %v632
    %803 = vmatprep.subr.mxu0 0.0
    %804 = vmatpush2.msra.mxu0 %v627
    %805 = vmatprep.subr.mxu0 0.0
    %806 = vmatpush2.msra.mxu0 %v622
    %807 = vmatprep.subr.mxu0 0.0
    %808 = vmatpush2.msra.mxu0 %v617
    %809 = vmatprep.subr.mxu0 0.0
    %810 = vmatpush2.msra.mxu0 %v612
    %811 = vmatprep.subr.mxu0 0.0
    %812 = vmatpush2.msra.mxu0 %v607
    %813 = vmatprep.mubr.f32.mxu0 %v669
    %814 = vmatmul.mubr.f32.gmra.mxu0 %v323
    %v815 = vpop.f32.mrf.mxu0
    %v816 = vadd.f32 %v665, %v815
    %v817 = vpop.f32.mrf.mxu0
    %818 = vmatprep.mubr.f32.mxu0 %v672
    %819 = vmatmul.mubr.f32.gmra.mxu0 %v325
    %v820 = vpop.f32.mrf.mxu0
    %v821 = vadd.f32 %v665, %v820
    %v822 = vpop.f32.mrf.mxu0
    %823 = vmatprep.mubr.f32.mxu0 %v675
    %824 = vmatmul.mubr.f32.gmra.mxu0 %v327
    %v825 = vpop.f32.mrf.mxu0
    %v826 = vadd.f32 %v665, %v825
    %v827 = vpop.f32.mrf.mxu0
    %828 = vmatprep.mubr.f32.mxu0 %v678
    %829 = vmatmul.mubr.f32.gmra.mxu0 %v329
    %v830 = vpop.f32.mrf.mxu0
    %v831 = vadd.f32 %v665, %v830
    %v832 = vpop.f32.mrf.mxu0
    %833 = vmatprep.mubr.f32.mxu0 %v681
    %834 = vmatmul.mubr.f32.gmra.mxu0 %v331
    %v835 = vpop.f32.mrf.mxu0
    %v836 = vadd.f32 %v665, %v835
    %v837 = vpop.f32.mrf.mxu0
    %838 = vmatprep.mubr.f32.mxu0 %v684
    %839 = vmatmul.mubr.f32.gmra.mxu0 %v333
    %v840 = vpop.f32.mrf.mxu0
    %v841 = vadd.f32 %v665, %v840
    %v842 = vpop.f32.mrf.mxu0
    %843 = vmatprep.mubr.f32.mxu0 %v687
    %844 = vmatmul.mubr.f32.gmra.mxu0 %v335
    %v845 = vpop.f32.mrf.mxu0
    %v846 = vadd.f32 %v665, %v845
    %v847 = vpop.f32.mrf.mxu0
    %848 = vmatprep.mubr.f32.mxu0 %v690
    %849 = vmatmul.mubr.f32.gmra.mxu0 %v337
    %v850 = vpop.f32.mrf.mxu0
    %v851 = vadd.f32 %v665, %v850
    %v852 = vpop.f32.mrf.mxu0
    %853 = vmatprep.mubr.f32.mxu0 %v693
    %854 = vmatmul.mubr.f32.gmra.mxu0 %v339
    %v855 = vpop.f32.mrf.mxu0
    %v856 = vadd.f32 %v665, %v855
    %v857 = vpop.f32.mrf.mxu0
    %858 = vmatprep.mubr.f32.mxu0 %v696
    %859 = vmatmul.mubr.f32.gmra.mxu0 %v341
    %v860 = vpop.f32.mrf.mxu0
    %v861 = vadd.f32 %v665, %v860
    %v862 = vpop.f32.mrf.mxu0
    %863 = vmatprep.mubr.f32.mxu0 %v699
    %864 = vmatmul.mubr.f32.gmra.mxu0 %v343
    %v865 = vpop.f32.mrf.mxu0
    %v866 = vadd.f32 %v665, %v865
    %v867 = vpop.f32.mrf.mxu0
    %868 = vmatprep.mubr.f32.mxu0 %v702
    %869 = vmatmul.mubr.f32.gmra.mxu0 %v345
    %v870 = vpop.f32.mrf.mxu0
    %v871 = vadd.f32 %v665, %v870
    %v872 = vpop.f32.mrf.mxu0
    %873 = vmatprep.mubr.f32.mxu0 %v705
    %874 = vmatmul.mubr.f32.gmra.mxu0 %v347
    %v875 = vpop.f32.mrf.mxu0
    %v876 = vadd.f32 %v665, %v875
    %v877 = vpop.f32.mrf.mxu0
    %878 = vmatprep.mubr.f32.mxu0 %v708
    %879 = vmatmul.mubr.f32.gmra.mxu0 %v349
    %v880 = vpop.f32.mrf.mxu0
    %v881 = vadd.f32 %v665, %v880
    %v882 = vpop.f32.mrf.mxu0
    %883 = vmatprep.mubr.f32.mxu0 %v711
    %884 = vmatmul.mubr.f32.gmra.mxu0 %v351
    %v885 = vpop.f32.mrf.mxu0
    %v886 = vadd.f32 %v665, %v885
    %v887 = vpop.f32.mrf.mxu0
    %888 = vmatprep.mubr.f32.mxu0 %v714
    %889 = vmatmul.mubr.f32.gmra.mxu0 %v353
    %v890 = vpop.f32.mrf.mxu0
    %v891 = vadd.f32 %v665, %v890
    %v892 = vpop.f32.mrf.mxu0
    %893 = vmatprep.mubr.f32.mxu0 %v717
    %894 = vmatmul.mubr.f32.gmra.mxu0 %v355
    %v895 = vpop.f32.mrf.mxu0
    %v896 = vadd.f32 %v665, %v895
    %v897 = vpop.f32.mrf.mxu0
    %898 = vmatprep.mubr.f32.mxu0 %v720
    %899 = vmatmul.mubr.f32.gmra.mxu0 %v357
    %v900 = vpop.f32.mrf.mxu0
    %v901 = vadd.f32 %v665, %v900
    %v902 = vpop.f32.mrf.mxu0
    %903 = vmatprep.mubr.f32.mxu0 %v723
    %904 = vmatmul.mubr.f32.gmra.mxu0 %v359
    %v905 = vpop.f32.mrf.mxu0
    %v906 = vadd.f32 %v665, %v905
    %v907 = vpop.f32.mrf.mxu0
    %908 = vmatprep.mubr.f32.mxu0 %v726
    %909 = vmatmul.mubr.f32.gmra.mxu0 %v361
    %v910 = vpop.f32.mrf.mxu0
    %v911 = vadd.f32 %v665, %v910
    %v912 = vpop.f32.mrf.mxu0
    %913 = vmatprep.mubr.f32.mxu0 %v729
    %914 = vmatmul.mubr.f32.gmra.mxu0 %v363
    %v915 = vpop.f32.mrf.mxu0
    %v916 = vadd.f32 %v665, %v915
    %v917 = vpop.f32.mrf.mxu0
    %918 = vmatprep.mubr.f32.mxu0 %v732
    %919 = vmatmul.mubr.f32.gmra.mxu0 %v365
    %v920 = vpop.f32.mrf.mxu0
    %v921 = vadd.f32 %v665, %v920
    %v922 = vpop.f32.mrf.mxu0
    %923 = vmatprep.mubr.f32.mxu0 %v735
    %924 = vmatmul.mubr.f32.gmra.mxu0 %v367
    %v925 = vpop.f32.mrf.mxu0
    %v926 = vadd.f32 %v665, %v925
    %v927 = vpop.f32.mrf.mxu0
    %928 = vmatprep.mubr.f32.mxu0 %v738
    %929 = vmatmul.mubr.f32.gmra.mxu0 %v369
    %v930 = vpop.f32.mrf.mxu0
    %v931 = vadd.f32 %v665, %v930
    %v932 = vpop.f32.mrf.mxu0
    %933 = vmatprep.mubr.f32.mxu0 %v741
    %934 = vmatmul.mubr.f32.gmra.mxu0 %v371
    %v935 = vpop.f32.mrf.mxu0
    %v936 = vadd.f32 %v665, %v935
    %v937 = vpop.f32.mrf.mxu0
    %938 = vmatprep.mubr.f32.mxu0 %v744
    %939 = vmatmul.mubr.f32.gmra.mxu0 %v373
    %v940 = vpop.f32.mrf.mxu0
    %v941 = vadd.f32 %v665, %v940
    %v942 = vpop.f32.mrf.mxu0
    %943 = vmatprep.mubr.f32.mxu0 %v747
    %944 = vmatmul.mubr.f32.gmra.mxu0 %v375
    %v945 = vpop.f32.mrf.mxu0
    %v946 = vadd.f32 %v665, %v945
    %v947 = vpop.f32.mrf.mxu0
    %948 = vdwg.mxu0
    %v949 = vld [vmem:[%s7] sm:$0xf]
    %vm950 = vcmask 31744
    %v952 = vsel %vm950, %v816, 0
    %v955 = vsel %vm950, %v821, 0
    %v958 = vsel %vm950, %v826, 0
    %v961 = vsel %vm950, %v831, 0
    %v964 = vsel %vm950, %v836, 0
    %v967 = vsel %vm950, %v841, 0
    %v970 = vsel %vm950, %v846, 0
    %v973 = vsel %vm950, %v851, 0
    %v976 = vsel %vm950, %v856, 0
    %v979 = vsel %vm950, %v861, 0
    %v982 = vsel %vm950, %v866, 0
    %v985 = vsel %vm950, %v871, 0
    %v988 = vsel %vm950, %v876, 0
    %v991 = vsel %vm950, %v881, 0
    %v994 = vsel %vm950, %v886, 0
    %v997 = vsel %vm950, %v891, 0
    %v1000 = vsel %vm950, %v896, 0
    %v1003 = vsel %vm950, %v901, 0
    %v1006 = vsel %vm950, %v906, 0
    %v1009 = vsel %vm950, %v911, 0
    %v1012 = vsel %vm950, %v916, 0
    %v1015 = vsel %vm950, %v921, 0
    %v1018 = vsel %vm950, %v926, 0
    %v1021 = vsel %vm950, %v931, 0
    %v1024 = vsel %vm950, %v936, 0
    %v1027 = vsel %vm950, %v941, 0
    %v1030 = vsel %vm950, %v946, 0
    %vm1032 = vcmask 1043456
    %v1034 = vsel %vm1032, %v949, 0
    %1036 = vmatprep.subr.mxu0 0.0
    %1037 = vmatpush1.msra.mxu0 0.0
    %1038 = vmatprep.subr.mxu0 0.0
    %1039 = vmatpush1.msra.mxu0 0.0
    %1040 = vmatprep.subr.mxu0 0.0
    %1041 = vmatpush1.msra.mxu0 0.0
    %1042 = vmatprep.subr.mxu0 0.0
    %1043 = vmatpush1.msra.mxu0 0.0
    %1044 = vmatprep.subr.mxu0 0.0
    %1045 = vmatpush1.msra.mxu0 0.0
    %1046 = vmatprep.subr.mxu0 0.0
    %1047 = vmatpush1.msra.mxu0 0.0
    %1048 = vmatprep.subr.mxu0 0.0
    %1049 = vmatpush1.msra.mxu0 0.0
    %1050 = vmatprep.subr.mxu0 0.0
    %1051 = vmatpush1.msra.mxu0 0.0
    %1052 = vmatprep.subr.mxu0 0.0
    %1053 = vmatpush1.msra.mxu0 0.0
    %1054 = vmatprep.subr.mxu0 0.0
    %1055 = vmatpush1.msra.mxu0 0.0
    %1056 = vmatprep.subr.mxu0 0.0
    %1057 = vmatpush1.msra.mxu0 0.0
    %1058 = vmatprep.subr.mxu0 0.0
    %1059 = vmatpush1.msra.mxu0 0.0
    %1060 = vmatprep.subr.mxu0 0.0
    %1061 = vmatpush1.msra.mxu0 0.0
    %1062 = vmatprep.subr.mxu0 0.0
    %1063 = vmatpush1.msra.mxu0 0.0
    %1064 = vmatprep.subr.mxu0 0.0
    %1065 = vmatpush1.msra.mxu0 0.0
    %1066 = vmatprep.subr.mxu0 0.0
    %1067 = vmatpush1.msra.mxu0 %v1034
    %1068 = vmatprep.subr.mxu0 0.0
    %1069 = vmatpush2.msra.mxu0 0.0
    %1070 = vmatprep.subr.mxu0 0.0
    %1071 = vmatpush2.msra.mxu0 0.0
    %1072 = vmatprep.subr.mxu0 0.0
    %1073 = vmatpush2.msra.mxu0 0.0
    %1074 = vmatprep.subr.mxu0 0.0
    %1075 = vmatpush2.msra.mxu0 0.0
    %1076 = vmatprep.subr.mxu0 0.0
    %1077 = vmatpush2.msra.mxu0 0.0
    %1078 = vmatprep.subr.mxu0 0.0
    %1079 = vmatpush2.msra.mxu0 0.0
    %1080 = vmatprep.subr.mxu0 0.0
    %1081 = vmatpush2.msra.mxu0 0.0
    %1082 = vmatprep.subr.mxu0 0.0
    %1083 = vmatpush2.msra.mxu0 0.0
    %1084 = vmatprep.subr.mxu0 0.0
    %1085 = vmatpush2.msra.mxu0 0.0
    %1086 = vmatprep.subr.mxu0 0.0
    %1087 = vmatpush2.msra.mxu0 0.0
    %1088 = vmatprep.subr.mxu0 0.0
    %1089 = vmatpush2.msra.mxu0 0.0
    %1090 = vmatprep.subr.mxu0 0.0
    %1091 = vmatpush2.msra.mxu0 0.0
    %1092 = vmatprep.subr.mxu0 0.0
    %1093 = vmatpush2.msra.mxu0 0.0
    %1094 = vmatprep.subr.mxu0 0.0
    %1095 = vmatpush2.msra.mxu0 0.0
    %1096 = vmatprep.subr.mxu0 0.0
    %1097 = vmatpush2.msra.mxu0 0.0
    %1098 = vmatprep.subr.mxu0 0.0
    %1099 = vmatpush2.msra.mxu0 0.0
    %1100 = vmatprep.mubr.f32.mxu0 0.0
    %1101 = vmatmul.mubr.f32.gmra.mxu0 %v952
    %v1102 = vpop.f32.mrf.mxu0
    %v1103 = vadd.f32 0.0, %v1102
    %v1104 = vpop.f32.mrf.mxu0
    %1105 = vmatprep.mubr.f32.mxu0 0.0
    %1106 = vmatmul.mubr.f32.gmra.mxu0 %v955
    %v1107 = vpop.f32.mrf.mxu0
    %v1108 = vadd.f32 0.0, %v1107
    %v1109 = vpop.f32.mrf.mxu0
    %1110 = vmatprep.mubr.f32.mxu0 0.0
    %1111 = vmatmul.mubr.f32.gmra.mxu0 %v958
    %v1112 = vpop.f32.mrf.mxu0
    %v1113 = vadd.f32 0.0, %v1112
    %v1114 = vpop.f32.mrf.mxu0
    %1115 = vmatprep.mubr.f32.mxu0 0.0
    %1116 = vmatmul.mubr.f32.gmra.mxu0 %v961
    %v1117 = vpop.f32.mrf.mxu0
    %v1118 = vadd.f32 0.0, %v1117
    %v1119 = vpop.f32.mrf.mxu0
    %1120 = vmatprep.mubr.f32.mxu0 0.0
    %1121 = vmatmul.mubr.f32.gmra.mxu0 %v964
    %v1122 = vpop.f32.mrf.mxu0
    %v1123 = vadd.f32 0.0, %v1122
    %v1124 = vpop.f32.mrf.mxu0
    %1125 = vmatprep.mubr.f32.mxu0 0.0
    %1126 = vmatmul.mubr.f32.gmra.mxu0 %v967
    %v1127 = vpop.f32.mrf.mxu0
    %v1128 = vadd.f32 0.0, %v1127
    %v1129 = vpop.f32.mrf.mxu0
    %1130 = vmatprep.mubr.f32.mxu0 0.0
    %1131 = vmatmul.mubr.f32.gmra.mxu0 %v970
    %v1132 = vpop.f32.mrf.mxu0
    %v1133 = vadd.f32 0.0, %v1132
    %v1134 = vpop.f32.mrf.mxu0
    %1135 = vmatprep.mubr.f32.mxu0 0.0
    %1136 = vmatmul.mubr.f32.gmra.mxu0 %v973
    %v1137 = vpop.f32.mrf.mxu0
    %v1138 = vadd.f32 0.0, %v1137
    %v1139 = vpop.f32.mrf.mxu0
    %1140 = vmatprep.mubr.f32.mxu0 0.0
    %1141 = vmatmul.mubr.f32.gmra.mxu0 %v976
    %v1142 = vpop.f32.mrf.mxu0
    %v1143 = vadd.f32 0.0, %v1142
    %v1144 = vpop.f32.mrf.mxu0
    %1145 = vmatprep.mubr.f32.mxu0 0.0
    %1146 = vmatmul.mubr.f32.gmra.mxu0 %v979
    %v1147 = vpop.f32.mrf.mxu0
    %v1148 = vadd.f32 0.0, %v1147
    %v1149 = vpop.f32.mrf.mxu0
    %1150 = vmatprep.mubr.f32.mxu0 0.0
    %1151 = vmatmul.mubr.f32.gmra.mxu0 %v982
    %v1152 = vpop.f32.mrf.mxu0
    %v1153 = vadd.f32 0.0, %v1152
    %v1154 = vpop.f32.mrf.mxu0
    %1155 = vmatprep.mubr.f32.mxu0 0.0
    %1156 = vmatmul.mubr.f32.gmra.mxu0 %v985
    %v1157 = vpop.f32.mrf.mxu0
    %v1158 = vadd.f32 0.0, %v1157
    %v1159 = vpop.f32.mrf.mxu0
    %1160 = vmatprep.mubr.f32.mxu0 0.0
    %1161 = vmatmul.mubr.f32.gmra.mxu0 %v988
    %v1162 = vpop.f32.mrf.mxu0
    %v1163 = vadd.f32 0.0, %v1162
    %v1164 = vpop.f32.mrf.mxu0
    %1165 = vmatprep.mubr.f32.mxu0 0.0
    %1166 = vmatmul.mubr.f32.gmra.mxu0 %v991
    %v1167 = vpop.f32.mrf.mxu0
    %v1168 = vadd.f32 0.0, %v1167
    %v1169 = vpop.f32.mrf.mxu0
    %1170 = vmatprep.mubr.f32.mxu0 0.0
    %1171 = vmatmul.mubr.f32.gmra.mxu0 %v994
    %v1172 = vpop.f32.mrf.mxu0
    %v1173 = vadd.f32 0.0, %v1172
    %v1174 = vpop.f32.mrf.mxu0
    %1175 = vmatprep.mubr.f32.mxu0 0.0
    %1176 = vmatmul.mubr.f32.gmra.mxu0 %v997
    %v1177 = vpop.f32.mrf.mxu0
    %v1178 = vadd.f32 0.0, %v1177
    %v1179 = vpop.f32.mrf.mxu0
    %1180 = vmatprep.mubr.f32.mxu0 0.0
    %1181 = vmatmul.mubr.f32.gmra.mxu0 %v1000
    %v1182 = vpop.f32.mrf.mxu0
    %v1183 = vadd.f32 0.0, %v1182
    %v1184 = vpop.f32.mrf.mxu0
    %1185 = vmatprep.mubr.f32.mxu0 0.0
    %1186 = vmatmul.mubr.f32.gmra.mxu0 %v1003
    %v1187 = vpop.f32.mrf.mxu0
    %v1188 = vadd.f32 0.0, %v1187
    %v1189 = vpop.f32.mrf.mxu0
    %1190 = vmatprep.mubr.f32.mxu0 0.0
    %1191 = vmatmul.mubr.f32.gmra.mxu0 %v1006
    %v1192 = vpop.f32.mrf.mxu0
    %v1193 = vadd.f32 0.0, %v1192
    %v1194 = vpop.f32.mrf.mxu0
    %1195 = vmatprep.mubr.f32.mxu0 0.0
    %1196 = vmatmul.mubr.f32.gmra.mxu0 %v1009
    %v1197 = vpop.f32.mrf.mxu0
    %v1198 = vadd.f32 0.0, %v1197
    %v1199 = vpop.f32.mrf.mxu0
    %1200 = vmatprep.mubr.f32.mxu0 0.0
    %1201 = vmatmul.mubr.f32.gmra.mxu0 %v1012
    %v1202 = vpop.f32.mrf.mxu0
    %v1203 = vadd.f32 0.0, %v1202
    %v1204 = vpop.f32.mrf.mxu0
    %1205 = vmatprep.mubr.f32.mxu0 0.0
    %1206 = vmatmul.mubr.f32.gmra.mxu0 %v1015
    %v1207 = vpop.f32.mrf.mxu0
    %v1208 = vadd.f32 0.0, %v1207
    %v1209 = vpop.f32.mrf.mxu0
    %1210 = vmatprep.mubr.f32.mxu0 0.0
    %1211 = vmatmul.mubr.f32.gmra.mxu0 %v1018
    %v1212 = vpop.f32.mrf.mxu0
    %v1213 = vadd.f32 0.0, %v1212
    %v1214 = vpop.f32.mrf.mxu0
    %1215 = vmatprep.mubr.f32.mxu0 0.0
    %1216 = vmatmul.mubr.f32.gmra.mxu0 %v1021
    %v1217 = vpop.f32.mrf.mxu0
    %v1218 = vadd.f32 0.0, %v1217
    %v1219 = vpop.f32.mrf.mxu0
    %1220 = vmatprep.mubr.f32.mxu0 0.0
    %1221 = vmatmul.mubr.f32.gmra.mxu0 %v1024
    %v1222 = vpop.f32.mrf.mxu0
    %v1223 = vadd.f32 0.0, %v1222
    %v1224 = vpop.f32.mrf.mxu0
    %1225 = vmatprep.mubr.f32.mxu0 0.0
    %1226 = vmatmul.mubr.f32.gmra.mxu0 %v1027
    %v1227 = vpop.f32.mrf.mxu0
    %v1228 = vadd.f32 0.0, %v1227
    %v1229 = vpop.f32.mrf.mxu0
    %1230 = vmatprep.mubr.f32.mxu0 0.0
    %1231 = vmatmul.mubr.f32.gmra.mxu0 %v1030
    %v1232 = vpop.f32.mrf.mxu0
    %v1233 = vadd.f32 0.0, %v1232
    %v1234 = vpop.f32.mrf.mxu0
    %1235 = vdwg.mxu0
    %v1236 = vld [vmem:[%s8] sm:$0x1]
    %v1238 = vlaneseq
    %v1239 = vshrl.u32 %v1238, 7
    %v1240 = vsub.s32 0, %v1239
    %v1241 = vrot.slane %v1236, %v1240
    %1243 = vmatprep.subr.mxu0 0.0
    %1244 = vmatpush1.msra.mxu0 %v1178
    %1245 = vmatprep.subr.mxu0 0.0
    %1246 = vmatpush1.msra.mxu0 %v1173
    %1247 = vmatprep.subr.mxu0 0.0
    %1248 = vmatpush1.msra.mxu0 %v1168
    %1249 = vmatprep.subr.mxu0 0.0
    %1250 = vmatpush1.msra.mxu0 %v1163
    %1251 = vmatprep.subr.mxu0 0.0
    %1252 = vmatpush1.msra.mxu0 %v1158
    %1253 = vmatprep.subr.mxu0 0.0
    %1254 = vmatpush1.msra.mxu0 %v1153
    %1255 = vmatprep.subr.mxu0 0.0
    %1256 = vmatpush1.msra.mxu0 %v1148
    %1257 = vmatprep.subr.mxu0 0.0
    %1258 = vmatpush1.msra.mxu0 %v1143
    %1259 = vmatprep.subr.mxu0 0.0
    %1260 = vmatpush1.msra.mxu0 %v1138
    %1261 = vmatprep.subr.mxu0 0.0
    %1262 = vmatpush1.msra.mxu0 %v1133
    %1263 = vmatprep.subr.mxu0 0.0
    %1264 = vmatpush1.msra.mxu0 %v1128
    %1265 = vmatprep.subr.mxu0 0.0
    %1266 = vmatpush1.msra.mxu0 %v1123
    %1267 = vmatprep.subr.mxu0 0.0
    %1268 = vmatpush1.msra.mxu0 %v1118
    %1269 = vmatprep.subr.mxu0 0.0
    %1270 = vmatpush1.msra.mxu0 %v1113
    %1271 = vmatprep.subr.mxu0 0.0
    %1272 = vmatpush1.msra.mxu0 %v1108
    %1273 = vmatprep.subr.mxu0 0.0
    %1274 = vmatpush1.msra.mxu0 %v1103
    %1275 = vmatprep.subr.mxu0 0.0
    %1276 = vmatpush2.msra.mxu0 0.0
    %1277 = vmatprep.subr.mxu0 0.0
    %1278 = vmatpush2.msra.mxu0 0.0
    %1279 = vmatprep.subr.mxu0 0.0
    %1280 = vmatpush2.msra.mxu0 0.0
    %1281 = vmatprep.subr.mxu0 0.0
    %1282 = vmatpush2.msra.mxu0 0.0
    %1283 = vmatprep.subr.mxu0 0.0
    %1284 = vmatpush2.msra.mxu0 0.0
    %1285 = vmatprep.subr.mxu0 0.0
    %1286 = vmatpush2.msra.mxu0 %v1233
    %1287 = vmatprep.subr.mxu0 0.0
    %1288 = vmatpush2.msra.mxu0 %v1228
    %1289 = vmatprep.subr.mxu0 0.0
    %1290 = vmatpush2.msra.mxu0 %v1223
    %1291 = vmatprep.subr.mxu0 0.0
    %1292 = vmatpush2.msra.mxu0 %v1218
    %1293 = vmatprep.subr.mxu0 0.0
    %1294 = vmatpush2.msra.mxu0 %v1213
    %1295 = vmatprep.subr.mxu0 0.0
    %1296 = vmatpush2.msra.mxu0 %v1208
    %1297 = vmatprep.subr.mxu0 0.0
    %1298 = vmatpush2.msra.mxu0 %v1203
    %1299 = vmatprep.subr.mxu0 0.0
    %1300 = vmatpush2.msra.mxu0 %v1198
    %1301 = vmatprep.subr.mxu0 0.0
    %1302 = vmatpush2.msra.mxu0 %v1193
    %1303 = vmatprep.subr.mxu0 0.0
    %1304 = vmatpush2.msra.mxu0 %v1188
    %1305 = vmatprep.subr.mxu0 0.0
    %1306 = vmatpush2.msra.mxu0 %v1183
    %1307 = vmatprep.mubr.f32.mxu0 %v669
    %1308 = vmatmul.mubr.f32.gmra.mxu0 %v323
    %v1309 = vpop.f32.mrf.mxu0
    %v1310 = vadd.f32 %v1241, %v1309
    %v1311 = vpop.f32.mrf.mxu0
    %1312 = vmatprep.mubr.f32.mxu0 %v672
    %1313 = vmatmul.mubr.f32.gmra.mxu0 %v325
    %v1314 = vpop.f32.mrf.mxu0
    %v1315 = vadd.f32 %v1241, %v1314
    %v1316 = vpop.f32.mrf.mxu0
    %1317 = vmatprep.mubr.f32.mxu0 %v675
    %1318 = vmatmul.mubr.f32.gmra.mxu0 %v327
    %v1319 = vpop.f32.mrf.mxu0
    %v1320 = vadd.f32 %v1241, %v1319
    %v1321 = vpop.f32.mrf.mxu0
    %1322 = vmatprep.mubr.f32.mxu0 %v678
    %1323 = vmatmul.mubr.f32.gmra.mxu0 %v329
    %v1324 = vpop.f32.mrf.mxu0
    %v1325 = vadd.f32 %v1241, %v1324
    %v1326 = vpop.f32.mrf.mxu0
    %1327 = vmatprep.mubr.f32.mxu0 %v681
    %1328 = vmatmul.mubr.f32.gmra.mxu0 %v331
    %v1329 = vpop.f32.mrf.mxu0
    %v1330 = vadd.f32 %v1241, %v1329
    %v1331 = vpop.f32.mrf.mxu0
    %1332 = vmatprep.mubr.f32.mxu0 %v684
    %1333 = vmatmul.mubr.f32.gmra.mxu0 %v333
    %v1334 = vpop.f32.mrf.mxu0
    %v1335 = vadd.f32 %v1241, %v1334
    %v1336 = vpop.f32.mrf.mxu0
    %1337 = vmatprep.mubr.f32.mxu0 %v687
    %1338 = vmatmul.mubr.f32.gmra.mxu0 %v335
    %v1339 = vpop.f32.mrf.mxu0
    %v1340 = vadd.f32 %v1241, %v1339
    %v1341 = vpop.f32.mrf.mxu0
    %1342 = vmatprep.mubr.f32.mxu0 %v690
    %1343 = vmatmul.mubr.f32.gmra.mxu0 %v337
    %v1344 = vpop.f32.mrf.mxu0
    %v1345 = vadd.f32 %v1241, %v1344
    %v1346 = vpop.f32.mrf.mxu0
    %1347 = vmatprep.mubr.f32.mxu0 %v693
    %1348 = vmatmul.mubr.f32.gmra.mxu0 %v339
    %v1349 = vpop.f32.mrf.mxu0
    %v1350 = vadd.f32 %v1241, %v1349
    %v1351 = vpop.f32.mrf.mxu0
    %1352 = vmatprep.mubr.f32.mxu0 %v696
    %1353 = vmatmul.mubr.f32.gmra.mxu0 %v341
    %v1354 = vpop.f32.mrf.mxu0
    %v1355 = vadd.f32 %v1241, %v1354
    %v1356 = vpop.f32.mrf.mxu0
    %1357 = vmatprep.mubr.f32.mxu0 %v699
    %1358 = vmatmul.mubr.f32.gmra.mxu0 %v343
    %v1359 = vpop.f32.mrf.mxu0
    %v1360 = vadd.f32 %v1241, %v1359
    %v1361 = vpop.f32.mrf.mxu0
    %1362 = vmatprep.mubr.f32.mxu0 %v702
    %1363 = vmatmul.mubr.f32.gmra.mxu0 %v345
    %v1364 = vpop.f32.mrf.mxu0
    %v1365 = vadd.f32 %v1241, %v1364
    %v1366 = vpop.f32.mrf.mxu0
    %1367 = vmatprep.mubr.f32.mxu0 %v705
    %1368 = vmatmul.mubr.f32.gmra.mxu0 %v347
    %v1369 = vpop.f32.mrf.mxu0
    %v1370 = vadd.f32 %v1241, %v1369
    %v1371 = vpop.f32.mrf.mxu0
    %1372 = vmatprep.mubr.f32.mxu0 %v708
    %1373 = vmatmul.mubr.f32.gmra.mxu0 %v349
    %v1374 = vpop.f32.mrf.mxu0
    %v1375 = vadd.f32 %v1241, %v1374
    %v1376 = vpop.f32.mrf.mxu0
    %1377 = vmatprep.mubr.f32.mxu0 %v711
    %1378 = vmatmul.mubr.f32.gmra.mxu0 %v351
    %v1379 = vpop.f32.mrf.mxu0
    %v1380 = vadd.f32 %v1241, %v1379
    %v1381 = vpop.f32.mrf.mxu0
    %1382 = vmatprep.mubr.f32.mxu0 %v714
    %1383 = vmatmul.mubr.f32.gmra.mxu0 %v353
    %v1384 = vpop.f32.mrf.mxu0
    %v1385 = vadd.f32 %v1241, %v1384
    %v1386 = vpop.f32.mrf.mxu0
    %1387 = vmatprep.mubr.f32.mxu0 %v717
    %1388 = vmatmul.mubr.f32.gmra.mxu0 %v355
    %v1389 = vpop.f32.mrf.mxu0
    %v1390 = vadd.f32 %v1241, %v1389
    %v1391 = vpop.f32.mrf.mxu0
    %1392 = vmatprep.mubr.f32.mxu0 %v720
    %1393 = vmatmul.mubr.f32.gmra.mxu0 %v357
    %v1394 = vpop.f32.mrf.mxu0
    %v1395 = vadd.f32 %v1241, %v1394
    %v1396 = vpop.f32.mrf.mxu0
    %1397 = vmatprep.mubr.f32.mxu0 %v723
    %1398 = vmatmul.mubr.f32.gmra.mxu0 %v359
    %v1399 = vpop.f32.mrf.mxu0
    %v1400 = vadd.f32 %v1241, %v1399
    %v1401 = vpop.f32.mrf.mxu0
    %1402 = vmatprep.mubr.f32.mxu0 %v726
    %1403 = vmatmul.mubr.f32.gmra.mxu0 %v361
    %v1404 = vpop.f32.mrf.mxu0
    %v1405 = vadd.f32 %v1241, %v1404
    %v1406 = vpop.f32.mrf.mxu0
    %1407 = vmatprep.mubr.f32.mxu0 %v729
    %1408 = vmatmul.mubr.f32.gmra.mxu0 %v363
    %v1409 = vpop.f32.mrf.mxu0
    %v1410 = vadd.f32 %v1241, %v1409
    %v1411 = vpop.f32.mrf.mxu0
    %1412 = vmatprep.mubr.f32.mxu0 %v732
    %1413 = vmatmul.mubr.f32.gmra.mxu0 %v365
    %v1414 = vpop.f32.mrf.mxu0
    %v1415 = vadd.f32 %v1241, %v1414
    %v1416 = vpop.f32.mrf.mxu0
    %1417 = vmatprep.mubr.f32.mxu0 %v735
    %1418 = vmatmul.mubr.f32.gmra.mxu0 %v367
    %v1419 = vpop.f32.mrf.mxu0
    %v1420 = vadd.f32 %v1241, %v1419
    %v1421 = vpop.f32.mrf.mxu0
    %1422 = vmatprep.mubr.f32.mxu0 %v738
    %1423 = vmatmul.mubr.f32.gmra.mxu0 %v369
    %v1424 = vpop.f32.mrf.mxu0
    %v1425 = vadd.f32 %v1241, %v1424
    %v1426 = vpop.f32.mrf.mxu0
    %1427 = vmatprep.mubr.f32.mxu0 %v741
    %1428 = vmatmul.mubr.f32.gmra.mxu0 %v371
    %v1429 = vpop.f32.mrf.mxu0
    %v1430 = vadd.f32 %v1241, %v1429
    %v1431 = vpop.f32.mrf.mxu0
    %1432 = vmatprep.mubr.f32.mxu0 %v744
    %1433 = vmatmul.mubr.f32.gmra.mxu0 %v373
    %v1434 = vpop.f32.mrf.mxu0
    %v1435 = vadd.f32 %v1241, %v1434
    %v1436 = vpop.f32.mrf.mxu0
    %1437 = vmatprep.mubr.f32.mxu0 %v747
    %1438 = vmatmul.mubr.f32.gmra.mxu0 %v375
    %v1439 = vpop.f32.mrf.mxu0
    %v1440 = vadd.f32 %v1241, %v1439
    %v1441 = vpop.f32.mrf.mxu0
    %1442 = vdwg.mxu0
    %v1443 = vld [vmem:[%s9] sm:$0xf]
    %v1445 = vsel %vm950, %v1310, 0
    %v1448 = vsel %vm950, %v1315, 0
    %v1451 = vsel %vm950, %v1320, 0
    %v1454 = vsel %vm950, %v1325, 0
    %v1457 = vsel %vm950, %v1330, 0
    %v1460 = vsel %vm950, %v1335, 0
    %v1463 = vsel %vm950, %v1340, 0
    %v1466 = vsel %vm950, %v1345, 0
    %v1469 = vsel %vm950, %v1350, 0
    %v1472 = vsel %vm950, %v1355, 0
    %v1475 = vsel %vm950, %v1360, 0
    %v1478 = vsel %vm950, %v1365, 0
    %v1481 = vsel %vm950, %v1370, 0
    %v1484 = vsel %vm950, %v1375, 0
    %v1487 = vsel %vm950, %v1380, 0
    %v1490 = vsel %vm950, %v1385, 0
    %v1493 = vsel %vm950, %v1390, 0
    %v1496 = vsel %vm950, %v1395, 0
    %v1499 = vsel %vm950, %v1400, 0
    %v1502 = vsel %vm950, %v1405, 0
    %v1505 = vsel %vm950, %v1410, 0
    %v1508 = vsel %vm950, %v1415, 0
    %v1511 = vsel %vm950, %v1420, 0
    %v1514 = vsel %vm950, %v1425, 0
    %v1517 = vsel %vm950, %v1430, 0
    %v1520 = vsel %vm950, %v1435, 0
    %v1523 = vsel %vm950, %v1440, 0
    %v1526 = vsel %vm1032, %v1443, 0
    %1528 = vmatprep.subr.mxu0 0.0
    %1529 = vmatpush1.msra.mxu0 0.0
    %1530 = vmatprep.subr.mxu0 0.0
    %1531 = vmatpush1.msra.mxu0 0.0
    %1532 = vmatprep.subr.mxu0 0.0
    %1533 = vmatpush1.msra.mxu0 0.0
    %1534 = vmatprep.subr.mxu0 0.0
    %1535 = vmatpush1.msra.mxu0 0.0
    %1536 = vmatprep.subr.mxu0 0.0
    %1537 = vmatpush1.msra.mxu0 0.0
    %1538 = vmatprep.subr.mxu0 0.0
    %1539 = vmatpush1.msra.mxu0 0.0
    %1540 = vmatprep.subr.mxu0 0.0
    %1541 = vmatpush1.msra.mxu0 0.0
    %1542 = vmatprep.subr.mxu0 0.0
    %1543 = vmatpush1.msra.mxu0 0.0
    %1544 = vmatprep.subr.mxu0 0.0
    %1545 = vmatpush1.msra.mxu0 0.0
    %1546 = vmatprep.subr.mxu0 0.0
    %1547 = vmatpush1.msra.mxu0 0.0
    %1548 = vmatprep.subr.mxu0 0.0
    %1549 = vmatpush1.msra.mxu0 0.0
    %1550 = vmatprep.subr.mxu0 0.0
    %1551 = vmatpush1.msra.mxu0 0.0
    %1552 = vmatprep.subr.mxu0 0.0
    %1553 = vmatpush1.msra.mxu0 0.0
    %1554 = vmatprep.subr.mxu0 0.0
    %1555 = vmatpush1.msra.mxu0 0.0
    %1556 = vmatprep.subr.mxu0 0.0
    %1557 = vmatpush1.msra.mxu0 0.0
    %1558 = vmatprep.subr.mxu0 0.0
    %1559 = vmatpush1.msra.mxu0 %v1526
    %1560 = vmatprep.subr.mxu0 0.0
    %1561 = vmatpush2.msra.mxu0 0.0
    %1562 = vmatprep.subr.mxu0 0.0
    %1563 = vmatpush2.msra.mxu0 0.0
    %1564 = vmatprep.subr.mxu0 0.0
    %1565 = vmatpush2.msra.mxu0 0.0
    %1566 = vmatprep.subr.mxu0 0.0
    %1567 = vmatpush2.msra.mxu0 0.0
    %1568 = vmatprep.subr.mxu0 0.0
    %1569 = vmatpush2.msra.mxu0 0.0
    %1570 = vmatprep.subr.mxu0 0.0
    %1571 = vmatpush2.msra.mxu0 0.0
    %1572 = vmatprep.subr.mxu0 0.0
    %1573 = vmatpush2.msra.mxu0 0.0
    %1574 = vmatprep.subr.mxu0 0.0
    %1575 = vmatpush2.msra.mxu0 0.0
    %1576 = vmatprep.subr.mxu0 0.0
    %1577 = vmatpush2.msra.mxu0 0.0
    %1578 = vmatprep.subr.mxu0 0.0
    %1579 = vmatpush2.msra.mxu0 0.0
    %1580 = vmatprep.subr.mxu0 0.0
    %1581 = vmatpush2.msra.mxu0 0.0
    %1582 = vmatprep.subr.mxu0 0.0
    %1583 = vmatpush2.msra.mxu0 0.0
    %1584 = vmatprep.subr.mxu0 0.0
    %1585 = vmatpush2.msra.mxu0 0.0
    %1586 = vmatprep.subr.mxu0 0.0
    %1587 = vmatpush2.msra.mxu0 0.0
    %1588 = vmatprep.subr.mxu0 0.0
    %1589 = vmatpush2.msra.mxu0 0.0
    %1590 = vmatprep.subr.mxu0 0.0
    %1591 = vmatpush2.msra.mxu0 0.0
    %1592 = vmatprep.mubr.f32.mxu0 0.0
    %1593 = vmatmul.mubr.f32.gmra.mxu0 %v1445
    %v1594 = vpop.f32.mrf.mxu0
    %v1595 = vadd.f32 0.0, %v1594
    %v1596 = vpop.f32.mrf.mxu0
    %1597 = vmatprep.mubr.f32.mxu0 0.0
    %1598 = vmatmul.mubr.f32.gmra.mxu0 %v1448
    %v1599 = vpop.f32.mrf.mxu0
    %v1600 = vadd.f32 0.0, %v1599
    %v1601 = vpop.f32.mrf.mxu0
    %1602 = vmatprep.mubr.f32.mxu0 0.0
    %1603 = vmatmul.mubr.f32.gmra.mxu0 %v1451
    %v1604 = vpop.f32.mrf.mxu0
    %v1605 = vadd.f32 0.0, %v1604
    %v1606 = vpop.f32.mrf.mxu0
    %1607 = vmatprep.mubr.f32.mxu0 0.0
    %1608 = vmatmul.mubr.f32.gmra.mxu0 %v1454
    %v1609 = vpop.f32.mrf.mxu0
    %v1610 = vadd.f32 0.0, %v1609
    %v1611 = vpop.f32.mrf.mxu0
    %1612 = vmatprep.mubr.f32.mxu0 0.0
    %1613 = vmatmul.mubr.f32.gmra.mxu0 %v1457
    %v1614 = vpop.f32.mrf.mxu0
    %v1615 = vadd.f32 0.0, %v1614
    %v1616 = vpop.f32.mrf.mxu0
    %1617 = vmatprep.mubr.f32.mxu0 0.0
    %1618 = vmatmul.mubr.f32.gmra.mxu0 %v1460
    %v1619 = vpop.f32.mrf.mxu0
    %v1620 = vadd.f32 0.0, %v1619
    %v1621 = vpop.f32.mrf.mxu0
    %1622 = vmatprep.mubr.f32.mxu0 0.0
    %1623 = vmatmul.mubr.f32.gmra.mxu0 %v1463
    %v1624 = vpop.f32.mrf.mxu0
    %v1625 = vadd.f32 0.0, %v1624
    %v1626 = vpop.f32.mrf.mxu0
    %1627 = vmatprep.mubr.f32.mxu0 0.0
    %1628 = vmatmul.mubr.f32.gmra.mxu0 %v1466
    %v1629 = vpop.f32.mrf.mxu0
    %v1630 = vadd.f32 0.0, %v1629
    %v1631 = vpop.f32.mrf.mxu0
    %1632 = vmatprep.mubr.f32.mxu0 0.0
    %1633 = vmatmul.mubr.f32.gmra.mxu0 %v1469
    %v1634 = vpop.f32.mrf.mxu0
    %v1635 = vadd.f32 0.0, %v1634
    %v1636 = vpop.f32.mrf.mxu0
    %1637 = vmatprep.mubr.f32.mxu0 0.0
    %1638 = vmatmul.mubr.f32.gmra.mxu0 %v1472
    %v1639 = vpop.f32.mrf.mxu0
    %v1640 = vadd.f32 0.0, %v1639
    %v1641 = vpop.f32.mrf.mxu0
    %1642 = vmatprep.mubr.f32.mxu0 0.0
    %1643 = vmatmul.mubr.f32.gmra.mxu0 %v1475
    %v1644 = vpop.f32.mrf.mxu0
    %v1645 = vadd.f32 0.0, %v1644
    %v1646 = vpop.f32.mrf.mxu0
    %1647 = vmatprep.mubr.f32.mxu0 0.0
    %1648 = vmatmul.mubr.f32.gmra.mxu0 %v1478
    %v1649 = vpop.f32.mrf.mxu0
    %v1650 = vadd.f32 0.0, %v1649
    %v1651 = vpop.f32.mrf.mxu0
    %1652 = vmatprep.mubr.f32.mxu0 0.0
    %1653 = vmatmul.mubr.f32.gmra.mxu0 %v1481
    %v1654 = vpop.f32.mrf.mxu0
    %v1655 = vadd.f32 0.0, %v1654
    %v1656 = vpop.f32.mrf.mxu0
    %1657 = vmatprep.mubr.f32.mxu0 0.0
    %1658 = vmatmul.mubr.f32.gmra.mxu0 %v1484
    %v1659 = vpop.f32.mrf.mxu0
    %v1660 = vadd.f32 0.0, %v1659
    %v1661 = vpop.f32.mrf.mxu0
    %1662 = vmatprep.mubr.f32.mxu0 0.0
    %1663 = vmatmul.mubr.f32.gmra.mxu0 %v1487
    %v1664 = vpop.f32.mrf.mxu0
    %v1665 = vadd.f32 0.0, %v1664
    %v1666 = vpop.f32.mrf.mxu0
    %1667 = vmatprep.mubr.f32.mxu0 0.0
    %1668 = vmatmul.mubr.f32.gmra.mxu0 %v1490
    %v1669 = vpop.f32.mrf.mxu0
    %v1670 = vadd.f32 0.0, %v1669
    %v1671 = vpop.f32.mrf.mxu0
    %1672 = vmatprep.mubr.f32.mxu0 0.0
    %1673 = vmatmul.mubr.f32.gmra.mxu0 %v1493
    %v1674 = vpop.f32.mrf.mxu0
    %v1675 = vadd.f32 0.0, %v1674
    %v1676 = vpop.f32.mrf.mxu0
    %1677 = vmatprep.mubr.f32.mxu0 0.0
    %1678 = vmatmul.mubr.f32.gmra.mxu0 %v1496
    %v1679 = vpop.f32.mrf.mxu0
    %v1680 = vadd.f32 0.0, %v1679
    %v1681 = vpop.f32.mrf.mxu0
    %1682 = vmatprep.mubr.f32.mxu0 0.0
    %1683 = vmatmul.mubr.f32.gmra.mxu0 %v1499
    %v1684 = vpop.f32.mrf.mxu0
    %v1685 = vadd.f32 0.0, %v1684
    %v1686 = vpop.f32.mrf.mxu0
    %1687 = vmatprep.mubr.f32.mxu0 0.0
    %1688 = vmatmul.mubr.f32.gmra.mxu0 %v1502
    %v1689 = vpop.f32.mrf.mxu0
    %v1690 = vadd.f32 0.0, %v1689
    %v1691 = vpop.f32.mrf.mxu0
    %1692 = vmatprep.mubr.f32.mxu0 0.0
    %1693 = vmatmul.mubr.f32.gmra.mxu0 %v1505
    %v1694 = vpop.f32.mrf.mxu0
    %v1695 = vadd.f32 0.0, %v1694
    %v1696 = vpop.f32.mrf.mxu0
    %1697 = vmatprep.mubr.f32.mxu0 0.0
    %1698 = vmatmul.mubr.f32.gmra.mxu0 %v1508
    %v1699 = vpop.f32.mrf.mxu0
    %v1700 = vadd.f32 0.0, %v1699
    %v1701 = vpop.f32.mrf.mxu0
    %1702 = vmatprep.mubr.f32.mxu0 0.0
    %1703 = vmatmul.mubr.f32.gmra.mxu0 %v1511
    %v1704 = vpop.f32.mrf.mxu0
    %v1705 = vadd.f32 0.0, %v1704
    %v1706 = vpop.f32.mrf.mxu0
    %1707 = vmatprep.mubr.f32.mxu0 0.0
    %1708 = vmatmul.mubr.f32.gmra.mxu0 %v1514
    %v1709 = vpop.f32.mrf.mxu0
    %v1710 = vadd.f32 0.0, %v1709
    %v1711 = vpop.f32.mrf.mxu0
    %1712 = vmatprep.mubr.f32.mxu0 0.0
    %1713 = vmatmul.mubr.f32.gmra.mxu0 %v1517
    %v1714 = vpop.f32.mrf.mxu0
    %v1715 = vadd.f32 0.0, %v1714
    %v1716 = vpop.f32.mrf.mxu0
    %1717 = vmatprep.mubr.f32.mxu0 0.0
    %1718 = vmatmul.mubr.f32.gmra.mxu0 %v1520
    %v1719 = vpop.f32.mrf.mxu0
    %v1720 = vadd.f32 0.0, %v1719
    %v1721 = vpop.f32.mrf.mxu0
    %1722 = vmatprep.mubr.f32.mxu0 0.0
    %1723 = vmatmul.mubr.f32.gmra.mxu0 %v1523
    %v1724 = vpop.f32.mrf.mxu0
    %v1725 = vadd.f32 0.0, %v1724
    %v1726 = vpop.f32.mrf.mxu0
    %1727 = vdwg.mxu0
    %v1728 = vld [vmem:[%s10] sm:$0x1]
    %v1730 = vlaneseq
    %v1731 = vshrl.u32 %v1730, 7
    %v1732 = vsub.s32 0, %v1731
    %v1733 = vrot.slane %v1728, %v1732
    %1735 = vmatprep.subr.mxu0 0.0
    %1736 = vmatpush1.msra.mxu0 %v1670
    %1737 = vmatprep.subr.mxu0 0.0
    %1738 = vmatpush1.msra.mxu0 %v1665
    %1739 = vmatprep.subr.mxu0 0.0
    %1740 = vmatpush1.msra.mxu0 %v1660
    %1741 = vmatprep.subr.mxu0 0.0
    %1742 = vmatpush1.msra.mxu0 %v1655
    %1743 = vmatprep.subr.mxu0 0.0
    %1744 = vmatpush1.msra.mxu0 %v1650
    %1745 = vmatprep.subr.mxu0 0.0
    %1746 = vmatpush1.msra.mxu0 %v1645
    %1747 = vmatprep.subr.mxu0 0.0
    %1748 = vmatpush1.msra.mxu0 %v1640
    %1749 = vmatprep.subr.mxu0 0.0
    %1750 = vmatpush1.msra.mxu0 %v1635
    %1751 = vmatprep.subr.mxu0 0.0
    %1752 = vmatpush1.msra.mxu0 %v1630
    %1753 = vmatprep.subr.mxu0 0.0
    %1754 = vmatpush1.msra.mxu0 %v1625
    %1755 = vmatprep.subr.mxu0 0.0
    %1756 = vmatpush1.msra.mxu0 %v1620
    %1757 = vmatprep.subr.mxu0 0.0
    %1758 = vmatpush1.msra.mxu0 %v1615
    %1759 = vmatprep.subr.mxu0 0.0
    %1760 = vmatpush1.msra.mxu0 %v1610
    %1761 = vmatprep.subr.mxu0 0.0
    %1762 = vmatpush1.msra.mxu0 %v1605
    %1763 = vmatprep.subr.mxu0 0.0
    %1764 = vmatpush1.msra.mxu0 %v1600
    %1765 = vmatprep.subr.mxu0 0.0
    %1766 = vmatpush1.msra.mxu0 %v1595
    %1767 = vmatprep.subr.mxu0 0.0
    %1768 = vmatpush2.msra.mxu0 0.0
    %1769 = vmatprep.subr.mxu0 0.0
    %1770 = vmatpush2.msra.mxu0 0.0
    %1771 = vmatprep.subr.mxu0 0.0
    %1772 = vmatpush2.msra.mxu0 0.0
    %1773 = vmatprep.subr.mxu0 0.0
    %1774 = vmatpush2.msra.mxu0 0.0
    %1775 = vmatprep.subr.mxu0 0.0
    %1776 = vmatpush2.msra.mxu0 0.0
    %1777 = vmatprep.subr.mxu0 0.0
    %1778 = vmatpush2.msra.mxu0 %v1725
    %1779 = vmatprep.subr.mxu0 0.0
    %1780 = vmatpush2.msra.mxu0 %v1720
    %1781 = vmatprep.subr.mxu0 0.0
    %1782 = vmatpush2.msra.mxu0 %v1715
    %1783 = vmatprep.subr.mxu0 0.0
    %1784 = vmatpush2.msra.mxu0 %v1710
    %1785 = vmatprep.subr.mxu0 0.0
    %1786 = vmatpush2.msra.mxu0 %v1705
    %1787 = vmatprep.subr.mxu0 0.0
    %1788 = vmatpush2.msra.mxu0 %v1700
    %1789 = vmatprep.subr.mxu0 0.0
    %1790 = vmatpush2.msra.mxu0 %v1695
    %1791 = vmatprep.subr.mxu0 0.0
    %1792 = vmatpush2.msra.mxu0 %v1690
    %1793 = vmatprep.subr.mxu0 0.0
    %1794 = vmatpush2.msra.mxu0 %v1685
    %1795 = vmatprep.subr.mxu0 0.0
    %1796 = vmatpush2.msra.mxu0 %v1680
    %1797 = vmatprep.subr.mxu0 0.0
    %1798 = vmatpush2.msra.mxu0 %v1675
    %1799 = vmatprep.mubr.f32.mxu0 %v669
    %1800 = vmatmul.mubr.f32.gmra.mxu0 %v323
    %v1801 = vpop.f32.mrf.mxu0
    %v1802 = vadd.f32 %v1733, %v1801
    %v1803 = vpop.f32.mrf.mxu0
    %1804 = vmatprep.mubr.f32.mxu0 %v672
    %1805 = vmatmul.mubr.f32.gmra.mxu0 %v325
    %v1806 = vpop.f32.mrf.mxu0
    %v1807 = vadd.f32 %v1733, %v1806
    %v1808 = vpop.f32.mrf.mxu0
    %1809 = vmatprep.mubr.f32.mxu0 %v675
    %1810 = vmatmul.mubr.f32.gmra.mxu0 %v327
    %v1811 = vpop.f32.mrf.mxu0
    %v1812 = vadd.f32 %v1733, %v1811
    %v1813 = vpop.f32.mrf.mxu0
    %1814 = vmatprep.mubr.f32.mxu0 %v678
    %1815 = vmatmul.mubr.f32.gmra.mxu0 %v329
    %v1816 = vpop.f32.mrf.mxu0
    %v1817 = vadd.f32 %v1733, %v1816
    %v1818 = vpop.f32.mrf.mxu0
    %1819 = vmatprep.mubr.f32.mxu0 %v681
    %1820 = vmatmul.mubr.f32.gmra.mxu0 %v331
    %v1821 = vpop.f32.mrf.mxu0
    %v1822 = vadd.f32 %v1733, %v1821
    %v1823 = vpop.f32.mrf.mxu0
    %1824 = vmatprep.mubr.f32.mxu0 %v684
    %1825 = vmatmul.mubr.f32.gmra.mxu0 %v333
    %v1826 = vpop.f32.mrf.mxu0
    %v1827 = vadd.f32 %v1733, %v1826
    %v1828 = vpop.f32.mrf.mxu0
    %1829 = vmatprep.mubr.f32.mxu0 %v687
    %1830 = vmatmul.mubr.f32.gmra.mxu0 %v335
    %v1831 = vpop.f32.mrf.mxu0
    %v1832 = vadd.f32 %v1733, %v1831
    %v1833 = vpop.f32.mrf.mxu0
    %1834 = vmatprep.mubr.f32.mxu0 %v690
    %1835 = vmatmul.mubr.f32.gmra.mxu0 %v337
    %v1836 = vpop.f32.mrf.mxu0
    %v1837 = vadd.f32 %v1733, %v1836
    %v1838 = vpop.f32.mrf.mxu0
    %1839 = vmatprep.mubr.f32.mxu0 %v693
    %1840 = vmatmul.mubr.f32.gmra.mxu0 %v339
    %v1841 = vpop.f32.mrf.mxu0
    %v1842 = vadd.f32 %v1733, %v1841
    %v1843 = vpop.f32.mrf.mxu0
    %1844 = vmatprep.mubr.f32.mxu0 %v696
    %1845 = vmatmul.mubr.f32.gmra.mxu0 %v341
    %v1846 = vpop.f32.mrf.mxu0
    %v1847 = vadd.f32 %v1733, %v1846
    %v1848 = vpop.f32.mrf.mxu0
    %1849 = vmatprep.mubr.f32.mxu0 %v699
    %1850 = vmatmul.mubr.f32.gmra.mxu0 %v343
    %v1851 = vpop.f32.mrf.mxu0
    %v1852 = vadd.f32 %v1733, %v1851
    %v1853 = vpop.f32.mrf.mxu0
    %1854 = vmatprep.mubr.f32.mxu0 %v702
    %1855 = vmatmul.mubr.f32.gmra.mxu0 %v345
    %v1856 = vpop.f32.mrf.mxu0
    %v1857 = vadd.f32 %v1733, %v1856
    %v1858 = vpop.f32.mrf.mxu0
    %1859 = vmatprep.mubr.f32.mxu0 %v705
    %1860 = vmatmul.mubr.f32.gmra.mxu0 %v347
    %v1861 = vpop.f32.mrf.mxu0
    %v1862 = vadd.f32 %v1733, %v1861
    %v1863 = vpop.f32.mrf.mxu0
    %1864 = vmatprep.mubr.f32.mxu0 %v708
    %1865 = vmatmul.mubr.f32.gmra.mxu0 %v349
    %v1866 = vpop.f32.mrf.mxu0
    %v1867 = vadd.f32 %v1733, %v1866
    %v1868 = vpop.f32.mrf.mxu0
    %1869 = vmatprep.mubr.f32.mxu0 %v711
    %1870 = vmatmul.mubr.f32.gmra.mxu0 %v351
    %v1871 = vpop.f32.mrf.mxu0
    %v1872 = vadd.f32 %v1733, %v1871
    %v1873 = vpop.f32.mrf.mxu0
    %1874 = vmatprep.mubr.f32.mxu0 %v714
    %1875 = vmatmul.mubr.f32.gmra.mxu0 %v353
    %v1876 = vpop.f32.mrf.mxu0
    %v1877 = vadd.f32 %v1733, %v1876
    %v1878 = vpop.f32.mrf.mxu0
    %1879 = vmatprep.mubr.f32.mxu0 %v717
    %1880 = vmatmul.mubr.f32.gmra.mxu0 %v355
    %v1881 = vpop.f32.mrf.mxu0
    %v1882 = vadd.f32 %v1733, %v1881
    %v1883 = vpop.f32.mrf.mxu0
    %1884 = vmatprep.mubr.f32.mxu0 %v720
    %1885 = vmatmul.mubr.f32.gmra.mxu0 %v357
    %v1886 = vpop.f32.mrf.mxu0
    %v1887 = vadd.f32 %v1733, %v1886
    %v1888 = vpop.f32.mrf.mxu0
    %1889 = vmatprep.mubr.f32.mxu0 %v723
    %1890 = vmatmul.mubr.f32.gmra.mxu0 %v359
    %v1891 = vpop.f32.mrf.mxu0
    %v1892 = vadd.f32 %v1733, %v1891
    %v1893 = vpop.f32.mrf.mxu0
    %1894 = vmatprep.mubr.f32.mxu0 %v726
    %1895 = vmatmul.mubr.f32.gmra.mxu0 %v361
    %v1896 = vpop.f32.mrf.mxu0
    %v1897 = vadd.f32 %v1733, %v1896
    %v1898 = vpop.f32.mrf.mxu0
    %1899 = vmatprep.mubr.f32.mxu0 %v729
    %1900 = vmatmul.mubr.f32.gmra.mxu0 %v363
    %v1901 = vpop.f32.mrf.mxu0
    %v1902 = vadd.f32 %v1733, %v1901
    %v1903 = vpop.f32.mrf.mxu0
    %1904 = vmatprep.mubr.f32.mxu0 %v732
    %1905 = vmatmul.mubr.f32.gmra.mxu0 %v365
    %v1906 = vpop.f32.mrf.mxu0
    %v1907 = vadd.f32 %v1733, %v1906
    %v1908 = vpop.f32.mrf.mxu0
    %1909 = vmatprep.mubr.f32.mxu0 %v735
    %1910 = vmatmul.mubr.f32.gmra.mxu0 %v367
    %v1911 = vpop.f32.mrf.mxu0
    %v1912 = vadd.f32 %v1733, %v1911
    %v1913 = vpop.f32.mrf.mxu0
    %1914 = vmatprep.mubr.f32.mxu0 %v738
    %1915 = vmatmul.mubr.f32.gmra.mxu0 %v369
    %v1916 = vpop.f32.mrf.mxu0
    %v1917 = vadd.f32 %v1733, %v1916
    %v1918 = vpop.f32.mrf.mxu0
    %1919 = vmatprep.mubr.f32.mxu0 %v741
    %1920 = vmatmul.mubr.f32.gmra.mxu0 %v371
    %v1921 = vpop.f32.mrf.mxu0
    %v1922 = vadd.f32 %v1733, %v1921
    %v1923 = vpop.f32.mrf.mxu0
    %1924 = vmatprep.mubr.f32.mxu0 %v744
    %1925 = vmatmul.mubr.f32.gmra.mxu0 %v373
    %v1926 = vpop.f32.mrf.mxu0
    %v1927 = vadd.f32 %v1733, %v1926
    %v1928 = vpop.f32.mrf.mxu0
    %1929 = vmatprep.mubr.f32.mxu0 %v747
    %1930 = vmatmul.mubr.f32.gmra.mxu0 %v375
    %v1931 = vpop.f32.mrf.mxu0
    %v1932 = vadd.f32 %v1733, %v1931
    %v1933 = vpop.f32.mrf.mxu0
    %1934 = vdwg.mxu0
    %v1935 = vld [vmem:[%s11] sm:$0xf]
    %v1937 = vsel %vm950, %v1802, 0
    %v1940 = vsel %vm950, %v1807, 0
    %v1943 = vsel %vm950, %v1812, 0
    %v1946 = vsel %vm950, %v1817, 0
    %v1949 = vsel %vm950, %v1822, 0
    %v1952 = vsel %vm950, %v1827, 0
    %v1955 = vsel %vm950, %v1832, 0
    %v1958 = vsel %vm950, %v1837, 0
    %v1961 = vsel %vm950, %v1842, 0
    %v1964 = vsel %vm950, %v1847, 0
    %v1967 = vsel %vm950, %v1852, 0
    %v1970 = vsel %vm950, %v1857, 0
    %v1973 = vsel %vm950, %v1862, 0
    %v1976 = vsel %vm950, %v1867, 0
    %v1979 = vsel %vm950, %v1872, 0
    %v1982 = vsel %vm950, %v1877, 0
    %v1985 = vsel %vm950, %v1882, 0
    %v1988 = vsel %vm950, %v1887, 0
    %v1991 = vsel %vm950, %v1892, 0
    %v1994 = vsel %vm950, %v1897, 0
    %v1997 = vsel %vm950, %v1902, 0
    %v2000 = vsel %vm950, %v1907, 0
    %v2003 = vsel %vm950, %v1912, 0
    %v2006 = vsel %vm950, %v1917, 0
    %v2009 = vsel %vm950, %v1922, 0
    %v2012 = vsel %vm950, %v1927, 0
    %v2015 = vsel %vm950, %v1932, 0
    %v2018 = vsel %vm1032, %v1935, 0
    %2020 = vmatprep.subr.mxu0 0.0
    %2021 = vmatpush1.msra.mxu0 0.0
    %2022 = vmatprep.subr.mxu0 0.0
    %2023 = vmatpush1.msra.mxu0 0.0
    %2024 = vmatprep.subr.mxu0 0.0
    %2025 = vmatpush1.msra.mxu0 0.0
    %2026 = vmatprep.subr.mxu0 0.0
    %2027 = vmatpush1.msra.mxu0 0.0
    %2028 = vmatprep.subr.mxu0 0.0
    %2029 = vmatpush1.msra.mxu0 0.0
    %2030 = vmatprep.subr.mxu0 0.0
    %2031 = vmatpush1.msra.mxu0 0.0
    %2032 = vmatprep.subr.mxu0 0.0
    %2033 = vmatpush1.msra.mxu0 0.0
    %2034 = vmatprep.subr.mxu0 0.0
    %2035 = vmatpush1.msra.mxu0 0.0
    %2036 = vmatprep.subr.mxu0 0.0
    %2037 = vmatpush1.msra.mxu0 0.0
    %2038 = vmatprep.subr.mxu0 0.0
    %2039 = vmatpush1.msra.mxu0 0.0
    %2040 = vmatprep.subr.mxu0 0.0
    %2041 = vmatpush1.msra.mxu0 0.0
    %2042 = vmatprep.subr.mxu0 0.0
    %2043 = vmatpush1.msra.mxu0 0.0
    %2044 = vmatprep.subr.mxu0 0.0
    %2045 = vmatpush1.msra.mxu0 0.0
    %2046 = vmatprep.subr.mxu0 0.0
    %2047 = vmatpush1.msra.mxu0 0.0
    %2048 = vmatprep.subr.mxu0 0.0
    %2049 = vmatpush1.msra.mxu0 0.0
    %2050 = vmatprep.subr.mxu0 0.0
    %2051 = vmatpush1.msra.mxu0 %v2018
    %2052 = vmatprep.subr.mxu0 0.0
    %2053 = vmatpush2.msra.mxu0 0.0
    %2054 = vmatprep.subr.mxu0 0.0
    %2055 = vmatpush2.msra.mxu0 0.0
    %2056 = vmatprep.subr.mxu0 0.0
    %2057 = vmatpush2.msra.mxu0 0.0
    %2058 = vmatprep.subr.mxu0 0.0
    %2059 = vmatpush2.msra.mxu0 0.0
    %2060 = vmatprep.subr.mxu0 0.0
    %2061 = vmatpush2.msra.mxu0 0.0
    %2062 = vmatprep.subr.mxu0 0.0
    %2063 = vmatpush2.msra.mxu0 0.0
    %2064 = vmatprep.subr.mxu0 0.0
    %2065 = vmatpush2.msra.mxu0 0.0
    %2066 = vmatprep.subr.mxu0 0.0
    %2067 = vmatpush2.msra.mxu0 0.0
    %2068 = vmatprep.subr.mxu0 0.0
    %2069 = vmatpush2.msra.mxu0 0.0
    %2070 = vmatprep.subr.mxu0 0.0
    %2071 = vmatpush2.msra.mxu0 0.0
    %2072 = vmatprep.subr.mxu0 0.0
    %2073 = vmatpush2.msra.mxu0 0.0
    %2074 = vmatprep.subr.mxu0 0.0
    %2075 = vmatpush2.msra.mxu0 0.0
    %2076 = vmatprep.subr.mxu0 0.0
    %2077 = vmatpush2.msra.mxu0 0.0
    %2078 = vmatprep.subr.mxu0 0.0
    %2079 = vmatpush2.msra.mxu0 0.0
    %2080 = vmatprep.subr.mxu0 0.0
    %2081 = vmatpush2.msra.mxu0 0.0
    %2082 = vmatprep.subr.mxu0 0.0
    %2083 = vmatpush2.msra.mxu0 0.0
    %2084 = vmatprep.mubr.f32.mxu0 0.0
    %2085 = vmatmul.mubr.f32.gmra.mxu0 %v1937
    %v2086 = vpop.f32.mrf.mxu0
    %v2087 = vadd.f32 0.0, %v2086
    %v2088 = vpop.f32.mrf.mxu0
    %2089 = vmatprep.mubr.f32.mxu0 0.0
    %2090 = vmatmul.mubr.f32.gmra.mxu0 %v1940
    %v2091 = vpop.f32.mrf.mxu0
    %v2092 = vadd.f32 0.0, %v2091
    %v2093 = vpop.f32.mrf.mxu0
    %2094 = vmatprep.mubr.f32.mxu0 0.0
    %2095 = vmatmul.mubr.f32.gmra.mxu0 %v1943
    %v2096 = vpop.f32.mrf.mxu0
    %v2097 = vadd.f32 0.0, %v2096
    %v2098 = vpop.f32.mrf.mxu0
    %2099 = vmatprep.mubr.f32.mxu0 0.0
    %2100 = vmatmul.mubr.f32.gmra.mxu0 %v1946
    %v2101 = vpop.f32.mrf.mxu0
    %v2102 = vadd.f32 0.0, %v2101
    %v2103 = vpop.f32.mrf.mxu0
    %2104 = vmatprep.mubr.f32.mxu0 0.0
    %2105 = vmatmul.mubr.f32.gmra.mxu0 %v1949
    %v2106 = vpop.f32.mrf.mxu0
    %v2107 = vadd.f32 0.0, %v2106
    %v2108 = vpop.f32.mrf.mxu0
    %2109 = vmatprep.mubr.f32.mxu0 0.0
    %2110 = vmatmul.mubr.f32.gmra.mxu0 %v1952
    %v2111 = vpop.f32.mrf.mxu0
    %v2112 = vadd.f32 0.0, %v2111
    %v2113 = vpop.f32.mrf.mxu0
    %2114 = vmatprep.mubr.f32.mxu0 0.0
    %2115 = vmatmul.mubr.f32.gmra.mxu0 %v1955
    %v2116 = vpop.f32.mrf.mxu0
    %v2117 = vadd.f32 0.0, %v2116
    %v2118 = vpop.f32.mrf.mxu0
    %2119 = vmatprep.mubr.f32.mxu0 0.0
    %2120 = vmatmul.mubr.f32.gmra.mxu0 %v1958
    %v2121 = vpop.f32.mrf.mxu0
    %v2122 = vadd.f32 0.0, %v2121
    %v2123 = vpop.f32.mrf.mxu0
    %2124 = vmatprep.mubr.f32.mxu0 0.0
    %2125 = vmatmul.mubr.f32.gmra.mxu0 %v1961
    %v2126 = vpop.f32.mrf.mxu0
    %v2127 = vadd.f32 0.0, %v2126
    %v2128 = vpop.f32.mrf.mxu0
    %2129 = vmatprep.mubr.f32.mxu0 0.0
    %2130 = vmatmul.mubr.f32.gmra.mxu0 %v1964
    %v2131 = vpop.f32.mrf.mxu0
    %v2132 = vadd.f32 0.0, %v2131
    %v2133 = vpop.f32.mrf.mxu0
    %2134 = vmatprep.mubr.f32.mxu0 0.0
    %2135 = vmatmul.mubr.f32.gmra.mxu0 %v1967
    %v2136 = vpop.f32.mrf.mxu0
    %v2137 = vadd.f32 0.0, %v2136
    %v2138 = vpop.f32.mrf.mxu0
    %2139 = vmatprep.mubr.f32.mxu0 0.0
    %2140 = vmatmul.mubr.f32.gmra.mxu0 %v1970
    %v2141 = vpop.f32.mrf.mxu0
    %v2142 = vadd.f32 0.0, %v2141
    %v2143 = vpop.f32.mrf.mxu0
    %2144 = vmatprep.mubr.f32.mxu0 0.0
    %2145 = vmatmul.mubr.f32.gmra.mxu0 %v1973
    %v2146 = vpop.f32.mrf.mxu0
    %v2147 = vadd.f32 0.0, %v2146
    %v2148 = vpop.f32.mrf.mxu0
    %2149 = vmatprep.mubr.f32.mxu0 0.0
    %2150 = vmatmul.mubr.f32.gmra.mxu0 %v1976
    %v2151 = vpop.f32.mrf.mxu0
    %v2152 = vadd.f32 0.0, %v2151
    %v2153 = vpop.f32.mrf.mxu0
    %2154 = vmatprep.mubr.f32.mxu0 0.0
    %2155 = vmatmul.mubr.f32.gmra.mxu0 %v1979
    %v2156 = vpop.f32.mrf.mxu0
    %v2157 = vadd.f32 0.0, %v2156
    %v2158 = vpop.f32.mrf.mxu0
    %2159 = vmatprep.mubr.f32.mxu0 0.0
    %2160 = vmatmul.mubr.f32.gmra.mxu0 %v1982
    %v2161 = vpop.f32.mrf.mxu0
    %v2162 = vadd.f32 0.0, %v2161
    %v2163 = vpop.f32.mrf.mxu0
    %2164 = vmatprep.mubr.f32.mxu0 0.0
    %2165 = vmatmul.mubr.f32.gmra.mxu0 %v1985
    %v2166 = vpop.f32.mrf.mxu0
    %v2167 = vadd.f32 0.0, %v2166
    %v2168 = vpop.f32.mrf.mxu0
    %2169 = vmatprep.mubr.f32.mxu0 0.0
    %2170 = vmatmul.mubr.f32.gmra.mxu0 %v1988
    %v2171 = vpop.f32.mrf.mxu0
    %v2172 = vadd.f32 0.0, %v2171
    %v2173 = vpop.f32.mrf.mxu0
    %2174 = vmatprep.mubr.f32.mxu0 0.0
    %2175 = vmatmul.mubr.f32.gmra.mxu0 %v1991
    %v2176 = vpop.f32.mrf.mxu0
    %v2177 = vadd.f32 0.0, %v2176
    %v2178 = vpop.f32.mrf.mxu0
    %2179 = vmatprep.mubr.f32.mxu0 0.0
    %2180 = vmatmul.mubr.f32.gmra.mxu0 %v1994
    %v2181 = vpop.f32.mrf.mxu0
    %v2182 = vadd.f32 0.0, %v2181
    %v2183 = vpop.f32.mrf.mxu0
    %2184 = vmatprep.mubr.f32.mxu0 0.0
    %2185 = vmatmul.mubr.f32.gmra.mxu0 %v1997
    %v2186 = vpop.f32.mrf.mxu0
    %v2187 = vadd.f32 0.0, %v2186
    %v2188 = vpop.f32.mrf.mxu0
    %2189 = vmatprep.mubr.f32.mxu0 0.0
    %2190 = vmatmul.mubr.f32.gmra.mxu0 %v2000
    %v2191 = vpop.f32.mrf.mxu0
    %v2192 = vadd.f32 0.0, %v2191
    %v2193 = vpop.f32.mrf.mxu0
    %2194 = vmatprep.mubr.f32.mxu0 0.0
    %2195 = vmatmul.mubr.f32.gmra.mxu0 %v2003
    %v2196 = vpop.f32.mrf.mxu0
    %v2197 = vadd.f32 0.0, %v2196
    %v2198 = vpop.f32.mrf.mxu0
    %2199 = vmatprep.mubr.f32.mxu0 0.0
    %2200 = vmatmul.mubr.f32.gmra.mxu0 %v2006
    %v2201 = vpop.f32.mrf.mxu0
    %v2202 = vadd.f32 0.0, %v2201
    %v2203 = vpop.f32.mrf.mxu0
    %2204 = vmatprep.mubr.f32.mxu0 0.0
    %2205 = vmatmul.mubr.f32.gmra.mxu0 %v2009
    %v2206 = vpop.f32.mrf.mxu0
    %v2207 = vadd.f32 0.0, %v2206
    %v2208 = vpop.f32.mrf.mxu0
    %2209 = vmatprep.mubr.f32.mxu0 0.0
    %2210 = vmatmul.mubr.f32.gmra.mxu0 %v2012
    %v2211 = vpop.f32.mrf.mxu0
    %v2212 = vadd.f32 0.0, %v2211
    %v2213 = vpop.f32.mrf.mxu0
    %2214 = vmatprep.mubr.f32.mxu0 0.0
    %2215 = vmatmul.mubr.f32.gmra.mxu0 %v2015
    %v2216 = vpop.f32.mrf.mxu0
    %v2217 = vadd.f32 0.0, %v2216
    %v2218 = vpop.f32.mrf.mxu0
    %2219 = vdwg.mxu0
    %v2220 = vld [vmem:[%s12] sm:$0x1]
    %v2222 = vlaneseq
    %v2223 = vshrl.u32 %v2222, 7
    %v2224 = vsub.s32 0, %v2223
    %v2225 = vrot.slane %v2220, %v2224
    %2227 = vmatprep.subr.mxu0 0.0
    %2228 = vmatpush1.msra.mxu0 %v2162
    %2229 = vmatprep.subr.mxu0 0.0
    %2230 = vmatpush1.msra.mxu0 %v2157
    %2231 = vmatprep.subr.mxu0 0.0
    %2232 = vmatpush1.msra.mxu0 %v2152
    %2233 = vmatprep.subr.mxu0 0.0
    %2234 = vmatpush1.msra.mxu0 %v2147
    %2235 = vmatprep.subr.mxu0 0.0
    %2236 = vmatpush1.msra.mxu0 %v2142
    %2237 = vmatprep.subr.mxu0 0.0
    %2238 = vmatpush1.msra.mxu0 %v2137
    %2239 = vmatprep.subr.mxu0 0.0
    %2240 = vmatpush1.msra.mxu0 %v2132
    %2241 = vmatprep.subr.mxu0 0.0
    %2242 = vmatpush1.msra.mxu0 %v2127
    %2243 = vmatprep.subr.mxu0 0.0
    %2244 = vmatpush1.msra.mxu0 %v2122
    %2245 = vmatprep.subr.mxu0 0.0
    %2246 = vmatpush1.msra.mxu0 %v2117
    %2247 = vmatprep.subr.mxu0 0.0
    %2248 = vmatpush1.msra.mxu0 %v2112
    %2249 = vmatprep.subr.mxu0 0.0
    %2250 = vmatpush1.msra.mxu0 %v2107
    %2251 = vmatprep.subr.mxu0 0.0
    %2252 = vmatpush1.msra.mxu0 %v2102
    %2253 = vmatprep.subr.mxu0 0.0
    %2254 = vmatpush1.msra.mxu0 %v2097
    %2255 = vmatprep.subr.mxu0 0.0
    %2256 = vmatpush1.msra.mxu0 %v2092
    %2257 = vmatprep.subr.mxu0 0.0
    %2258 = vmatpush1.msra.mxu0 %v2087
    %2259 = vmatprep.subr.mxu0 0.0
    %2260 = vmatpush2.msra.mxu0 0.0
    %2261 = vmatprep.subr.mxu0 0.0
    %2262 = vmatpush2.msra.mxu0 0.0
    %2263 = vmatprep.subr.mxu0 0.0
    %2264 = vmatpush2.msra.mxu0 0.0
    %2265 = vmatprep.subr.mxu0 0.0
    %2266 = vmatpush2.msra.mxu0 0.0
    %2267 = vmatprep.subr.mxu0 0.0
    %2268 = vmatpush2.msra.mxu0 0.0
    %2269 = vmatprep.subr.mxu0 0.0
    %2270 = vmatpush2.msra.mxu0 %v2217
    %2271 = vmatprep.subr.mxu0 0.0
    %2272 = vmatpush2.msra.mxu0 %v2212
    %2273 = vmatprep.subr.mxu0 0.0
    %2274 = vmatpush2.msra.mxu0 %v2207
    %2275 = vmatprep.subr.mxu0 0.0
    %2276 = vmatpush2.msra.mxu0 %v2202
    %2277 = vmatprep.subr.mxu0 0.0
    %2278 = vmatpush2.msra.mxu0 %v2197
    %2279 = vmatprep.subr.mxu0 0.0
    %2280 = vmatpush2.msra.mxu0 %v2192
    %2281 = vmatprep.subr.mxu0 0.0
    %2282 = vmatpush2.msra.mxu0 %v2187
    %2283 = vmatprep.subr.mxu0 0.0
    %2284 = vmatpush2.msra.mxu0 %v2182
    %2285 = vmatprep.subr.mxu0 0.0
    %2286 = vmatpush2.msra.mxu0 %v2177
    %2287 = vmatprep.subr.mxu0 0.0
    %2288 = vmatpush2.msra.mxu0 %v2172
    %2289 = vmatprep.subr.mxu0 0.0
    %2290 = vmatpush2.msra.mxu0 %v2167
    %2291 = vmatprep.mubr.f32.mxu0 %v669
    %2292 = vmatmul.mubr.f32.gmra.mxu0 %v323
    %v2293 = vpop.f32.mrf.mxu0
    %v2294 = vadd.f32 %v2225, %v2293
    %v2295 = vpop.f32.mrf.mxu0
    %2296 = vmatprep.mubr.f32.mxu0 %v672
    %2297 = vmatmul.mubr.f32.gmra.mxu0 %v325
    %v2298 = vpop.f32.mrf.mxu0
    %v2299 = vadd.f32 %v2225, %v2298
    %v2300 = vpop.f32.mrf.mxu0
    %2301 = vmatprep.mubr.f32.mxu0 %v675
    %2302 = vmatmul.mubr.f32.gmra.mxu0 %v327
    %v2303 = vpop.f32.mrf.mxu0
    %v2304 = vadd.f32 %v2225, %v2303
    %v2305 = vpop.f32.mrf.mxu0
    %2306 = vmatprep.mubr.f32.mxu0 %v678
    %2307 = vmatmul.mubr.f32.gmra.mxu0 %v329
    %v2308 = vpop.f32.mrf.mxu0
    %v2309 = vadd.f32 %v2225, %v2308
    %v2310 = vpop.f32.mrf.mxu0
    %2311 = vmatprep.mubr.f32.mxu0 %v681
    %2312 = vmatmul.mubr.f32.gmra.mxu0 %v331
    %v2313 = vpop.f32.mrf.mxu0
    %v2314 = vadd.f32 %v2225, %v2313
    %v2315 = vpop.f32.mrf.mxu0
    %2316 = vmatprep.mubr.f32.mxu0 %v684
    %2317 = vmatmul.mubr.f32.gmra.mxu0 %v333
    %v2318 = vpop.f32.mrf.mxu0
    %v2319 = vadd.f32 %v2225, %v2318
    %v2320 = vpop.f32.mrf.mxu0
    %2321 = vmatprep.mubr.f32.mxu0 %v687
    %2322 = vmatmul.mubr.f32.gmra.mxu0 %v335
    %v2323 = vpop.f32.mrf.mxu0
    %v2324 = vadd.f32 %v2225, %v2323
    %v2325 = vpop.f32.mrf.mxu0
    %2326 = vmatprep.mubr.f32.mxu0 %v690
    %2327 = vmatmul.mubr.f32.gmra.mxu0 %v337
    %v2328 = vpop.f32.mrf.mxu0
    %v2329 = vadd.f32 %v2225, %v2328
    %v2330 = vpop.f32.mrf.mxu0
    %2331 = vmatprep.mubr.f32.mxu0 %v693
    %2332 = vmatmul.mubr.f32.gmra.mxu0 %v339
    %v2333 = vpop.f32.mrf.mxu0
    %v2334 = vadd.f32 %v2225, %v2333
    %v2335 = vpop.f32.mrf.mxu0
    %2336 = vmatprep.mubr.f32.mxu0 %v696
    %2337 = vmatmul.mubr.f32.gmra.mxu0 %v341
    %v2338 = vpop.f32.mrf.mxu0
    %v2339 = vadd.f32 %v2225, %v2338
    %v2340 = vpop.f32.mrf.mxu0
    %2341 = vmatprep.mubr.f32.mxu0 %v699
    %2342 = vmatmul.mubr.f32.gmra.mxu0 %v343
    %v2343 = vpop.f32.mrf.mxu0
    %v2344 = vadd.f32 %v2225, %v2343
    %v2345 = vpop.f32.mrf.mxu0
    %2346 = vmatprep.mubr.f32.mxu0 %v702
    %2347 = vmatmul.mubr.f32.gmra.mxu0 %v345
    %v2348 = vpop.f32.mrf.mxu0
    %v2349 = vadd.f32 %v2225, %v2348
    %v2350 = vpop.f32.mrf.mxu0
    %2351 = vmatprep.mubr.f32.mxu0 %v705
    %2352 = vmatmul.mubr.f32.gmra.mxu0 %v347
    %v2353 = vpop.f32.mrf.mxu0
    %v2354 = vadd.f32 %v2225, %v2353
    %v2355 = vpop.f32.mrf.mxu0
    %2356 = vmatprep.mubr.f32.mxu0 %v708
    %2357 = vmatmul.mubr.f32.gmra.mxu0 %v349
    %v2358 = vpop.f32.mrf.mxu0
    %v2359 = vadd.f32 %v2225, %v2358
    %v2360 = vpop.f32.mrf.mxu0
    %2361 = vmatprep.mubr.f32.mxu0 %v711
    %2362 = vmatmul.mubr.f32.gmra.mxu0 %v351
    %v2363 = vpop.f32.mrf.mxu0
    %v2364 = vadd.f32 %v2225, %v2363
    %v2365 = vpop.f32.mrf.mxu0
    %2366 = vmatprep.mubr.f32.mxu0 %v714
    %2367 = vmatmul.mubr.f32.gmra.mxu0 %v353
    %v2368 = vpop.f32.mrf.mxu0
    %v2369 = vadd.f32 %v2225, %v2368
    %v2370 = vpop.f32.mrf.mxu0
    %2371 = vmatprep.mubr.f32.mxu0 %v717
    %2372 = vmatmul.mubr.f32.gmra.mxu0 %v355
    %v2373 = vpop.f32.mrf.mxu0
    %v2374 = vadd.f32 %v2225, %v2373
    %v2375 = vpop.f32.mrf.mxu0
    %2376 = vmatprep.mubr.f32.mxu0 %v720
    %2377 = vmatmul.mubr.f32.gmra.mxu0 %v357
    %v2378 = vpop.f32.mrf.mxu0
    %v2379 = vadd.f32 %v2225, %v2378
    %v2380 = vpop.f32.mrf.mxu0
    %2381 = vmatprep.mubr.f32.mxu0 %v723
    %2382 = vmatmul.mubr.f32.gmra.mxu0 %v359
    %v2383 = vpop.f32.mrf.mxu0
    %v2384 = vadd.f32 %v2225, %v2383
    %v2385 = vpop.f32.mrf.mxu0
    %2386 = vmatprep.mubr.f32.mxu0 %v726
    %2387 = vmatmul.mubr.f32.gmra.mxu0 %v361
    %v2388 = vpop.f32.mrf.mxu0
    %v2389 = vadd.f32 %v2225, %v2388
    %v2390 = vpop.f32.mrf.mxu0
    %2391 = vmatprep.mubr.f32.mxu0 %v729
    %2392 = vmatmul.mubr.f32.gmra.mxu0 %v363
    %v2393 = vpop.f32.mrf.mxu0
    %v2394 = vadd.f32 %v2225, %v2393
    %v2395 = vpop.f32.mrf.mxu0
    %2396 = vmatprep.mubr.f32.mxu0 %v732
    %2397 = vmatmul.mubr.f32.gmra.mxu0 %v365
    %v2398 = vpop.f32.mrf.mxu0
    %v2399 = vadd.f32 %v2225, %v2398
    %v2400 = vpop.f32.mrf.mxu0
    %2401 = vmatprep.mubr.f32.mxu0 %v735
    %2402 = vmatmul.mubr.f32.gmra.mxu0 %v367
    %v2403 = vpop.f32.mrf.mxu0
    %v2404 = vadd.f32 %v2225, %v2403
    %v2405 = vpop.f32.mrf.mxu0
    %2406 = vmatprep.mubr.f32.mxu0 %v738
    %2407 = vmatmul.mubr.f32.gmra.mxu0 %v369
    %v2408 = vpop.f32.mrf.mxu0
    %v2409 = vadd.f32 %v2225, %v2408
    %v2410 = vpop.f32.mrf.mxu0
    %2411 = vmatprep.mubr.f32.mxu0 %v741
    %2412 = vmatmul.mubr.f32.gmra.mxu0 %v371
    %v2413 = vpop.f32.mrf.mxu0
    %v2414 = vadd.f32 %v2225, %v2413
    %v2415 = vpop.f32.mrf.mxu0
    %2416 = vmatprep.mubr.f32.mxu0 %v744
    %2417 = vmatmul.mubr.f32.gmra.mxu0 %v373
    %v2418 = vpop.f32.mrf.mxu0
    %v2419 = vadd.f32 %v2225, %v2418
    %v2420 = vpop.f32.mrf.mxu0
    %2421 = vmatprep.mubr.f32.mxu0 %v747
    %2422 = vmatmul.mubr.f32.gmra.mxu0 %v375
    %v2423 = vpop.f32.mrf.mxu0
    %v2424 = vadd.f32 %v2225, %v2423
    %v2425 = vpop.f32.mrf.mxu0
    %2426 = vdwg.mxu0
    %v2427 = vld [vmem:[%s4] sm:$0xff]
    %v2428 = vld [vmem:[%s4 + $0x8] sm:$0xff]
    %v2430 = vsel %vm667, %v2428, 0
    %2432 = vmatprep.subr.mxu0 0.0
    %2433 = vmatpush1.msra.mxu0 %v2369
    %2434 = vmatprep.subr.mxu0 0.0
    %2435 = vmatpush1.msra.mxu0 %v2364
    %2436 = vmatprep.subr.mxu0 0.0
    %2437 = vmatpush1.msra.mxu0 %v2359
    %2438 = vmatprep.subr.mxu0 0.0
    %2439 = vmatpush1.msra.mxu0 %v2354
    %2440 = vmatprep.subr.mxu0 0.0
    %2441 = vmatpush1.msra.mxu0 %v2349
    %2442 = vmatprep.subr.mxu0 0.0
    %2443 = vmatpush1.msra.mxu0 %v2344
    %2444 = vmatprep.subr.mxu0 0.0
    %2445 = vmatpush1.msra.mxu0 %v2339
    %2446 = vmatprep.subr.mxu0 0.0
    %2447 = vmatpush1.msra.mxu0 %v2334
    %2448 = vmatprep.subr.mxu0 0.0
    %2449 = vmatpush1.msra.mxu0 %v2329
    %2450 = vmatprep.subr.mxu0 0.0
    %2451 = vmatpush1.msra.mxu0 %v2324
    %2452 = vmatprep.subr.mxu0 0.0
    %2453 = vmatpush1.msra.mxu0 %v2319
    %2454 = vmatprep.subr.mxu0 0.0
    %2455 = vmatpush1.msra.mxu0 %v2314
    %2456 = vmatprep.subr.mxu0 0.0
    %2457 = vmatpush1.msra.mxu0 %v2309
    %2458 = vmatprep.subr.mxu0 0.0
    %2459 = vmatpush1.msra.mxu0 %v2304
    %2460 = vmatprep.subr.mxu0 0.0
    %2461 = vmatpush1.msra.mxu0 %v2299
    %2462 = vmatprep.subr.mxu0 0.0
    %2463 = vmatpush1.msra.mxu0 %v2294
    %2464 = vmatprep.subr.mxu0 0.0
    %2465 = vmatpush2.msra.mxu0 0.0
    %2466 = vmatprep.subr.mxu0 0.0
    %2467 = vmatpush2.msra.mxu0 0.0
    %2468 = vmatprep.subr.mxu0 0.0
    %2469 = vmatpush2.msra.mxu0 0.0
    %2470 = vmatprep.subr.mxu0 0.0
    %2471 = vmatpush2.msra.mxu0 0.0
    %2472 = vmatprep.subr.mxu0 0.0
    %2473 = vmatpush2.msra.mxu0 0.0
    %2474 = vmatprep.subr.mxu0 0.0
    %2475 = vmatpush2.msra.mxu0 %v2424
    %2476 = vmatprep.subr.mxu0 0.0
    %2477 = vmatpush2.msra.mxu0 %v2419
    %2478 = vmatprep.subr.mxu0 0.0
    %2479 = vmatpush2.msra.mxu0 %v2414
    %2480 = vmatprep.subr.mxu0 0.0
    %2481 = vmatpush2.msra.mxu0 %v2409
    %2482 = vmatprep.subr.mxu0 0.0
    %2483 = vmatpush2.msra.mxu0 %v2404
    %2484 = vmatprep.subr.mxu0 0.0
    %2485 = vmatpush2.msra.mxu0 %v2399
    %2486 = vmatprep.subr.mxu0 0.0
    %2487 = vmatpush2.msra.mxu0 %v2394
    %2488 = vmatprep.subr.mxu0 0.0
    %2489 = vmatpush2.msra.mxu0 %v2389
    %2490 = vmatprep.subr.mxu0 0.0
    %2491 = vmatpush2.msra.mxu0 %v2384
    %2492 = vmatprep.subr.mxu0 0.0
    %2493 = vmatpush2.msra.mxu0 %v2379
    %2494 = vmatprep.subr.mxu0 0.0
    %2495 = vmatpush2.msra.mxu0 %v2374
    %2496 = vmatprep.mubr.f32.mxu0 %v2430
    %2497 = vmatmul.mubr.f32.gmra.mxu0 %v2427
    %v2498 = vpop.f32.mrf.mxu0
    %v2499 = vadd.f32 0.0, %v2498
    %v2500 = vpop.f32.mrf.mxu0
    %2501 = vdwg.mxu0
    %v2502 = vmul.f32 %v2499, 0.037037037
    %v2503 = vmul.f32 %v137, %v2294
    %v2504 = vmul.f32 %v142, %v2299
    %v2505 = vmul.f32 %v147, %v2304
    %v2506 = vmul.f32 %v152, %v2309
    %v2507 = vmul.f32 %v157, %v2314
    %v2508 = vmul.f32 %v162, %v2319
    %v2509 = vmul.f32 %v167, %v2324
    %v2510 = vmul.f32 %v172, %v2329
    %v2511 = vmul.f32 %v177, %v2334
    %v2512 = vmul.f32 %v182, %v2339
    %v2513 = vmul.f32 %v187, %v2344
    %v2514 = vmul.f32 %v192, %v2349
    %v2515 = vmul.f32 %v197, %v2354
    %v2516 = vmul.f32 %v202, %v2359
    %v2517 = vmul.f32 %v207, %v2364
    %v2518 = vmul.f32 %v212, %v2369
    %v2519 = vmul.f32 %v217, %v2374
    %v2520 = vmul.f32 %v222, %v2379
    %v2521 = vmul.f32 %v227, %v2384
    %v2522 = vmul.f32 %v232, %v2389
    %v2523 = vmul.f32 %v237, %v2394
    %v2524 = vmul.f32 %v242, %v2399
    %v2525 = vmul.f32 %v247, %v2404
    %v2526 = vmul.f32 %v252, %v2409
    %v2527 = vmul.f32 %v257, %v2414
    %v2528 = vmul.f32 %v262, %v2419
    %v2529 = vmul.f32 %v267, %v2424
    %2530 = vmatprep.subr.mxu0 0.0
    %2531 = vmatpush1.msra.mxu0 %v2518
    %2532 = vmatprep.subr.mxu0 0.0
    %2533 = vmatpush1.msra.mxu0 %v2517
    %2534 = vmatprep.subr.mxu0 0.0
    %2535 = vmatpush1.msra.mxu0 %v2516
    %2536 = vmatprep.subr.mxu0 0.0
    %2537 = vmatpush1.msra.mxu0 %v2515
    %2538 = vmatprep.subr.mxu0 0.0
    %2539 = vmatpush1.msra.mxu0 %v2514
    %2540 = vmatprep.subr.mxu0 0.0
    %2541 = vmatpush1.msra.mxu0 %v2513
    %2542 = vmatprep.subr.mxu0 0.0
    %2543 = vmatpush1.msra.mxu0 %v2512
    %2544 = vmatprep.subr.mxu0 0.0
    %2545 = vmatpush1.msra.mxu0 %v2511
    %2546 = vmatprep.subr.mxu0 0.0
    %2547 = vmatpush1.msra.mxu0 %v2510
    %2548 = vmatprep.subr.mxu0 0.0
    %2549 = vmatpush1.msra.mxu0 %v2509
    %2550 = vmatprep.subr.mxu0 0.0
    %2551 = vmatpush1.msra.mxu0 %v2508
    %2552 = vmatprep.subr.mxu0 0.0
    %2553 = vmatpush1.msra.mxu0 %v2507
    %2554 = vmatprep.subr.mxu0 0.0
    %2555 = vmatpush1.msra.mxu0 %v2506
    %2556 = vmatprep.subr.mxu0 0.0
    %2557 = vmatpush1.msra.mxu0 %v2505
    %2558 = vmatprep.subr.mxu0 0.0
    %2559 = vmatpush1.msra.mxu0 %v2504
    %2560 = vmatprep.subr.mxu0 0.0
    %2561 = vmatpush1.msra.mxu0 %v2503
    %2562 = vmatprep.subr.mxu0 0.0
    %2563 = vmatpush2.msra.mxu0 0.0
    %2564 = vmatprep.subr.mxu0 0.0
    %2565 = vmatpush2.msra.mxu0 0.0
    %2566 = vmatprep.subr.mxu0 0.0
    %2567 = vmatpush2.msra.mxu0 0.0
    %2568 = vmatprep.subr.mxu0 0.0
    %2569 = vmatpush2.msra.mxu0 0.0
    %2570 = vmatprep.subr.mxu0 0.0
    %2571 = vmatpush2.msra.mxu0 0.0
    %2572 = vmatprep.subr.mxu0 0.0
    %2573 = vmatpush2.msra.mxu0 %v2529
    %2574 = vmatprep.subr.mxu0 0.0
    %2575 = vmatpush2.msra.mxu0 %v2528
    %2576 = vmatprep.subr.mxu0 0.0
    %2577 = vmatpush2.msra.mxu0 %v2527
    %2578 = vmatprep.subr.mxu0 0.0
    %2579 = vmatpush2.msra.mxu0 %v2526
    %2580 = vmatprep.subr.mxu0 0.0
    %2581 = vmatpush2.msra.mxu0 %v2525
    %2582 = vmatprep.subr.mxu0 0.0
    %2583 = vmatpush2.msra.mxu0 %v2524
    %2584 = vmatprep.subr.mxu0 0.0
    %2585 = vmatpush2.msra.mxu0 %v2523
    %2586 = vmatprep.subr.mxu0 0.0
    %2587 = vmatpush2.msra.mxu0 %v2522
    %2588 = vmatprep.subr.mxu0 0.0
    %2589 = vmatpush2.msra.mxu0 %v2521
    %2590 = vmatprep.subr.mxu0 0.0
    %2591 = vmatpush2.msra.mxu0 %v2520
    %2592 = vmatprep.subr.mxu0 0.0
    %2593 = vmatpush2.msra.mxu0 %v2519
    %2594 = vmatprep.mubr.f32.mxu0 %v2430
    %2595 = vmatmul.mubr.f32.gmra.mxu0 %v2427
    %v2596 = vpop.f32.mrf.mxu0
    %v2597 = vadd.f32 0.0, %v2596
    %v2598 = vpop.f32.mrf.mxu0
    %2599 = vdwg.mxu0
    %v2600 = vld [vmem:[%s13] sm:$0xf]
    %v2601 = vld [vmem:[%s14] sm:$0xf]
    %v2603 = vsel %vm950, %v2597, 0
    %v2606 = vsel %vm1032, %v2601, 0
    %2608 = vmatprep.subr.mxu0 0.0
    %2609 = vmatpush1.msra.mxu0 0.0
    %2610 = vmatprep.subr.mxu0 0.0
    %2611 = vmatpush1.msra.mxu0 0.0
    %2612 = vmatprep.subr.mxu0 0.0
    %2613 = vmatpush1.msra.mxu0 0.0
    %2614 = vmatprep.subr.mxu0 0.0
    %2615 = vmatpush1.msra.mxu0 0.0
    %2616 = vmatprep.subr.mxu0 0.0
    %2617 = vmatpush1.msra.mxu0 0.0
    %2618 = vmatprep.subr.mxu0 0.0
    %2619 = vmatpush1.msra.mxu0 0.0
    %2620 = vmatprep.subr.mxu0 0.0
    %2621 = vmatpush1.msra.mxu0 0.0
    %2622 = vmatprep.subr.mxu0 0.0
    %2623 = vmatpush1.msra.mxu0 0.0
    %2624 = vmatprep.subr.mxu0 0.0
    %2625 = vmatpush1.msra.mxu0 0.0
    %2626 = vmatprep.subr.mxu0 0.0
    %2627 = vmatpush1.msra.mxu0 0.0
    %2628 = vmatprep.subr.mxu0 0.0
    %2629 = vmatpush1.msra.mxu0 0.0
    %2630 = vmatprep.subr.mxu0 0.0
    %2631 = vmatpush1.msra.mxu0 0.0
    %2632 = vmatprep.subr.mxu0 0.0
    %2633 = vmatpush1.msra.mxu0 0.0
    %2634 = vmatprep.subr.mxu0 0.0
    %2635 = vmatpush1.msra.mxu0 0.0
    %2636 = vmatprep.subr.mxu0 0.0
    %2637 = vmatpush1.msra.mxu0 0.0
    %2638 = vmatprep.subr.mxu0 0.0
    %2639 = vmatpush1.msra.mxu0 %v2606
    %2640 = vmatprep.subr.mxu0 0.0
    %2641 = vmatpush2.msra.mxu0 0.0
    %2642 = vmatprep.subr.mxu0 0.0
    %2643 = vmatpush2.msra.mxu0 0.0
    %2644 = vmatprep.subr.mxu0 0.0
    %2645 = vmatpush2.msra.mxu0 0.0
    %2646 = vmatprep.subr.mxu0 0.0
    %2647 = vmatpush2.msra.mxu0 0.0
    %2648 = vmatprep.subr.mxu0 0.0
    %2649 = vmatpush2.msra.mxu0 0.0
    %2650 = vmatprep.subr.mxu0 0.0
    %2651 = vmatpush2.msra.mxu0 0.0
    %2652 = vmatprep.subr.mxu0 0.0
    %2653 = vmatpush2.msra.mxu0 0.0
    %2654 = vmatprep.subr.mxu0 0.0
    %2655 = vmatpush2.msra.mxu0 0.0
    %2656 = vmatprep.subr.mxu0 0.0
    %2657 = vmatpush2.msra.mxu0 0.0
    %2658 = vmatprep.subr.mxu0 0.0
    %2659 = vmatpush2.msra.mxu0 0.0
    %2660 = vmatprep.subr.mxu0 0.0
    %2661 = vmatpush2.msra.mxu0 0.0
    %2662 = vmatprep.subr.mxu0 0.0
    %2663 = vmatpush2.msra.mxu0 0.0
    %2664 = vmatprep.subr.mxu0 0.0
    %2665 = vmatpush2.msra.mxu0 0.0
    %2666 = vmatprep.subr.mxu0 0.0
    %2667 = vmatpush2.msra.mxu0 0.0
    %2668 = vmatprep.subr.mxu0 0.0
    %2669 = vmatpush2.msra.mxu0 0.0
    %2670 = vmatprep.subr.mxu0 0.0
    %2671 = vmatpush2.msra.mxu0 0.0
    %2672 = vmatprep.mubr.f32.mxu0 0.0
    %2673 = vmatmul.mubr.f32.gmra.mxu0 %v2603
    %v2674 = vpop.f32.mrf.mxu0
    %v2675 = vadd.f32 0.0, %v2674
    %v2676 = vpop.f32.mrf.mxu0
    %2677 = vdwg.mxu0
    %v2679 = vsel %vm950, %v2502, 0
    %v2682 = vsel %vm1032, %v2600, 0
    %2684 = vmatprep.subr.mxu0 0.0
    %2685 = vmatpush1.msra.mxu0 0.0
    %2686 = vmatprep.subr.mxu0 0.0
    %2687 = vmatpush1.msra.mxu0 0.0
    %2688 = vmatprep.subr.mxu0 0.0
    %2689 = vmatpush1.msra.mxu0 0.0
    %2690 = vmatprep.subr.mxu0 0.0
    %2691 = vmatpush1.msra.mxu0 0.0
    %2692 = vmatprep.subr.mxu0 0.0
    %2693 = vmatpush1.msra.mxu0 0.0
    %2694 = vmatprep.subr.mxu0 0.0
    %2695 = vmatpush1.msra.mxu0 0.0
    %2696 = vmatprep.subr.mxu0 0.0
    %2697 = vmatpush1.msra.mxu0 0.0
    %2698 = vmatprep.subr.mxu0 0.0
    %2699 = vmatpush1.msra.mxu0 0.0
    %2700 = vmatprep.subr.mxu0 0.0
    %2701 = vmatpush1.msra.mxu0 0.0
    %2702 = vmatprep.subr.mxu0 0.0
    %2703 = vmatpush1.msra.mxu0 0.0
    %2704 = vmatprep.subr.mxu0 0.0
    %2705 = vmatpush1.msra.mxu0 0.0
    %2706 = vmatprep.subr.mxu0 0.0
    %2707 = vmatpush1.msra.mxu0 0.0
    %2708 = vmatprep.subr.mxu0 0.0
    %2709 = vmatpush1.msra.mxu0 0.0
    %2710 = vmatprep.subr.mxu0 0.0
    %2711 = vmatpush1.msra.mxu0 0.0
    %2712 = vmatprep.subr.mxu0 0.0
    %2713 = vmatpush1.msra.mxu0 0.0
    %2714 = vmatprep.subr.mxu0 0.0
    %2715 = vmatpush1.msra.mxu0 %v2682
    %2716 = vmatprep.subr.mxu0 0.0
    %2717 = vmatpush2.msra.mxu0 0.0
    %2718 = vmatprep.subr.mxu0 0.0
    %2719 = vmatpush2.msra.mxu0 0.0
    %2720 = vmatprep.subr.mxu0 0.0
    %2721 = vmatpush2.msra.mxu0 0.0
    %2722 = vmatprep.subr.mxu0 0.0
    %2723 = vmatpush2.msra.mxu0 0.0
    %2724 = vmatprep.subr.mxu0 0.0
    %2725 = vmatpush2.msra.mxu0 0.0
    %2726 = vmatprep.subr.mxu0 0.0
    %2727 = vmatpush2.msra.mxu0 0.0
    %2728 = vmatprep.subr.mxu0 0.0
    %2729 = vmatpush2.msra.mxu0 0.0
    %2730 = vmatprep.subr.mxu0 0.0
    %2731 = vmatpush2.msra.mxu0 0.0
    %2732 = vmatprep.subr.mxu0 0.0
    %2733 = vmatpush2.msra.mxu0 0.0
    %2734 = vmatprep.subr.mxu0 0.0
    %2735 = vmatpush2.msra.mxu0 0.0
    %2736 = vmatprep.subr.mxu0 0.0
    %2737 = vmatpush2.msra.mxu0 0.0
    %2738 = vmatprep.subr.mxu0 0.0
    %2739 = vmatpush2.msra.mxu0 0.0
    %2740 = vmatprep.subr.mxu0 0.0
    %2741 = vmatpush2.msra.mxu0 0.0
    %2742 = vmatprep.subr.mxu0 0.0
    %2743 = vmatpush2.msra.mxu0 0.0
    %2744 = vmatprep.subr.mxu0 0.0
    %2745 = vmatpush2.msra.mxu0 0.0
    %2746 = vmatprep.subr.mxu0 0.0
    %2747 = vmatpush2.msra.mxu0 0.0
    %2748 = vmatprep.mubr.f32.mxu0 0.0
    %2749 = vmatmul.mubr.f32.gmra.mxu0 %v2679
    %v2750 = vpop.f32.mrf.mxu0
    %v2751 = vadd.f32 %v2675, %v2750
    %v2752 = vpop.f32.mrf.mxu0
    %2753 = vdwg.mxu0
    %v2754 = vld [vmem:[%s15] sm:$0x1]
    %v2756 = vlaneseq
    %v2757 = vshrl.u32 %v2756, 7
    %v2758 = vsub.s32 0, %v2757
    %v2759 = vrot.slane %v2754, %v2758
    %v2761 = vadd.f32 %v2751, %v2759
    %v2762 = vmax.f32 %v2761, 0.0
    %v2763 = vld [vmem:[%s0] sm:$0xff]
    %v2764 = vld [vmem:[%s16] sm:$0xff]
    %v2765 = vld [vmem:[%s16 + $0x8] sm:$0x7f]
    %v2766 = vld [vmem:[%s17] sm:$0xff]
    %v2767 = vld [vmem:[%s17 + $0x8] sm:$0xff]
    %v2768 = vld [vmem:[%s17 + $0x10] sm:$0xff]
    %v2769 = vld [vmem:[%s17 + $0x18] sm:$0x7]
    %vm2770 = vcmask 220160
    %v2772 = vsel %vm2770, %v2763, 0
    %vm2774 = vcmask 1042432
    %v2776 = vsel %vm2774, %v2769, 0
    %2778 = vmatprep.subr.mxu0 0.0
    %2779 = vmatpush1.msra.mxu0 0.0
    %2780 = vmatprep.subr.mxu0 0.0
    %2781 = vmatpush1.msra.mxu0 0.0
    %2782 = vmatprep.subr.mxu0 0.0
    %2783 = vmatpush1.msra.mxu0 0.0
    %2784 = vmatprep.subr.mxu0 0.0
    %2785 = vmatpush1.msra.mxu0 0.0
    %2786 = vmatprep.subr.mxu0 0.0
    %2787 = vmatpush1.msra.mxu0 0.0
    %2788 = vmatprep.subr.mxu0 0.0
    %2789 = vmatpush1.msra.mxu0 0.0
    %2790 = vmatprep.subr.mxu0 0.0
    %2791 = vmatpush1.msra.mxu0 0.0
    %2792 = vmatprep.subr.mxu0 0.0
    %2793 = vmatpush1.msra.mxu0 0.0
    %2794 = vmatprep.subr.mxu0 0.0
    %2795 = vmatpush1.msra.mxu0 0.0
    %2796 = vmatprep.subr.mxu0 0.0
    %2797 = vmatpush1.msra.mxu0 0.0
    %2798 = vmatprep.subr.mxu0 0.0
    %2799 = vmatpush1.msra.mxu0 0.0
    %2800 = vmatprep.subr.mxu0 0.0
    %2801 = vmatpush1.msra.mxu0 0.0
    %2802 = vmatprep.subr.mxu0 0.0
    %2803 = vmatpush1.msra.mxu0 %v2776
    %2804 = vmatprep.subr.mxu0 0.0
    %2805 = vmatpush1.msra.mxu0 %v2768
    %2806 = vmatprep.subr.mxu0 0.0
    %2807 = vmatpush1.msra.mxu0 %v2767
    %2808 = vmatprep.subr.mxu0 0.0
    %2809 = vmatpush1.msra.mxu0 %v2766
    %2810 = vmatprep.subr.mxu0 0.0
    %2811 = vmatpush2.msra.mxu0 0.0
    %2812 = vmatprep.subr.mxu0 0.0
    %2813 = vmatpush2.msra.mxu0 0.0
    %2814 = vmatprep.subr.mxu0 0.0
    %2815 = vmatpush2.msra.mxu0 0.0
    %2816 = vmatprep.subr.mxu0 0.0
    %2817 = vmatpush2.msra.mxu0 0.0
    %2818 = vmatprep.subr.mxu0 0.0
    %2819 = vmatpush2.msra.mxu0 0.0
    %2820 = vmatprep.subr.mxu0 0.0
    %2821 = vmatpush2.msra.mxu0 0.0
    %2822 = vmatprep.subr.mxu0 0.0
    %2823 = vmatpush2.msra.mxu0 0.0
    %2824 = vmatprep.subr.mxu0 0.0
    %2825 = vmatpush2.msra.mxu0 0.0
    %2826 = vmatprep.subr.mxu0 0.0
    %2827 = vmatpush2.msra.mxu0 0.0
    %2828 = vmatprep.subr.mxu0 0.0
    %2829 = vmatpush2.msra.mxu0 0.0
    %2830 = vmatprep.subr.mxu0 0.0
    %2831 = vmatpush2.msra.mxu0 0.0
    %2832 = vmatprep.subr.mxu0 0.0
    %2833 = vmatpush2.msra.mxu0 0.0
    %2834 = vmatprep.subr.mxu0 0.0
    %2835 = vmatpush2.msra.mxu0 0.0
    %2836 = vmatprep.subr.mxu0 0.0
    %2837 = vmatpush2.msra.mxu0 0.0
    %2838 = vmatprep.subr.mxu0 0.0
    %2839 = vmatpush2.msra.mxu0 0.0
    %2840 = vmatprep.subr.mxu0 0.0
    %2841 = vmatpush2.msra.mxu0 0.0
    %2842 = vmatprep.mubr.f32.mxu0 0.0
    %2843 = vmatmul.mubr.f32.gmra.mxu0 %v2772
    %v2844 = vpop.f32.mrf.mxu0
    %v2845 = vadd.f32 0.0, %v2844
    %v2846 = vpop.f32.mrf.mxu0
    %2847 = vdwg.mxu0
    %vm2848 = vcmask 121856
    %v2850 = vsel %vm2848, %v2762, 0
    %vm2852 = vcmask 1046528
    %v2854 = vsel %vm2852, %v2765, 0
    %2856 = vmatprep.subr.mxu0 0.0
    %2857 = vmatpush1.msra.mxu0 0.0
    %2858 = vmatprep.subr.mxu0 0.0
    %2859 = vmatpush1.msra.mxu0 0.0
    %2860 = vmatprep.subr.mxu0 0.0
    %2861 = vmatpush1.msra.mxu0 0.0
    %2862 = vmatprep.subr.mxu0 0.0
    %2863 = vmatpush1.msra.mxu0 0.0
    %2864 = vmatprep.subr.mxu0 0.0
    %2865 = vmatpush1.msra.mxu0 0.0
    %2866 = vmatprep.subr.mxu0 0.0
    %2867 = vmatpush1.msra.mxu0 0.0
    %2868 = vmatprep.subr.mxu0 0.0
    %2869 = vmatpush1.msra.mxu0 0.0
    %2870 = vmatprep.subr.mxu0 0.0
    %2871 = vmatpush1.msra.mxu0 0.0
    %2872 = vmatprep.subr.mxu0 0.0
    %2873 = vmatpush1.msra.mxu0 0.0
    %2874 = vmatprep.subr.mxu0 0.0
    %2875 = vmatpush1.msra.mxu0 0.0
    %2876 = vmatprep.subr.mxu0 0.0
    %2877 = vmatpush1.msra.mxu0 0.0
    %2878 = vmatprep.subr.mxu0 0.0
    %2879 = vmatpush1.msra.mxu0 0.0
    %2880 = vmatprep.subr.mxu0 0.0
    %2881 = vmatpush1.msra.mxu0 0.0
    %2882 = vmatprep.subr.mxu0 0.0
    %2883 = vmatpush1.msra.mxu0 0.0
    %2884 = vmatprep.subr.mxu0 0.0
    %2885 = vmatpush1.msra.mxu0 %v2854
    %2886 = vmatprep.subr.mxu0 0.0
    %2887 = vmatpush1.msra.mxu0 %v2764
    %2888 = vmatprep.subr.mxu0 0.0
    %2889 = vmatpush2.msra.mxu0 0.0
    %2890 = vmatprep.subr.mxu0 0.0
    %2891 = vmatpush2.msra.mxu0 0.0
    %2892 = vmatprep.subr.mxu0 0.0
    %2893 = vmatpush2.msra.mxu0 0.0
    %2894 = vmatprep.subr.mxu0 0.0
    %2895 = vmatpush2.msra.mxu0 0.0
    %2896 = vmatprep.subr.mxu0 0.0
    %2897 = vmatpush2.msra.mxu0 0.0
    %2898 = vmatprep.subr.mxu0 0.0
    %2899 = vmatpush2.msra.mxu0 0.0
    %2900 = vmatprep.subr.mxu0 0.0
    %2901 = vmatpush2.msra.mxu0 0.0
    %2902 = vmatprep.subr.mxu0 0.0
    %2903 = vmatpush2.msra.mxu0 0.0
    %2904 = vmatprep.subr.mxu0 0.0
    %2905 = vmatpush2.msra.mxu0 0.0
    %2906 = vmatprep.subr.mxu0 0.0
    %2907 = vmatpush2.msra.mxu0 0.0
    %2908 = vmatprep.subr.mxu0 0.0
    %2909 = vmatpush2.msra.mxu0 0.0
    %2910 = vmatprep.subr.mxu0 0.0
    %2911 = vmatpush2.msra.mxu0 0.0
    %2912 = vmatprep.subr.mxu0 0.0
    %2913 = vmatpush2.msra.mxu0 0.0
    %2914 = vmatprep.subr.mxu0 0.0
    %2915 = vmatpush2.msra.mxu0 0.0
    %2916 = vmatprep.subr.mxu0 0.0
    %2917 = vmatpush2.msra.mxu0 0.0
    %2918 = vmatprep.subr.mxu0 0.0
    %2919 = vmatpush2.msra.mxu0 0.0
    %2920 = vmatprep.mubr.f32.mxu0 0.0
    %2921 = vmatmul.mubr.f32.gmra.mxu0 %v2850
    %v2922 = vpop.f32.mrf.mxu0
    %v2923 = vadd.f32 %v2845, %v2922
    %v2924 = vpop.f32.mrf.mxu0
    %2925 = vdwg.mxu0
    %v2926 = vld [vmem:[%s18] sm:$0x1]
    %v2928 = vlaneseq
    %v2929 = vshrl.u32 %v2928, 7
    %v2930 = vsub.s32 0, %v2929
    %v2931 = vrot.slane %v2926, %v2930
    %v2933 = vadd.f32 %v2923, %v2931
    %v2934 = vmax.f32 %v2933, 0.0
    %v2935 = vld [vmem:[%s19] sm:$0xff]
    %v2936 = vld [vmem:[%s19 + $0x8] sm:$0xff]
    %v2937 = vld [vmem:[%s19 + $0x10] sm:$0xff]
    %v2938 = vld [vmem:[%s19 + $0x18] sm:$0xff]
    %v2939 = vld [vmem:[%s20] sm:$0x1]
    %v2941 = vlaneseq
    %v2942 = vshrl.u32 %v2941, 7
    %v2943 = vsub.s32 0, %v2942
    %v2944 = vrot.slane %v2939, %v2943
    %vm2946 = vcmask 261120
    %v2948 = vsel %vm2946, %v2934, 0
    %2950 = vmatprep.subr.mxu0 0.0
    %2951 = vmatpush1.msra.mxu0 0.0
    %2952 = vmatprep.subr.mxu0 0.0
    %2953 = vmatpush1.msra.mxu0 0.0
    %2954 = vmatprep.subr.mxu0 0.0
    %2955 = vmatpush1.msra.mxu0 0.0
    %2956 = vmatprep.subr.mxu0 0.0
    %2957 = vmatpush1.msra.mxu0 0.0
    %2958 = vmatprep.subr.mxu0 0.0
    %2959 = vmatpush1.msra.mxu0 0.0
    %2960 = vmatprep.subr.mxu0 0.0
    %2961 = vmatpush1.msra.mxu0 0.0
    %2962 = vmatprep.subr.mxu0 0.0
    %2963 = vmatpush1.msra.mxu0 0.0
    %2964 = vmatprep.subr.mxu0 0.0
    %2965 = vmatpush1.msra.mxu0 0.0
    %2966 = vmatprep.subr.mxu0 0.0
    %2967 = vmatpush1.msra.mxu0 0.0
    %2968 = vmatprep.subr.mxu0 0.0
    %2969 = vmatpush1.msra.mxu0 0.0
    %2970 = vmatprep.subr.mxu0 0.0
    %2971 = vmatpush1.msra.mxu0 0.0
    %2972 = vmatprep.subr.mxu0 0.0
    %2973 = vmatpush1.msra.mxu0 0.0
    %2974 = vmatprep.subr.mxu0 0.0
    %2975 = vmatpush1.msra.mxu0 %v2938
    %2976 = vmatprep.subr.mxu0 0.0
    %2977 = vmatpush1.msra.mxu0 %v2937
    %2978 = vmatprep.subr.mxu0 0.0
    %2979 = vmatpush1.msra.mxu0 %v2936
    %2980 = vmatprep.subr.mxu0 0.0
    %2981 = vmatpush1.msra.mxu0 %v2935
    %2982 = vmatprep.subr.mxu0 0.0
    %2983 = vmatpush2.msra.mxu0 0.0
    %2984 = vmatprep.subr.mxu0 0.0
    %2985 = vmatpush2.msra.mxu0 0.0
    %2986 = vmatprep.subr.mxu0 0.0
    %2987 = vmatpush2.msra.mxu0 0.0
    %2988 = vmatprep.subr.mxu0 0.0
    %2989 = vmatpush2.msra.mxu0 0.0
    %2990 = vmatprep.subr.mxu0 0.0
    %2991 = vmatpush2.msra.mxu0 0.0
    %2992 = vmatprep.subr.mxu0 0.0
    %2993 = vmatpush2.msra.mxu0 0.0
    %2994 = vmatprep.subr.mxu0 0.0
    %2995 = vmatpush2.msra.mxu0 0.0
    %2996 = vmatprep.subr.mxu0 0.0
    %2997 = vmatpush2.msra.mxu0 0.0
    %2998 = vmatprep.subr.mxu0 0.0
    %2999 = vmatpush2.msra.mxu0 0.0
    %3000 = vmatprep.subr.mxu0 0.0
    %3001 = vmatpush2.msra.mxu0 0.0
    %3002 = vmatprep.subr.mxu0 0.0
    %3003 = vmatpush2.msra.mxu0 0.0
    %3004 = vmatprep.subr.mxu0 0.0
    %3005 = vmatpush2.msra.mxu0 0.0
    %3006 = vmatprep.subr.mxu0 0.0
    %3007 = vmatpush2.msra.mxu0 0.0
    %3008 = vmatprep.subr.mxu0 0.0
    %3009 = vmatpush2.msra.mxu0 0.0
    %3010 = vmatprep.subr.mxu0 0.0
    %3011 = vmatpush2.msra.mxu0 0.0
    %3012 = vmatprep.subr.mxu0 0.0
    %3013 = vmatpush2.msra.mxu0 0.0
    %3014 = vmatprep.mubr.f32.mxu0 0.0
    %3015 = vmatmul.mubr.f32.gmra.mxu0 %v2948
    %v3016 = vpop.f32.mrf.mxu0
    %v3017 = vadd.f32 %v2944, %v3016
    %v3018 = vpop.f32.mrf.mxu0
    %3019 = vdwg.mxu0
    %v3020 = vmax.f32 %v3017, 0.0
    %v3021 = vld [vmem:[%s21] sm:$0xff]
    %v3022 = vld [vmem:[%s21 + $0x8] sm:$0xff]
    %v3023 = vld [vmem:[%s21 + $0x10] sm:$0xff]
    %v3024 = vld [vmem:[%s21 + $0x18] sm:$0xff]
    %v3025 = vld [vmem:[%s22] sm:$0x1]
    %v3027 = vlaneseq
    %v3028 = vshrl.u32 %v3027, 7
    %v3029 = vsub.s32 0, %v3028
    %v3030 = vrot.slane %v3025, %v3029
    %v3033 = vsel %vm2946, %v3020, 0
    %3035 = vmatprep.subr.mxu0 0.0
    %3036 = vmatpush1.msra.mxu0 0.0
    %3037 = vmatprep.subr.mxu0 0.0
    %3038 = vmatpush1.msra.mxu0 0.0
    %3039 = vmatprep.subr.mxu0 0.0
    %3040 = vmatpush1.msra.mxu0 0.0
    %3041 = vmatprep.subr.mxu0 0.0
    %3042 = vmatpush1.msra.mxu0 0.0
    %3043 = vmatprep.subr.mxu0 0.0
    %3044 = vmatpush1.msra.mxu0 0.0
    %3045 = vmatprep.subr.mxu0 0.0
    %3046 = vmatpush1.msra.mxu0 0.0
    %3047 = vmatprep.subr.mxu0 0.0
    %3048 = vmatpush1.msra.mxu0 0.0
    %3049 = vmatprep.subr.mxu0 0.0
    %3050 = vmatpush1.msra.mxu0 0.0
    %3051 = vmatprep.subr.mxu0 0.0
    %3052 = vmatpush1.msra.mxu0 0.0
    %3053 = vmatprep.subr.mxu0 0.0
    %3054 = vmatpush1.msra.mxu0 0.0
    %3055 = vmatprep.subr.mxu0 0.0
    %3056 = vmatpush1.msra.mxu0 0.0
    %3057 = vmatprep.subr.mxu0 0.0
    %3058 = vmatpush1.msra.mxu0 0.0
    %3059 = vmatprep.subr.mxu0 0.0
    %3060 = vmatpush1.msra.mxu0 %v3024
    %3061 = vmatprep.subr.mxu0 0.0
    %3062 = vmatpush1.msra.mxu0 %v3023
    %3063 = vmatprep.subr.mxu0 0.0
    %3064 = vmatpush1.msra.mxu0 %v3022
    %3065 = vmatprep.subr.mxu0 0.0
    %3066 = vmatpush1.msra.mxu0 %v3021
    %3067 = vmatprep.subr.mxu0 0.0
    %3068 = vmatpush2.msra.mxu0 0.0
    %3069 = vmatprep.subr.mxu0 0.0
    %3070 = vmatpush2.msra.mxu0 0.0
    %3071 = vmatprep.subr.mxu0 0.0
    %3072 = vmatpush2.msra.mxu0 0.0
    %3073 = vmatprep.subr.mxu0 0.0
    %3074 = vmatpush2.msra.mxu0 0.0
    %3075 = vmatprep.subr.mxu0 0.0
    %3076 = vmatpush2.msra.mxu0 0.0
    %3077 = vmatprep.subr.mxu0 0.0
    %3078 = vmatpush2.msra.mxu0 0.0
    %3079 = vmatprep.subr.mxu0 0.0
    %3080 = vmatpush2.msra.mxu0 0.0
    %3081 = vmatprep.subr.mxu0 0.0
    %3082 = vmatpush2.msra.mxu0 0.0
    %3083 = vmatprep.subr.mxu0 0.0
    %3084 = vmatpush2.msra.mxu0 0.0
    %3085 = vmatprep.subr.mxu0 0.0
    %3086 = vmatpush2.msra.mxu0 0.0
    %3087 = vmatprep.subr.mxu0 0.0
    %3088 = vmatpush2.msra.mxu0 0.0
    %3089 = vmatprep.subr.mxu0 0.0
    %3090 = vmatpush2.msra.mxu0 0.0
    %3091 = vmatprep.subr.mxu0 0.0
    %3092 = vmatpush2.msra.mxu0 0.0
    %3093 = vmatprep.subr.mxu0 0.0
    %3094 = vmatpush2.msra.mxu0 0.0
    %3095 = vmatprep.subr.mxu0 0.0
    %3096 = vmatpush2.msra.mxu0 0.0
    %3097 = vmatprep.subr.mxu0 0.0
    %3098 = vmatpush2.msra.mxu0 0.0
    %3099 = vmatprep.mubr.f32.mxu0 0.0
    %3100 = vmatmul.mubr.f32.gmra.mxu0 %v3033
    %v3101 = vpop.f32.mrf.mxu0
    %v3102 = vadd.f32 %v3030, %v3101
    %v3103 = vpop.f32.mrf.mxu0
    %3104 = vdwg.mxu0
    %3105 = vst.msk [vmem:[#allocation2] sm:$0xff] %vm2848, %v3102
    // Predicated region
    $region94: #{_sampler_gnn_forward.1} parent=1 // pred_check
      _
    $region95: #{_sampler_gnn_forward.1} parent=1 // pred_check_branch
      %3107 = sbr.rel (0) target = $region97
    $region96: #{_sampler_gnn_forward.1} parent=1 // pred_region
      %s3109 = ssub.s32 128, 128
      %3110 = vsyncadd [#allocation3], %s3109
      %s3112 = sshll.u32 [#allocation2], 4
      %s3113 = int_to_ptr.vmem [resolvable:$true] %s3112
      %3115 = dma.vmem_to_hbm [thread:$0]  %s3113, 128, %s23, [#allocation3]
    $region97: #{_sampler_gnn_forward.1} parent=1 // pred_fallthru
      _
    // Predicated region
    $region98: #{_sampler_gnn_forward.1} parent=1 // pred_check
      _
    $region99: #{_sampler_gnn_forward.1} parent=1 // pred_check_branch
      %3117 = sbr.rel (0) target = $region101
    $region100: #{_sampler_gnn_forward.1} parent=1 // pred_region
      %3118 = dma.done [#allocation3], 128
    $region101: #{_sampler_gnn_forward.1} parent=1 // pred_fallthru
      _
    %3119 = vsyncpa [#allocation3], 1

</llo_original>
